<compile_context>
chip_gen: v7x
topology: tpu7x:2x2x1
jax: 0.10.0
libtpu: 0.0.40
codegen_flags: <defaults>
</compile_context>

<pallas_src>
import functools

import jax
import jax.numpy as jnp
from jax.experimental import pallas as pl
from jax.experimental.pallas import tpu as pltpu

d_model = 32
d_k = 16
d_v = 16
n_heads = 2
d_ff = 64
LN_EPS = 1e-5  # fresh nn.LayerNorm(d_model): weight=1, bias=0


# ----------------------------------------------------------------------------
# In-kernel helpers (operate on plain arrays already loaded into vregs)
# ----------------------------------------------------------------------------
def _layernorm(x):
    mu = jnp.mean(x, axis=-1, keepdims=True)
    xc = x - mu
    var = jnp.mean(xc * xc, axis=-1, keepdims=True)
    return xc * jax.lax.rsqrt(var + LN_EPS)          # rsqrt -> EUP


def _softmax_last(s):
    s = s - jnp.max(s, axis=-1, keepdims=True)
    p = jnp.exp(s)
    denom = jnp.sum(p, axis=-1, keepdims=True)
    return p * pl.reciprocal(denom, approx=True)      # reciprocal -> EUP


def _attn_probs(Qh, Kh, scale):
    # (S, d_k) x (S, d_k) contracting on d_k -> (S, S); no explicit transpose.
    s = jax.lax.dot_general(
        Qh, Kh, (((1,), (1,)), ((), ())),
        preferred_element_type=jnp.float32) * scale
    return _softmax_last(s)


def _mha_block(x_q, x_k, x_v, wq, wk, wv, fc):
    """MultiHeadAttention forward for one batch element. Returns (S, d_model)."""
    Q = jnp.dot(x_q, wq, preferred_element_type=jnp.float32)   # (S, H*d_k)
    K = jnp.dot(x_k, wk, preferred_element_type=jnp.float32)
    V = jnp.dot(x_v, wv, preferred_element_type=jnp.float32)   # (S, H*d_v)
    scale = 1.0 / (d_k ** 0.5)
    ctx = []
    for h in range(n_heads):                                   # H=2, unrolled
        p = _attn_probs(Q[:, h * d_k:(h + 1) * d_k],
                        K[:, h * d_k:(h + 1) * d_k], scale)
        ctx.append(jnp.dot(p, V[:, h * d_v:(h + 1) * d_v],
                           preferred_element_type=jnp.float32))
    ctx_cat = jnp.concatenate(ctx, axis=-1)                    # (S, H*d_v)
    out = jnp.dot(ctx_cat, fc, preferred_element_type=jnp.float32)
    return _layernorm(out + x_q)                               # residual = input_Q


def _ffn_block(x, w1, w2):
    h = jnp.maximum(jnp.dot(x, w1, preferred_element_type=jnp.float32), 0.0)
    o = jnp.dot(h, w2, preferred_element_type=jnp.float32)
    return _layernorm(o + x)


def _abi_mha_block(x_q, x_k, x_va, x_vb, wq, wk, wva, wvb, fca, fcb, attn_ref):
    """ABI_MultiHeadAttention forward for one batch element."""
    Q = jnp.dot(x_q, wq, preferred_element_type=jnp.float32)
    K = jnp.dot(x_k, wk, preferred_element_type=jnp.float32)
    VA = jnp.dot(x_va, wva, preferred_element_type=jnp.float32)
    VB = jnp.dot(x_vb, wvb, preferred_element_type=jnp.float32)
    scale = 1.0 / (d_k ** 0.5)
    ctx_a, ctx_b = [], []
    for h in range(n_heads):
        p = _attn_probs(Q[:, h * d_k:(h + 1) * d_k],
                        K[:, h * d_k:(h + 1) * d_k], scale)
        attn_ref[0, h] = p                                     # (S, S) per head
        ctx_a.append(jnp.dot(p, VA[:, h * d_v:(h + 1) * d_v],
                             preferred_element_type=jnp.float32))
        ctx_b.append(jnp.dot(p, VB[:, h * d_v:(h + 1) * d_v],
                             preferred_element_type=jnp.float32))
    out_a = jnp.dot(jnp.concatenate(ctx_a, axis=-1), fca,
                    preferred_element_type=jnp.float32)
    out_b = jnp.dot(jnp.concatenate(ctx_b, axis=-1), fcb,
                    preferred_element_type=jnp.float32)
    return _layernorm(out_a + x_q), _layernorm(out_b + x_k)    # residuals: q_action, k_background


# ----------------------------------------------------------------------------
# Single fused kernel: whole EncoderLayer for one batch element per grid step
# ----------------------------------------------------------------------------
def encoder_layer_kernel(af_ref, bf_ref,
                         sa_wq, sa_wk, sa_wv, sa_fc,
                         ffa_w1, ffa_w2, ffb_w1, ffb_w2,
                         abi_wq, abi_wk, abi_wva, abi_wvb, abi_fca, abi_fcb,
                         ffaa_w1, ffaa_w2, ffbb_w1, ffbb_w2,
                         outp_ref, outb_ref, attn_ref):
    af = af_ref[0]                                             # (S, d_model)
    bf = bf_ref[0]

    # shared self-attention module applied to both streams (same weights)
    action_query = _mha_block(af, af, af, sa_wq[...], sa_wk[...], sa_wv[...], sa_fc[...])
    key_value_bg = _mha_block(bf, bf, bf, sa_wq[...], sa_wk[...], sa_wv[...], sa_fc[...])

    action_query = _ffn_block(action_query, ffa_w1[...], ffa_w2[...])
    key_value_bg = _ffn_block(key_value_bg, ffb_w1[...], ffb_w2[...])

    # ABI attention: q=action_query, k=key_value_bg, v_a=action_query, v_b=key_value_bg
    out_a, out_b = _abi_mha_block(action_query, key_value_bg,
                                  action_query, key_value_bg,
                                  abi_wq[...], abi_wk[...],
                                  abi_wva[...], abi_wvb[...],
                                  abi_fca[...], abi_fcb[...], attn_ref)

    outp_ref[0] = _ffn_block(out_a, ffaa_w1[...], ffaa_w2[...])
    outb_ref[0] = _ffn_block(out_b, ffbb_w1[...], ffbb_w2[...])


_WEIGHT_ORDER = (
    "sa_wq", "sa_wk", "sa_wv", "sa_fc",
    "ffa_w1", "ffa_w2", "ffb_w1", "ffb_w2",
    "abi_wq", "abi_wk", "abi_wva", "abi_wvb", "abi_fca", "abi_fcb",
    "ffaa_w1", "ffaa_w2", "ffbb_w1", "ffbb_w2",
)


@functools.partial(jax.jit, static_argnames=())
def encoder_layer(action_feat, background_feat, p):
    B, S, D = action_feat.shape
    weights = [p[name] for name in _WEIGHT_ORDER]

    x_spec = pl.BlockSpec((1, S, D), lambda b: (b, 0, 0))
    w_specs = [pl.BlockSpec(w.shape, lambda b: (0, 0)) for w in weights]

    # NOTE: outputs keep the module's (B, S, d_model) / (B, H, S, S) shapes;
    # after fusion the store traffic is a negligible fraction of the kernel,
    # so no lane-dense repacking of the 32-wide last dim is done here.
    return pl.pallas_call(
        encoder_layer_kernel,
        grid=(B,),
        in_specs=[x_spec, x_spec] + w_specs,
        out_specs=[pl.BlockSpec((1, S, D), lambda b: (b, 0, 0)),
                   pl.BlockSpec((1, S, D), lambda b: (b, 0, 0)),
                   pl.BlockSpec((1, n_heads, S, S), lambda b: (b, 0, 0, 0))],
        out_shape=(jax.ShapeDtypeStruct((B, S, D), jnp.float32),
                   jax.ShapeDtypeStruct((B, S, D), jnp.float32),
                   jax.ShapeDtypeStruct((B, n_heads, S, S), jnp.float32)),
        compiler_params=pltpu.CompilerParams(
            dimension_semantics=("parallel",)),   # one batch element per TC on v7x
    )(action_feat, background_feat, *weights)


# ----------------------------------------------------------------------------
# Pure-JAX reference (for a quick numerical sanity check)
# ----------------------------------------------------------------------------
def _ref_layernorm(x):
    mu = jnp.mean(x, axis=-1, keepdims=True)
    var = jnp.mean((x - mu) ** 2, axis=-1, keepdims=True)
    return (x - mu) / jnp.sqrt(var + LN_EPS)


def _ref_softmax(s):
    s = s - jnp.max(s, axis=-1, keepdims=True)
    p = jnp.exp(s)
    return p / jnp.sum(p, axis=-1, keepdims=True)


def _ref_heads(x, w, dh):
    B, S, _ = x.shape
    return (x @ w).reshape(B, S, n_heads, dh).transpose(0, 2, 1, 3)   # (B,H,S,dh)


def _ref_mha(xq, xk, xv, wq, wk, wv, fc):
    Q, K, V = _ref_heads(xq, wq, d_k), _ref_heads(xk, wk, d_k), _ref_heads(xv, wv, d_v)
    s = jnp.einsum("bhqd,bhkd->bhqk", Q, K) / (d_k ** 0.5)
    p = _ref_softmax(s)
    ctx = jnp.einsum("bhqk,bhkd->bhqd", p, V)
    ctx = ctx.transpose(0, 2, 1, 3).reshape(xq.shape[0], -1, n_heads * d_v)
    return _ref_layernorm(ctx @ fc + xq), p


def _ref_ffn(x, w1, w2):
    return _ref_layernorm(jnp.maximum(x @ w1, 0.0) @ w2 + x)


def _ref_encoder_layer(af, bf, p):
    aq, _ = _ref_mha(af, af, af, p["sa_wq"], p["sa_wk"], p["sa_wv"], p["sa_fc"])
    kb, _ = _ref_mha(bf, bf, bf, p["sa_wq"], p["sa_wk"], p["sa_wv"], p["sa_fc"])
    aq = _ref_ffn(aq, p["ffa_w1"], p["ffa_w2"])
    kb = _ref_ffn(kb, p["ffb_w1"], p["ffb_w2"])
    Q, K = _ref_heads(aq, p["abi_wq"], d_k), _ref_heads(kb, p["abi_wk"], d_k)
    VA, VB = _ref_heads(aq, p["abi_wva"], d_v), _ref_heads(kb, p["abi_wvb"], d_v)
    s = jnp.einsum("bhqd,bhkd->bhqk", Q, K) / (d_k ** 0.5)
    attn = _ref_softmax(s)
    ca = jnp.einsum("bhqk,bhkd->bhqd", attn, VA).transpose(0, 2, 1, 3).reshape(aq.shape[0], -1, n_heads * d_v)
    cb = jnp.einsum("bhqk,bhkd->bhqd", attn, VB).transpose(0, 2, 1, 3).reshape(aq.shape[0], -1, n_heads * d_v)
    out_a = _ref_layernorm(ca @ p["abi_fca"] + aq)
    out_b = _ref_layernorm(cb @ p["abi_fcb"] + kb)
    return (_ref_ffn(out_a, p["ffaa_w1"], p["ffaa_w2"]),
            _ref_ffn(out_b, p["ffbb_w1"], p["ffbb_w2"]),
            attn)


# ----------------------------------------------------------------------------
if __name__ == "__main__":
    B, S = 2, 8
    key = jax.random.PRNGKey(0)
    ks = iter(jax.random.split(key, 32))

    def init(shape):
        fan_in = shape[0]
        return jax.random.normal(next(ks), shape, jnp.float32) / jnp.sqrt(fan_in)

    params = {
        # shared self-attention (MultiHeadAttention)
        "sa_wq": init((d_model, d_k * n_heads)),
        "sa_wk": init((d_model, d_k * n_heads)),
        "sa_wv": init((d_model, d_v * n_heads)),
        "sa_fc": init((n_heads * d_v, d_model)),
        # ABI multi-head attention
        "abi_wq": init((d_model, d_k * n_heads)),
        "abi_wk": init((d_model, d_k * n_heads)),
        "abi_wva": init((d_model, d_v * n_heads)),
        "abi_wvb": init((d_model, d_v * n_heads)),
        "abi_fca": init((n_heads * d_v, d_model)),
        "abi_fcb": init((n_heads * d_v, d_model)),
        # four position-wise FFNs
        "ffa_w1": init((d_model, d_ff)), "ffa_w2": init((d_ff, d_model)),
        "ffb_w1": init((d_model, d_ff)), "ffb_w2": init((d_ff, d_model)),
        "ffaa_w1": init((d_model, d_ff)), "ffaa_w2": init((d_ff, d_model)),
        "ffbb_w1": init((d_model, d_ff)), "ffbb_w2": init((d_ff, d_model)),
    }

    action_feat = jax.random.normal(next(ks), (B, S, d_model), jnp.float32)
    background_feat = jax.random.normal(next(ks), (B, S, d_model), jnp.float32)

    output_p, output_b, attn = encoder_layer(action_feat, background_feat, params)
    jax.block_until_ready((output_p, output_b, attn))

    assert output_p.shape == (B, S, d_model)
    assert output_b.shape == (B, S, d_model)
    assert attn.shape == (B, n_heads, S, S)

    # numerical sanity check against pure-JAX reference (approx-recip tolerance)
    ref_p, ref_b, ref_attn = _ref_encoder_layer(action_feat, background_feat, params)
    assert jnp.max(jnp.abs(output_p - ref_p)) < 1e-2
    assert jnp.max(jnp.abs(output_b - ref_b)) < 1e-2
    assert jnp.max(jnp.abs(attn - ref_attn)) < 1e-2

    print("KERNEL_OK")
</pallas_src>

<mosaic_0001>
module attributes {stable_mosaic.version = 11 : i64} {
  func.func @encoder_layer_kernel(%arg0: i32, %arg1: memref<1x8x32xf32, #tpu.memory_space<vmem>>, %arg2: memref<1x8x32xf32, #tpu.memory_space<vmem>>, %arg3: memref<32x32xf32, #tpu.memory_space<vmem>>, %arg4: memref<32x32xf32, #tpu.memory_space<vmem>>, %arg5: memref<32x32xf32, #tpu.memory_space<vmem>>, %arg6: memref<32x32xf32, #tpu.memory_space<vmem>>, %arg7: memref<32x64xf32, #tpu.memory_space<vmem>>, %arg8: memref<64x32xf32, #tpu.memory_space<vmem>>, %arg9: memref<32x64xf32, #tpu.memory_space<vmem>>, %arg10: memref<64x32xf32, #tpu.memory_space<vmem>>, %arg11: memref<32x32xf32, #tpu.memory_space<vmem>>, %arg12: memref<32x32xf32, #tpu.memory_space<vmem>>, %arg13: memref<32x32xf32, #tpu.memory_space<vmem>>, %arg14: memref<32x32xf32, #tpu.memory_space<vmem>>, %arg15: memref<32x32xf32, #tpu.memory_space<vmem>>, %arg16: memref<32x32xf32, #tpu.memory_space<vmem>>, %arg17: memref<32x64xf32, #tpu.memory_space<vmem>>, %arg18: memref<64x32xf32, #tpu.memory_space<vmem>>, %arg19: memref<32x64xf32, #tpu.memory_space<vmem>>, %arg20: memref<64x32xf32, #tpu.memory_space<vmem>>, %arg21: memref<1x8x32xf32, #tpu.memory_space<vmem>>, %arg22: memref<1x8x32xf32, #tpu.memory_space<vmem>>, %arg23: memref<1x2x8x8xf32, #tpu.memory_space<vmem>>) attributes {dimension_semantics = [#tpu.dimension_semantics<parallel>], iteration_bounds = array<i64: 2>, scalar_prefetch = 0 : i64, scratch_operands = 0 : i64, tpu.core_type = #tpu.core_type<tc>, window_params = [{transform_indices = @transform_0, window_bounds = array<i64: 1, 8, 32>}, {transform_indices = @transform_1, window_bounds = array<i64: 1, 8, 32>}, {pipeline_mode = #tpu.pipeline_mode<synchronous>, transform_indices = @transform_2, window_bounds = array<i64: 32, 32>}, {pipeline_mode = #tpu.pipeline_mode<synchronous>, transform_indices = @transform_3, window_bounds = array<i64: 32, 32>}, {pipeline_mode = #tpu.pipeline_mode<synchronous>, transform_indices = @transform_4, window_bounds = array<i64: 32, 32>}, {pipeline_mode = #tpu.pipeline_mode<synchronous>, transform_indices = @transform_5, window_bounds = array<i64: 32, 32>}, {pipeline_mode = #tpu.pipeline_mode<synchronous>, transform_indices = @transform_6, window_bounds = array<i64: 32, 64>}, {pipeline_mode = #tpu.pipeline_mode<synchronous>, transform_indices = @transform_7, window_bounds = array<i64: 64, 32>}, {pipeline_mode = #tpu.pipeline_mode<synchronous>, transform_indices = @transform_8, window_bounds = array<i64: 32, 64>}, {pipeline_mode = #tpu.pipeline_mode<synchronous>, transform_indices = @transform_9, window_bounds = array<i64: 64, 32>}, {pipeline_mode = #tpu.pipeline_mode<synchronous>, transform_indices = @transform_10, window_bounds = array<i64: 32, 32>}, {pipeline_mode = #tpu.pipeline_mode<synchronous>, transform_indices = @transform_11, window_bounds = array<i64: 32, 32>}, {pipeline_mode = #tpu.pipeline_mode<synchronous>, transform_indices = @transform_12, window_bounds = array<i64: 32, 32>}, {pipeline_mode = #tpu.pipeline_mode<synchronous>, transform_indices = @transform_13, window_bounds = array<i64: 32, 32>}, {pipeline_mode = #tpu.pipeline_mode<synchronous>, transform_indices = @transform_14, window_bounds = array<i64: 32, 32>}, {pipeline_mode = #tpu.pipeline_mode<synchronous>, transform_indices = @transform_15, window_bounds = array<i64: 32, 32>}, {pipeline_mode = #tpu.pipeline_mode<synchronous>, transform_indices = @transform_16, window_bounds = array<i64: 32, 64>}, {pipeline_mode = #tpu.pipeline_mode<synchronous>, transform_indices = @transform_17, window_bounds = array<i64: 64, 32>}, {pipeline_mode = #tpu.pipeline_mode<synchronous>, transform_indices = @transform_18, window_bounds = array<i64: 32, 64>}, {pipeline_mode = #tpu.pipeline_mode<synchronous>, transform_indices = @transform_19, window_bounds = array<i64: 64, 32>}, {transform_indices = @transform_20, window_bounds = array<i64: 1, 8, 32>}, {transform_indices = @transform_21, window_bounds = array<i64: 1, 8, 32>}, {transform_indices = @transform_22, window_bounds = array<i64: 1, 2, 8, 8>}]} {
    %c0 = arith.constant 0 : index
    %c0_0 = arith.constant 0 : index
    %c0_1 = arith.constant 0 : index
    %0 = vector.load %arg1[%c0, %c0_0, %c0_1] : memref<1x8x32xf32, #tpu.memory_space<vmem>>, vector<1x8x32xf32>
    %1 = vector.shape_cast %0 : vector<1x8x32xf32> to vector<8x32xf32>
    %c0_2 = arith.constant 0 : index
    %c0_3 = arith.constant 0 : index
    %c0_4 = arith.constant 0 : index
    %2 = vector.load %arg2[%c0_2, %c0_3, %c0_4] : memref<1x8x32xf32, #tpu.memory_space<vmem>>, vector<1x8x32xf32>
    %3 = vector.shape_cast %2 : vector<1x8x32xf32> to vector<8x32xf32>
    %c0_5 = arith.constant 0 : index
    %c0_6 = arith.constant 0 : index
    %4 = vector.load %arg3[%c0_5, %c0_6] : memref<32x32xf32, #tpu.memory_space<vmem>>, vector<32x32xf32>
    %c0_7 = arith.constant 0 : index
    %c0_8 = arith.constant 0 : index
    %5 = vector.load %arg4[%c0_7, %c0_8] : memref<32x32xf32, #tpu.memory_space<vmem>>, vector<32x32xf32>
    %c0_9 = arith.constant 0 : index
    %c0_10 = arith.constant 0 : index
    %6 = vector.load %arg5[%c0_9, %c0_10] : memref<32x32xf32, #tpu.memory_space<vmem>>, vector<32x32xf32>
    %c0_11 = arith.constant 0 : index
    %c0_12 = arith.constant 0 : index
    %7 = vector.load %arg6[%c0_11, %c0_12] : memref<32x32xf32, #tpu.memory_space<vmem>>, vector<32x32xf32>
    %cst = arith.constant dense<0.000000e+00> : vector<8x32xf32>
    %8 = tpu.matmul %1, %4, %cst {dimension_numbers = #tpu.dot_dimension_numbers<[1], [0], [0], [1], [0, 0, 1, 1], [], []>} : vector<8x32xf32>, vector<32x32xf32>, vector<8x32xf32> -> vector<8x32xf32>
    %cst_13 = arith.constant dense<0.000000e+00> : vector<8x32xf32>
    %9 = tpu.matmul %1, %5, %cst_13 {dimension_numbers = #tpu.dot_dimension_numbers<[1], [0], [0], [1], [0, 0, 1, 1], [], []>} : vector<8x32xf32>, vector<32x32xf32>, vector<8x32xf32> -> vector<8x32xf32>
    %cst_14 = arith.constant dense<0.000000e+00> : vector<8x32xf32>
    %10 = tpu.matmul %1, %6, %cst_14 {dimension_numbers = #tpu.dot_dimension_numbers<[1], [0], [0], [1], [0, 0, 1, 1], [], []>} : vector<8x32xf32>, vector<32x32xf32>, vector<8x32xf32> -> vector<8x32xf32>
    %11 = vector.extract_strided_slice %8 {offsets = [0, 0], sizes = [8, 16], strides = [1, 1]} : vector<8x32xf32> to vector<8x16xf32>
    %12 = vector.extract_strided_slice %9 {offsets = [0, 0], sizes = [8, 16], strides = [1, 1]} : vector<8x32xf32> to vector<8x16xf32>
    %cst_15 = arith.constant dense<0.000000e+00> : vector<8x8xf32>
    %13 = tpu.matmul %11, %12, %cst_15 {dimension_numbers = #tpu.dot_dimension_numbers<[1], [1], [0], [0], [0, 0, 1, 0], [], []>} : vector<8x16xf32>, vector<8x16xf32>, vector<8x8xf32> -> vector<8x8xf32>
    %cst_16 = arith.constant 2.500000e-01 : f32
    %14 = vector.broadcast %cst_16 : f32 to vector<8x8xf32>
    %15 = arith.mulf %13, %14 : vector<8x8xf32>
    %cst_17 = arith.constant dense<0xFF800000> : vector<8xf32>
    %16 = vector.multi_reduction <maximumf>, %15, %cst_17 [1] : vector<8x8xf32> to vector<8xf32>
    %17 = vector.shape_cast %16 : vector<8xf32> to vector<8x1xf32>
    %18 = vector.broadcast %17 : vector<8x1xf32> to vector<8x8xf32>
    %19 = arith.subf %15, %18 : vector<8x8xf32>
    %20 = math.exp %19 : vector<8x8xf32>
    %cst_18 = arith.constant dense<0.000000e+00> : vector<8xf32>
    %21 = vector.multi_reduction <add>, %20, %cst_18 [1] : vector<8x8xf32> to vector<8xf32>
    %22 = vector.shape_cast %21 : vector<8xf32> to vector<8x1xf32>
    %23 = tpu.reciprocal %22 {approx = true} : vector<8x1xf32> -> vector<8x1xf32>
    %24 = vector.broadcast %23 : vector<8x1xf32> to vector<8x8xf32>
    %25 = arith.mulf %20, %24 : vector<8x8xf32>
    %26 = vector.extract_strided_slice %10 {offsets = [0, 0], sizes = [8, 16], strides = [1, 1]} : vector<8x32xf32> to vector<8x16xf32>
    %cst_19 = arith.constant dense<0.000000e+00> : vector<8x16xf32>
    %27 = tpu.matmul %25, %26, %cst_19 {dimension_numbers = #tpu.dot_dimension_numbers<[1], [0], [0], [1], [0, 0, 1, 1], [], []>} : vector<8x8xf32>, vector<8x16xf32>, vector<8x16xf32> -> vector<8x16xf32>
    %28 = vector.extract_strided_slice %8 {offsets = [0, 16], sizes = [8, 16], strides = [1, 1]} : vector<8x32xf32> to vector<8x16xf32>
    %29 = vector.extract_strided_slice %9 {offsets = [0, 16], sizes = [8, 16], strides = [1, 1]} : vector<8x32xf32> to vector<8x16xf32>
    %cst_20 = arith.constant dense<0.000000e+00> : vector<8x8xf32>
    %30 = tpu.matmul %28, %29, %cst_20 {dimension_numbers = #tpu.dot_dimension_numbers<[1], [1], [0], [0], [0, 0, 1, 0], [], []>} : vector<8x16xf32>, vector<8x16xf32>, vector<8x8xf32> -> vector<8x8xf32>
    %cst_21 = arith.constant 2.500000e-01 : f32
    %31 = vector.broadcast %cst_21 : f32 to vector<8x8xf32>
    %32 = arith.mulf %30, %31 : vector<8x8xf32>
    %cst_22 = arith.constant dense<0xFF800000> : vector<8xf32>
    %33 = vector.multi_reduction <maximumf>, %32, %cst_22 [1] : vector<8x8xf32> to vector<8xf32>
    %34 = vector.shape_cast %33 : vector<8xf32> to vector<8x1xf32>
    %35 = vector.broadcast %34 : vector<8x1xf32> to vector<8x8xf32>
    %36 = arith.subf %32, %35 : vector<8x8xf32>
    %37 = math.exp %36 : vector<8x8xf32>
    %cst_23 = arith.constant dense<0.000000e+00> : vector<8xf32>
    %38 = vector.multi_reduction <add>, %37, %cst_23 [1] : vector<8x8xf32> to vector<8xf32>
    %39 = vector.shape_cast %38 : vector<8xf32> to vector<8x1xf32>
    %40 = tpu.reciprocal %39 {approx = true} : vector<8x1xf32> -> vector<8x1xf32>
    %41 = vector.broadcast %40 : vector<8x1xf32> to vector<8x8xf32>
    %42 = arith.mulf %37, %41 : vector<8x8xf32>
    %43 = vector.extract_strided_slice %10 {offsets = [0, 16], sizes = [8, 16], strides = [1, 1]} : vector<8x32xf32> to vector<8x16xf32>
    %cst_24 = arith.constant dense<0.000000e+00> : vector<8x16xf32>
    %44 = tpu.matmul %42, %43, %cst_24 {dimension_numbers = #tpu.dot_dimension_numbers<[1], [0], [0], [1], [0, 0, 1, 1], [], []>} : vector<8x8xf32>, vector<8x16xf32>, vector<8x16xf32> -> vector<8x16xf32>
    %45 = tpu.concatenate %27, %44 in 1 : vector<8x16xf32>, vector<8x16xf32> -> vector<8x32xf32>
    %cst_25 = arith.constant dense<0.000000e+00> : vector<8x32xf32>
    %46 = tpu.matmul %45, %7, %cst_25 {dimension_numbers = #tpu.dot_dimension_numbers<[1], [0], [0], [1], [0, 0, 1, 1], [], []>} : vector<8x32xf32>, vector<32x32xf32>, vector<8x32xf32> -> vector<8x32xf32>
    %47 = arith.addf %46, %1 : vector<8x32xf32>
    %cst_26 = arith.constant dense<0.000000e+00> : vector<8xf32>
    %48 = vector.multi_reduction <add>, %47, %cst_26 [1] : vector<8x32xf32> to vector<8xf32>
    %49 = vector.shape_cast %48 : vector<8xf32> to vector<8x1xf32>
    %cst_27 = arith.constant 3.200000e+01 : f32
    %50 = vector.broadcast %cst_27 : f32 to vector<8x1xf32>
    %51 = arith.divf %49, %50 : vector<8x1xf32>
    %52 = vector.broadcast %51 : vector<8x1xf32> to vector<8x32xf32>
    %53 = arith.subf %47, %52 : vector<8x32xf32>
    %54 = arith.mulf %53, %53 : vector<8x32xf32>
    %cst_28 = arith.constant dense<0.000000e+00> : vector<8xf32>
    %55 = vector.multi_reduction <add>, %54, %cst_28 [1] : vector<8x32xf32> to vector<8xf32>
    %56 = vector.shape_cast %55 : vector<8xf32> to vector<8x1xf32>
    %cst_29 = arith.constant 3.200000e+01 : f32
    %57 = vector.broadcast %cst_29 : f32 to vector<8x1xf32>
    %58 = arith.divf %56, %57 : vector<8x1xf32>
    %cst_30 = arith.constant 9.99999974E-6 : f32
    %59 = vector.broadcast %cst_30 : f32 to vector<8x1xf32>
    %60 = arith.addf %58, %59 : vector<8x1xf32>
    %61 = math.rsqrt %60 : vector<8x1xf32>
    %62 = vector.broadcast %61 : vector<8x1xf32> to vector<8x32xf32>
    %63 = arith.mulf %53, %62 : vector<8x32xf32>
    %c0_31 = arith.constant 0 : index
    %c0_32 = arith.constant 0 : index
    %64 = vector.load %arg3[%c0_31, %c0_32] : memref<32x32xf32, #tpu.memory_space<vmem>>, vector<32x32xf32>
    %c0_33 = arith.constant 0 : index
    %c0_34 = arith.constant 0 : index
    %65 = vector.load %arg4[%c0_33, %c0_34] : memref<32x32xf32, #tpu.memory_space<vmem>>, vector<32x32xf32>
    %c0_35 = arith.constant 0 : index
    %c0_36 = arith.constant 0 : index
    %66 = vector.load %arg5[%c0_35, %c0_36] : memref<32x32xf32, #tpu.memory_space<vmem>>, vector<32x32xf32>
    %c0_37 = arith.constant 0 : index
    %c0_38 = arith.constant 0 : index
    %67 = vector.load %arg6[%c0_37, %c0_38] : memref<32x32xf32, #tpu.memory_space<vmem>>, vector<32x32xf32>
    %cst_39 = arith.constant dense<0.000000e+00> : vector<8x32xf32>
    %68 = tpu.matmul %3, %64, %cst_39 {dimension_numbers = #tpu.dot_dimension_numbers<[1], [0], [0], [1], [0, 0, 1, 1], [], []>} : vector<8x32xf32>, vector<32x32xf32>, vector<8x32xf32> -> vector<8x32xf32>
    %cst_40 = arith.constant dense<0.000000e+00> : vector<8x32xf32>
    %69 = tpu.matmul %3, %65, %cst_40 {dimension_numbers = #tpu.dot_dimension_numbers<[1], [0], [0], [1], [0, 0, 1, 1], [], []>} : vector<8x32xf32>, vector<32x32xf32>, vector<8x32xf32> -> vector<8x32xf32>
    %cst_41 = arith.constant dense<0.000000e+00> : vector<8x32xf32>
    %70 = tpu.matmul %3, %66, %cst_41 {dimension_numbers = #tpu.dot_dimension_numbers<[1], [0], [0], [1], [0, 0, 1, 1], [], []>} : vector<8x32xf32>, vector<32x32xf32>, vector<8x32xf32> -> vector<8x32xf32>
    %71 = vector.extract_strided_slice %68 {offsets = [0, 0], sizes = [8, 16], strides = [1, 1]} : vector<8x32xf32> to vector<8x16xf32>
    %72 = vector.extract_strided_slice %69 {offsets = [0, 0], sizes = [8, 16], strides = [1, 1]} : vector<8x32xf32> to vector<8x16xf32>
    %cst_42 = arith.constant dense<0.000000e+00> : vector<8x8xf32>
    %73 = tpu.matmul %71, %72, %cst_42 {dimension_numbers = #tpu.dot_dimension_numbers<[1], [1], [0], [0], [0, 0, 1, 0], [], []>} : vector<8x16xf32>, vector<8x16xf32>, vector<8x8xf32> -> vector<8x8xf32>
    %cst_43 = arith.constant 2.500000e-01 : f32
    %74 = vector.broadcast %cst_43 : f32 to vector<8x8xf32>
    %75 = arith.mulf %73, %74 : vector<8x8xf32>
    %cst_44 = arith.constant dense<0xFF800000> : vector<8xf32>
    %76 = vector.multi_reduction <maximumf>, %75, %cst_44 [1] : vector<8x8xf32> to vector<8xf32>
    %77 = vector.shape_cast %76 : vector<8xf32> to vector<8x1xf32>
    %78 = vector.broadcast %77 : vector<8x1xf32> to vector<8x8xf32>
    %79 = arith.subf %75, %78 : vector<8x8xf32>
    %80 = math.exp %79 : vector<8x8xf32>
    %cst_45 = arith.constant dense<0.000000e+00> : vector<8xf32>
    %81 = vector.multi_reduction <add>, %80, %cst_45 [1] : vector<8x8xf32> to vector<8xf32>
    %82 = vector.shape_cast %81 : vector<8xf32> to vector<8x1xf32>
    %83 = tpu.reciprocal %82 {approx = true} : vector<8x1xf32> -> vector<8x1xf32>
    %84 = vector.broadcast %83 : vector<8x1xf32> to vector<8x8xf32>
    %85 = arith.mulf %80, %84 : vector<8x8xf32>
    %86 = vector.extract_strided_slice %70 {offsets = [0, 0], sizes = [8, 16], strides = [1, 1]} : vector<8x32xf32> to vector<8x16xf32>
    %cst_46 = arith.constant dense<0.000000e+00> : vector<8x16xf32>
    %87 = tpu.matmul %85, %86, %cst_46 {dimension_numbers = #tpu.dot_dimension_numbers<[1], [0], [0], [1], [0, 0, 1, 1], [], []>} : vector<8x8xf32>, vector<8x16xf32>, vector<8x16xf32> -> vector<8x16xf32>
    %88 = vector.extract_strided_slice %68 {offsets = [0, 16], sizes = [8, 16], strides = [1, 1]} : vector<8x32xf32> to vector<8x16xf32>
    %89 = vector.extract_strided_slice %69 {offsets = [0, 16], sizes = [8, 16], strides = [1, 1]} : vector<8x32xf32> to vector<8x16xf32>
    %cst_47 = arith.constant dense<0.000000e+00> : vector<8x8xf32>
    %90 = tpu.matmul %88, %89, %cst_47 {dimension_numbers = #tpu.dot_dimension_numbers<[1], [1], [0], [0], [0, 0, 1, 0], [], []>} : vector<8x16xf32>, vector<8x16xf32>, vector<8x8xf32> -> vector<8x8xf32>
    %cst_48 = arith.constant 2.500000e-01 : f32
    %91 = vector.broadcast %cst_48 : f32 to vector<8x8xf32>
    %92 = arith.mulf %90, %91 : vector<8x8xf32>
    %cst_49 = arith.constant dense<0xFF800000> : vector<8xf32>
    %93 = vector.multi_reduction <maximumf>, %92, %cst_49 [1] : vector<8x8xf32> to vector<8xf32>
    %94 = vector.shape_cast %93 : vector<8xf32> to vector<8x1xf32>
    %95 = vector.broadcast %94 : vector<8x1xf32> to vector<8x8xf32>
    %96 = arith.subf %92, %95 : vector<8x8xf32>
    %97 = math.exp %96 : vector<8x8xf32>
    %cst_50 = arith.constant dense<0.000000e+00> : vector<8xf32>
    %98 = vector.multi_reduction <add>, %97, %cst_50 [1] : vector<8x8xf32> to vector<8xf32>
    %99 = vector.shape_cast %98 : vector<8xf32> to vector<8x1xf32>
    %100 = tpu.reciprocal %99 {approx = true} : vector<8x1xf32> -> vector<8x1xf32>
    %101 = vector.broadcast %100 : vector<8x1xf32> to vector<8x8xf32>
    %102 = arith.mulf %97, %101 : vector<8x8xf32>
    %103 = vector.extract_strided_slice %70 {offsets = [0, 16], sizes = [8, 16], strides = [1, 1]} : vector<8x32xf32> to vector<8x16xf32>
    %cst_51 = arith.constant dense<0.000000e+00> : vector<8x16xf32>
    %104 = tpu.matmul %102, %103, %cst_51 {dimension_numbers = #tpu.dot_dimension_numbers<[1], [0], [0], [1], [0, 0, 1, 1], [], []>} : vector<8x8xf32>, vector<8x16xf32>, vector<8x16xf32> -> vector<8x16xf32>
    %105 = tpu.concatenate %87, %104 in 1 : vector<8x16xf32>, vector<8x16xf32> -> vector<8x32xf32>
    %cst_52 = arith.constant dense<0.000000e+00> : vector<8x32xf32>
    %106 = tpu.matmul %105, %67, %cst_52 {dimension_numbers = #tpu.dot_dimension_numbers<[1], [0], [0], [1], [0, 0, 1, 1], [], []>} : vector<8x32xf32>, vector<32x32xf32>, vector<8x32xf32> -> vector<8x32xf32>
    %107 = arith.addf %106, %3 : vector<8x32xf32>
    %cst_53 = arith.constant dense<0.000000e+00> : vector<8xf32>
    %108 = vector.multi_reduction <add>, %107, %cst_53 [1] : vector<8x32xf32> to vector<8xf32>
    %109 = vector.shape_cast %108 : vector<8xf32> to vector<8x1xf32>
    %cst_54 = arith.constant 3.200000e+01 : f32
    %110 = vector.broadcast %cst_54 : f32 to vector<8x1xf32>
    %111 = arith.divf %109, %110 : vector<8x1xf32>
    %112 = vector.broadcast %111 : vector<8x1xf32> to vector<8x32xf32>
    %113 = arith.subf %107, %112 : vector<8x32xf32>
    %114 = arith.mulf %113, %113 : vector<8x32xf32>
    %cst_55 = arith.constant dense<0.000000e+00> : vector<8xf32>
    %115 = vector.multi_reduction <add>, %114, %cst_55 [1] : vector<8x32xf32> to vector<8xf32>
    %116 = vector.shape_cast %115 : vector<8xf32> to vector<8x1xf32>
    %cst_56 = arith.constant 3.200000e+01 : f32
    %117 = vector.broadcast %cst_56 : f32 to vector<8x1xf32>
    %118 = arith.divf %116, %117 : vector<8x1xf32>
    %cst_57 = arith.constant 9.99999974E-6 : f32
    %119 = vector.broadcast %cst_57 : f32 to vector<8x1xf32>
    %120 = arith.addf %118, %119 : vector<8x1xf32>
    %121 = math.rsqrt %120 : vector<8x1xf32>
    %122 = vector.broadcast %121 : vector<8x1xf32> to vector<8x32xf32>
    %123 = arith.mulf %113, %122 : vector<8x32xf32>
    %c0_58 = arith.constant 0 : index
    %c0_59 = arith.constant 0 : index
    %124 = vector.load %arg7[%c0_58, %c0_59] : memref<32x64xf32, #tpu.memory_space<vmem>>, vector<32x64xf32>
    %c0_60 = arith.constant 0 : index
    %c0_61 = arith.constant 0 : index
    %125 = vector.load %arg8[%c0_60, %c0_61] : memref<64x32xf32, #tpu.memory_space<vmem>>, vector<64x32xf32>
    %cst_62 = arith.constant dense<0.000000e+00> : vector<8x64xf32>
    %126 = tpu.matmul %63, %124, %cst_62 {dimension_numbers = #tpu.dot_dimension_numbers<[1], [0], [0], [1], [0, 0, 1, 1], [], []>} : vector<8x32xf32>, vector<32x64xf32>, vector<8x64xf32> -> vector<8x64xf32>
    %cst_63 = arith.constant 0.000000e+00 : f32
    %127 = vector.broadcast %cst_63 : f32 to vector<8x64xf32>
    %128 = arith.maximumf %126, %127 : vector<8x64xf32>
    %cst_64 = arith.constant dense<0.000000e+00> : vector<8x32xf32>
    %129 = tpu.matmul %128, %125, %cst_64 {dimension_numbers = #tpu.dot_dimension_numbers<[1], [0], [0], [1], [0, 0, 1, 1], [], []>} : vector<8x64xf32>, vector<64x32xf32>, vector<8x32xf32> -> vector<8x32xf32>
    %130 = arith.addf %129, %63 : vector<8x32xf32>
    %cst_65 = arith.constant dense<0.000000e+00> : vector<8xf32>
    %131 = vector.multi_reduction <add>, %130, %cst_65 [1] : vector<8x32xf32> to vector<8xf32>
    %132 = vector.shape_cast %131 : vector<8xf32> to vector<8x1xf32>
    %cst_66 = arith.constant 3.200000e+01 : f32
    %133 = vector.broadcast %cst_66 : f32 to vector<8x1xf32>
    %134 = arith.divf %132, %133 : vector<8x1xf32>
    %135 = vector.broadcast %134 : vector<8x1xf32> to vector<8x32xf32>
    %136 = arith.subf %130, %135 : vector<8x32xf32>
    %137 = arith.mulf %136, %136 : vector<8x32xf32>
    %cst_67 = arith.constant dense<0.000000e+00> : vector<8xf32>
    %138 = vector.multi_reduction <add>, %137, %cst_67 [1] : vector<8x32xf32> to vector<8xf32>
    %139 = vector.shape_cast %138 : vector<8xf32> to vector<8x1xf32>
    %cst_68 = arith.constant 3.200000e+01 : f32
    %140 = vector.broadcast %cst_68 : f32 to vector<8x1xf32>
    %141 = arith.divf %139, %140 : vector<8x1xf32>
    %cst_69 = arith.constant 9.99999974E-6 : f32
    %142 = vector.broadcast %cst_69 : f32 to vector<8x1xf32>
    %143 = arith.addf %141, %142 : vector<8x1xf32>
    %144 = math.rsqrt %143 : vector<8x1xf32>
    %145 = vector.broadcast %144 : vector<8x1xf32> to vector<8x32xf32>
    %146 = arith.mulf %136, %145 : vector<8x32xf32>
    %c0_70 = arith.constant 0 : index
    %c0_71 = arith.constant 0 : index
    %147 = vector.load %arg9[%c0_70, %c0_71] : memref<32x64xf32, #tpu.memory_space<vmem>>, vector<32x64xf32>
    %c0_72 = arith.constant 0 : index
    %c0_73 = arith.constant 0 : index
    %148 = vector.load %arg10[%c0_72, %c0_73] : memref<64x32xf32, #tpu.memory_space<vmem>>, vector<64x32xf32>
    %cst_74 = arith.constant dense<0.000000e+00> : vector<8x64xf32>
    %149 = tpu.matmul %123, %147, %cst_74 {dimension_numbers = #tpu.dot_dimension_numbers<[1], [0], [0], [1], [0, 0, 1, 1], [], []>} : vector<8x32xf32>, vector<32x64xf32>, vector<8x64xf32> -> vector<8x64xf32>
    %cst_75 = arith.constant 0.000000e+00 : f32
    %150 = vector.broadcast %cst_75 : f32 to vector<8x64xf32>
    %151 = arith.maximumf %149, %150 : vector<8x64xf32>
    %cst_76 = arith.constant dense<0.000000e+00> : vector<8x32xf32>
    %152 = tpu.matmul %151, %148, %cst_76 {dimension_numbers = #tpu.dot_dimension_numbers<[1], [0], [0], [1], [0, 0, 1, 1], [], []>} : vector<8x64xf32>, vector<64x32xf32>, vector<8x32xf32> -> vector<8x32xf32>
    %153 = arith.addf %152, %123 : vector<8x32xf32>
    %cst_77 = arith.constant dense<0.000000e+00> : vector<8xf32>
    %154 = vector.multi_reduction <add>, %153, %cst_77 [1] : vector<8x32xf32> to vector<8xf32>
    %155 = vector.shape_cast %154 : vector<8xf32> to vector<8x1xf32>
    %cst_78 = arith.constant 3.200000e+01 : f32
    %156 = vector.broadcast %cst_78 : f32 to vector<8x1xf32>
    %157 = arith.divf %155, %156 : vector<8x1xf32>
    %158 = vector.broadcast %157 : vector<8x1xf32> to vector<8x32xf32>
    %159 = arith.subf %153, %158 : vector<8x32xf32>
    %160 = arith.mulf %159, %159 : vector<8x32xf32>
    %cst_79 = arith.constant dense<0.000000e+00> : vector<8xf32>
    %161 = vector.multi_reduction <add>, %160, %cst_79 [1] : vector<8x32xf32> to vector<8xf32>
    %162 = vector.shape_cast %161 : vector<8xf32> to vector<8x1xf32>
    %cst_80 = arith.constant 3.200000e+01 : f32
    %163 = vector.broadcast %cst_80 : f32 to vector<8x1xf32>
    %164 = arith.divf %162, %163 : vector<8x1xf32>
    %cst_81 = arith.constant 9.99999974E-6 : f32
    %165 = vector.broadcast %cst_81 : f32 to vector<8x1xf32>
    %166 = arith.addf %164, %165 : vector<8x1xf32>
    %167 = math.rsqrt %166 : vector<8x1xf32>
    %168 = vector.broadcast %167 : vector<8x1xf32> to vector<8x32xf32>
    %169 = arith.mulf %159, %168 : vector<8x32xf32>
    %c0_82 = arith.constant 0 : index
    %c0_83 = arith.constant 0 : index
    %170 = vector.load %arg11[%c0_82, %c0_83] : memref<32x32xf32, #tpu.memory_space<vmem>>, vector<32x32xf32>
    %c0_84 = arith.constant 0 : index
    %c0_85 = arith.constant 0 : index
    %171 = vector.load %arg12[%c0_84, %c0_85] : memref<32x32xf32, #tpu.memory_space<vmem>>, vector<32x32xf32>
    %c0_86 = arith.constant 0 : index
    %c0_87 = arith.constant 0 : index
    %172 = vector.load %arg13[%c0_86, %c0_87] : memref<32x32xf32, #tpu.memory_space<vmem>>, vector<32x32xf32>
    %c0_88 = arith.constant 0 : index
    %c0_89 = arith.constant 0 : index
    %173 = vector.load %arg14[%c0_88, %c0_89] : memref<32x32xf32, #tpu.memory_space<vmem>>, vector<32x32xf32>
    %c0_90 = arith.constant 0 : index
    %c0_91 = arith.constant 0 : index
    %174 = vector.load %arg15[%c0_90, %c0_91] : memref<32x32xf32, #tpu.memory_space<vmem>>, vector<32x32xf32>
    %c0_92 = arith.constant 0 : index
    %c0_93 = arith.constant 0 : index
    %175 = vector.load %arg16[%c0_92, %c0_93] : memref<32x32xf32, #tpu.memory_space<vmem>>, vector<32x32xf32>
    %cst_94 = arith.constant dense<0.000000e+00> : vector<8x32xf32>
    %176 = tpu.matmul %146, %170, %cst_94 {dimension_numbers = #tpu.dot_dimension_numbers<[1], [0], [0], [1], [0, 0, 1, 1], [], []>} : vector<8x32xf32>, vector<32x32xf32>, vector<8x32xf32> -> vector<8x32xf32>
    %cst_95 = arith.constant dense<0.000000e+00> : vector<8x32xf32>
    %177 = tpu.matmul %169, %171, %cst_95 {dimension_numbers = #tpu.dot_dimension_numbers<[1], [0], [0], [1], [0, 0, 1, 1], [], []>} : vector<8x32xf32>, vector<32x32xf32>, vector<8x32xf32> -> vector<8x32xf32>
    %cst_96 = arith.constant dense<0.000000e+00> : vector<8x32xf32>
    %178 = tpu.matmul %146, %172, %cst_96 {dimension_numbers = #tpu.dot_dimension_numbers<[1], [0], [0], [1], [0, 0, 1, 1], [], []>} : vector<8x32xf32>, vector<32x32xf32>, vector<8x32xf32> -> vector<8x32xf32>
    %cst_97 = arith.constant dense<0.000000e+00> : vector<8x32xf32>
    %179 = tpu.matmul %169, %173, %cst_97 {dimension_numbers = #tpu.dot_dimension_numbers<[1], [0], [0], [1], [0, 0, 1, 1], [], []>} : vector<8x32xf32>, vector<32x32xf32>, vector<8x32xf32> -> vector<8x32xf32>
    %180 = vector.extract_strided_slice %176 {offsets = [0, 0], sizes = [8, 16], strides = [1, 1]} : vector<8x32xf32> to vector<8x16xf32>
    %181 = vector.extract_strided_slice %177 {offsets = [0, 0], sizes = [8, 16], strides = [1, 1]} : vector<8x32xf32> to vector<8x16xf32>
    %cst_98 = arith.constant dense<0.000000e+00> : vector<8x8xf32>
    %182 = tpu.matmul %180, %181, %cst_98 {dimension_numbers = #tpu.dot_dimension_numbers<[1], [1], [0], [0], [0, 0, 1, 0], [], []>} : vector<8x16xf32>, vector<8x16xf32>, vector<8x8xf32> -> vector<8x8xf32>
    %cst_99 = arith.constant 2.500000e-01 : f32
    %183 = vector.broadcast %cst_99 : f32 to vector<8x8xf32>
    %184 = arith.mulf %182, %183 : vector<8x8xf32>
    %cst_100 = arith.constant dense<0xFF800000> : vector<8xf32>
    %185 = vector.multi_reduction <maximumf>, %184, %cst_100 [1] : vector<8x8xf32> to vector<8xf32>
    %186 = vector.shape_cast %185 : vector<8xf32> to vector<8x1xf32>
    %187 = vector.broadcast %186 : vector<8x1xf32> to vector<8x8xf32>
    %188 = arith.subf %184, %187 : vector<8x8xf32>
    %189 = math.exp %188 : vector<8x8xf32>
    %cst_101 = arith.constant dense<0.000000e+00> : vector<8xf32>
    %190 = vector.multi_reduction <add>, %189, %cst_101 [1] : vector<8x8xf32> to vector<8xf32>
    %191 = vector.shape_cast %190 : vector<8xf32> to vector<8x1xf32>
    %192 = tpu.reciprocal %191 {approx = true} : vector<8x1xf32> -> vector<8x1xf32>
    %193 = vector.broadcast %192 : vector<8x1xf32> to vector<8x8xf32>
    %194 = arith.mulf %189, %193 : vector<8x8xf32>
    %c0_102 = arith.constant 0 : index
    %c0_103 = arith.constant 0 : index
    %c0_104 = arith.constant 0 : index
    %c0_105 = arith.constant 0 : index
    %195 = vector.load %arg23[%c0_102, %c0_103, %c0_104, %c0_105] : memref<1x2x8x8xf32, #tpu.memory_space<vmem>>, vector<1x1x8x8xf32>
    %196 = vector.shape_cast %195 : vector<1x1x8x8xf32> to vector<8x8xf32>
    %197 = vector.shape_cast %194 : vector<8x8xf32> to vector<1x1x8x8xf32>
    tpu.vector_store %arg23[%c0_102, %c0_103, %c0_104, %c0_105], %197 {strides = array<i32>} : memref<1x2x8x8xf32, #tpu.memory_space<vmem>>, vector<1x1x8x8xf32>,
    %198 = vector.extract_strided_slice %178 {offsets = [0, 0], sizes = [8, 16], strides = [1, 1]} : vector<8x32xf32> to vector<8x16xf32>
    %cst_106 = arith.constant dense<0.000000e+00> : vector<8x16xf32>
    %199 = tpu.matmul %194, %198, %cst_106 {dimension_numbers = #tpu.dot_dimension_numbers<[1], [0], [0], [1], [0, 0, 1, 1], [], []>} : vector<8x8xf32>, vector<8x16xf32>, vector<8x16xf32> -> vector<8x16xf32>
    %200 = vector.extract_strided_slice %179 {offsets = [0, 0], sizes = [8, 16], strides = [1, 1]} : vector<8x32xf32> to vector<8x16xf32>
    %cst_107 = arith.constant dense<0.000000e+00> : vector<8x16xf32>
    %201 = tpu.matmul %194, %200, %cst_107 {dimension_numbers = #tpu.dot_dimension_numbers<[1], [0], [0], [1], [0, 0, 1, 1], [], []>} : vector<8x8xf32>, vector<8x16xf32>, vector<8x16xf32> -> vector<8x16xf32>
    %202 = vector.extract_strided_slice %176 {offsets = [0, 16], sizes = [8, 16], strides = [1, 1]} : vector<8x32xf32> to vector<8x16xf32>
    %203 = vector.extract_strided_slice %177 {offsets = [0, 16], sizes = [8, 16], strides = [1, 1]} : vector<8x32xf32> to vector<8x16xf32>
    %cst_108 = arith.constant dense<0.000000e+00> : vector<8x8xf32>
    %204 = tpu.matmul %202, %203, %cst_108 {dimension_numbers = #tpu.dot_dimension_numbers<[1], [1], [0], [0], [0, 0, 1, 0], [], []>} : vector<8x16xf32>, vector<8x16xf32>, vector<8x8xf32> -> vector<8x8xf32>
    %cst_109 = arith.constant 2.500000e-01 : f32
    %205 = vector.broadcast %cst_109 : f32 to vector<8x8xf32>
    %206 = arith.mulf %204, %205 : vector<8x8xf32>
    %cst_110 = arith.constant dense<0xFF800000> : vector<8xf32>
    %207 = vector.multi_reduction <maximumf>, %206, %cst_110 [1] : vector<8x8xf32> to vector<8xf32>
    %208 = vector.shape_cast %207 : vector<8xf32> to vector<8x1xf32>
    %209 = vector.broadcast %208 : vector<8x1xf32> to vector<8x8xf32>
    %210 = arith.subf %206, %209 : vector<8x8xf32>
    %211 = math.exp %210 : vector<8x8xf32>
    %cst_111 = arith.constant dense<0.000000e+00> : vector<8xf32>
    %212 = vector.multi_reduction <add>, %211, %cst_111 [1] : vector<8x8xf32> to vector<8xf32>
    %213 = vector.shape_cast %212 : vector<8xf32> to vector<8x1xf32>
    %214 = tpu.reciprocal %213 {approx = true} : vector<8x1xf32> -> vector<8x1xf32>
    %215 = vector.broadcast %214 : vector<8x1xf32> to vector<8x8xf32>
    %216 = arith.mulf %211, %215 : vector<8x8xf32>
    %c0_112 = arith.constant 0 : index
    %c1 = arith.constant 1 : index
    %c0_113 = arith.constant 0 : index
    %c0_114 = arith.constant 0 : index
    %217 = vector.load %arg23[%c0_112, %c1, %c0_113, %c0_114] : memref<1x2x8x8xf32, #tpu.memory_space<vmem>>, vector<1x1x8x8xf32>
    %218 = vector.shape_cast %217 : vector<1x1x8x8xf32> to vector<8x8xf32>
    %219 = vector.shape_cast %216 : vector<8x8xf32> to vector<1x1x8x8xf32>
    tpu.vector_store %arg23[%c0_112, %c1, %c0_113, %c0_114], %219 {strides = array<i32>} : memref<1x2x8x8xf32, #tpu.memory_space<vmem>>, vector<1x1x8x8xf32>,
    %220 = vector.extract_strided_slice %178 {offsets = [0, 16], sizes = [8, 16], strides = [1, 1]} : vector<8x32xf32> to vector<8x16xf32>
    %cst_115 = arith.constant dense<0.000000e+00> : vector<8x16xf32>
    %221 = tpu.matmul %216, %220, %cst_115 {dimension_numbers = #tpu.dot_dimension_numbers<[1], [0], [0], [1], [0, 0, 1, 1], [], []>} : vector<8x8xf32>, vector<8x16xf32>, vector<8x16xf32> -> vector<8x16xf32>
    %222 = vector.extract_strided_slice %179 {offsets = [0, 16], sizes = [8, 16], strides = [1, 1]} : vector<8x32xf32> to vector<8x16xf32>
    %cst_116 = arith.constant dense<0.000000e+00> : vector<8x16xf32>
    %223 = tpu.matmul %216, %222, %cst_116 {dimension_numbers = #tpu.dot_dimension_numbers<[1], [0], [0], [1], [0, 0, 1, 1], [], []>} : vector<8x8xf32>, vector<8x16xf32>, vector<8x16xf32> -> vector<8x16xf32>
    %224 = tpu.concatenate %199, %221 in 1 : vector<8x16xf32>, vector<8x16xf32> -> vector<8x32xf32>
    %cst_117 = arith.constant dense<0.000000e+00> : vector<8x32xf32>
    %225 = tpu.matmul %224, %174, %cst_117 {dimension_numbers = #tpu.dot_dimension_numbers<[1], [0], [0], [1], [0, 0, 1, 1], [], []>} : vector<8x32xf32>, vector<32x32xf32>, vector<8x32xf32> -> vector<8x32xf32>
    %226 = tpu.concatenate %201, %223 in 1 : vector<8x16xf32>, vector<8x16xf32> -> vector<8x32xf32>
    %cst_118 = arith.constant dense<0.000000e+00> : vector<8x32xf32>
    %227 = tpu.matmul %226, %175, %cst_118 {dimension_numbers = #tpu.dot_dimension_numbers<[1], [0], [0], [1], [0, 0, 1, 1], [], []>} : vector<8x32xf32>, vector<32x32xf32>, vector<8x32xf32> -> vector<8x32xf32>
    %228 = arith.addf %225, %146 : vector<8x32xf32>
    %cst_119 = arith.constant dense<0.000000e+00> : vector<8xf32>
    %229 = vector.multi_reduction <add>, %228, %cst_119 [1] : vector<8x32xf32> to vector<8xf32>
    %230 = vector.shape_cast %229 : vector<8xf32> to vector<8x1xf32>
    %cst_120 = arith.constant 3.200000e+01 : f32
    %231 = vector.broadcast %cst_120 : f32 to vector<8x1xf32>
    %232 = arith.divf %230, %231 : vector<8x1xf32>
    %233 = vector.broadcast %232 : vector<8x1xf32> to vector<8x32xf32>
    %234 = arith.subf %228, %233 : vector<8x32xf32>
    %235 = arith.mulf %234, %234 : vector<8x32xf32>
    %cst_121 = arith.constant dense<0.000000e+00> : vector<8xf32>
    %236 = vector.multi_reduction <add>, %235, %cst_121 [1] : vector<8x32xf32> to vector<8xf32>
    %237 = vector.shape_cast %236 : vector<8xf32> to vector<8x1xf32>
    %cst_122 = arith.constant 3.200000e+01 : f32
    %238 = vector.broadcast %cst_122 : f32 to vector<8x1xf32>
    %239 = arith.divf %237, %238 : vector<8x1xf32>
    %cst_123 = arith.constant 9.99999974E-6 : f32
    %240 = vector.broadcast %cst_123 : f32 to vector<8x1xf32>
    %241 = arith.addf %239, %240 : vector<8x1xf32>
    %242 = math.rsqrt %241 : vector<8x1xf32>
    %243 = vector.broadcast %242 : vector<8x1xf32> to vector<8x32xf32>
    %244 = arith.mulf %234, %243 : vector<8x32xf32>
    %245 = arith.addf %227, %169 : vector<8x32xf32>
    %cst_124 = arith.constant dense<0.000000e+00> : vector<8xf32>
    %246 = vector.multi_reduction <add>, %245, %cst_124 [1] : vector<8x32xf32> to vector<8xf32>
    %247 = vector.shape_cast %246 : vector<8xf32> to vector<8x1xf32>
    %cst_125 = arith.constant 3.200000e+01 : f32
    %248 = vector.broadcast %cst_125 : f32 to vector<8x1xf32>
    %249 = arith.divf %247, %248 : vector<8x1xf32>
    %250 = vector.broadcast %249 : vector<8x1xf32> to vector<8x32xf32>
    %251 = arith.subf %245, %250 : vector<8x32xf32>
    %252 = arith.mulf %251, %251 : vector<8x32xf32>
    %cst_126 = arith.constant dense<0.000000e+00> : vector<8xf32>
    %253 = vector.multi_reduction <add>, %252, %cst_126 [1] : vector<8x32xf32> to vector<8xf32>
    %254 = vector.shape_cast %253 : vector<8xf32> to vector<8x1xf32>
    %cst_127 = arith.constant 3.200000e+01 : f32
    %255 = vector.broadcast %cst_127 : f32 to vector<8x1xf32>
    %256 = arith.divf %254, %255 : vector<8x1xf32>
    %cst_128 = arith.constant 9.99999974E-6 : f32
    %257 = vector.broadcast %cst_128 : f32 to vector<8x1xf32>
    %258 = arith.addf %256, %257 : vector<8x1xf32>
    %259 = math.rsqrt %258 : vector<8x1xf32>
    %260 = vector.broadcast %259 : vector<8x1xf32> to vector<8x32xf32>
    %261 = arith.mulf %251, %260 : vector<8x32xf32>
    %c0_129 = arith.constant 0 : index
    %c0_130 = arith.constant 0 : index
    %262 = vector.load %arg17[%c0_129, %c0_130] : memref<32x64xf32, #tpu.memory_space<vmem>>, vector<32x64xf32>
    %c0_131 = arith.constant 0 : index
    %c0_132 = arith.constant 0 : index
    %263 = vector.load %arg18[%c0_131, %c0_132] : memref<64x32xf32, #tpu.memory_space<vmem>>, vector<64x32xf32>
    %cst_133 = arith.constant dense<0.000000e+00> : vector<8x64xf32>
    %264 = tpu.matmul %244, %262, %cst_133 {dimension_numbers = #tpu.dot_dimension_numbers<[1], [0], [0], [1], [0, 0, 1, 1], [], []>} : vector<8x32xf32>, vector<32x64xf32>, vector<8x64xf32> -> vector<8x64xf32>
    %cst_134 = arith.constant 0.000000e+00 : f32
    %265 = vector.broadcast %cst_134 : f32 to vector<8x64xf32>
    %266 = arith.maximumf %264, %265 : vector<8x64xf32>
    %cst_135 = arith.constant dense<0.000000e+00> : vector<8x32xf32>
    %267 = tpu.matmul %266, %263, %cst_135 {dimension_numbers = #tpu.dot_dimension_numbers<[1], [0], [0], [1], [0, 0, 1, 1], [], []>} : vector<8x64xf32>, vector<64x32xf32>, vector<8x32xf32> -> vector<8x32xf32>
    %268 = arith.addf %267, %244 : vector<8x32xf32>
    %cst_136 = arith.constant dense<0.000000e+00> : vector<8xf32>
    %269 = vector.multi_reduction <add>, %268, %cst_136 [1] : vector<8x32xf32> to vector<8xf32>
    %270 = vector.shape_cast %269 : vector<8xf32> to vector<8x1xf32>
    %cst_137 = arith.constant 3.200000e+01 : f32
    %271 = vector.broadcast %cst_137 : f32 to vector<8x1xf32>
    %272 = arith.divf %270, %271 : vector<8x1xf32>
    %273 = vector.broadcast %272 : vector<8x1xf32> to vector<8x32xf32>
    %274 = arith.subf %268, %273 : vector<8x32xf32>
    %275 = arith.mulf %274, %274 : vector<8x32xf32>
    %cst_138 = arith.constant dense<0.000000e+00> : vector<8xf32>
    %276 = vector.multi_reduction <add>, %275, %cst_138 [1] : vector<8x32xf32> to vector<8xf32>
    %277 = vector.shape_cast %276 : vector<8xf32> to vector<8x1xf32>
    %cst_139 = arith.constant 3.200000e+01 : f32
    %278 = vector.broadcast %cst_139 : f32 to vector<8x1xf32>
    %279 = arith.divf %277, %278 : vector<8x1xf32>
    %cst_140 = arith.constant 9.99999974E-6 : f32
    %280 = vector.broadcast %cst_140 : f32 to vector<8x1xf32>
    %281 = arith.addf %279, %280 : vector<8x1xf32>
    %282 = math.rsqrt %281 : vector<8x1xf32>
    %283 = vector.broadcast %282 : vector<8x1xf32> to vector<8x32xf32>
    %284 = arith.mulf %274, %283 : vector<8x32xf32>
    %c0_141 = arith.constant 0 : index
    %c0_142 = arith.constant 0 : index
    %c0_143 = arith.constant 0 : index
    %285 = vector.load %arg21[%c0_141, %c0_142, %c0_143] : memref<1x8x32xf32, #tpu.memory_space<vmem>>, vector<1x8x32xf32>
    %286 = vector.shape_cast %285 : vector<1x8x32xf32> to vector<8x32xf32>
    %287 = vector.shape_cast %284 : vector<8x32xf32> to vector<1x8x32xf32>
    tpu.vector_store %arg21[%c0_141, %c0_142, %c0_143], %287 {strides = array<i32>} : memref<1x8x32xf32, #tpu.memory_space<vmem>>, vector<1x8x32xf32>,
    %c0_144 = arith.constant 0 : index
    %c0_145 = arith.constant 0 : index
    %288 = vector.load %arg19[%c0_144, %c0_145] : memref<32x64xf32, #tpu.memory_space<vmem>>, vector<32x64xf32>
    %c0_146 = arith.constant 0 : index
    %c0_147 = arith.constant 0 : index
    %289 = vector.load %arg20[%c0_146, %c0_147] : memref<64x32xf32, #tpu.memory_space<vmem>>, vector<64x32xf32>
    %cst_148 = arith.constant dense<0.000000e+00> : vector<8x64xf32>
    %290 = tpu.matmul %261, %288, %cst_148 {dimension_numbers = #tpu.dot_dimension_numbers<[1], [0], [0], [1], [0, 0, 1, 1], [], []>} : vector<8x32xf32>, vector<32x64xf32>, vector<8x64xf32> -> vector<8x64xf32>
    %cst_149 = arith.constant 0.000000e+00 : f32
    %291 = vector.broadcast %cst_149 : f32 to vector<8x64xf32>
    %292 = arith.maximumf %290, %291 : vector<8x64xf32>
    %cst_150 = arith.constant dense<0.000000e+00> : vector<8x32xf32>
    %293 = tpu.matmul %292, %289, %cst_150 {dimension_numbers = #tpu.dot_dimension_numbers<[1], [0], [0], [1], [0, 0, 1, 1], [], []>} : vector<8x64xf32>, vector<64x32xf32>, vector<8x32xf32> -> vector<8x32xf32>
    %294 = arith.addf %293, %261 : vector<8x32xf32>
    %cst_151 = arith.constant dense<0.000000e+00> : vector<8xf32>
    %295 = vector.multi_reduction <add>, %294, %cst_151 [1] : vector<8x32xf32> to vector<8xf32>
    %296 = vector.shape_cast %295 : vector<8xf32> to vector<8x1xf32>
    %cst_152 = arith.constant 3.200000e+01 : f32
    %297 = vector.broadcast %cst_152 : f32 to vector<8x1xf32>
    %298 = arith.divf %296, %297 : vector<8x1xf32>
    %299 = vector.broadcast %298 : vector<8x1xf32> to vector<8x32xf32>
    %300 = arith.subf %294, %299 : vector<8x32xf32>
    %301 = arith.mulf %300, %300 : vector<8x32xf32>
    %cst_153 = arith.constant dense<0.000000e+00> : vector<8xf32>
    %302 = vector.multi_reduction <add>, %301, %cst_153 [1] : vector<8x32xf32> to vector<8xf32>
    %303 = vector.shape_cast %302 : vector<8xf32> to vector<8x1xf32>
    %cst_154 = arith.constant 3.200000e+01 : f32
    %304 = vector.broadcast %cst_154 : f32 to vector<8x1xf32>
    %305 = arith.divf %303, %304 : vector<8x1xf32>
    %cst_155 = arith.constant 9.99999974E-6 : f32
    %306 = vector.broadcast %cst_155 : f32 to vector<8x1xf32>
    %307 = arith.addf %305, %306 : vector<8x1xf32>
    %308 = math.rsqrt %307 : vector<8x1xf32>
    %309 = vector.broadcast %308 : vector<8x1xf32> to vector<8x32xf32>
    %310 = arith.mulf %300, %309 : vector<8x32xf32>
    %c0_156 = arith.constant 0 : index
    %c0_157 = arith.constant 0 : index
    %c0_158 = arith.constant 0 : index
    %311 = vector.load %arg22[%c0_156, %c0_157, %c0_158] : memref<1x8x32xf32, #tpu.memory_space<vmem>>, vector<1x8x32xf32>
    %312 = vector.shape_cast %311 : vector<1x8x32xf32> to vector<8x32xf32>
    %313 = vector.shape_cast %310 : vector<8x32xf32> to vector<1x8x32xf32>
    tpu.vector_store %arg22[%c0_156, %c0_157, %c0_158], %313 {strides = array<i32>} : memref<1x8x32xf32, #tpu.memory_space<vmem>>, vector<1x8x32xf32>,
    return
  }
  func.func @transform_0(%arg0: i32) -> (i32, i32, i32) {
    %c0_i32 = arith.constant 0 : i32
    %c0_i32_0 = arith.constant 0 : i32
    %c0_i32_1 = arith.constant 0 : i32
    return %arg0, %c0_i32, %c0_i32_0 : i32, i32, i32
  }
  func.func @transform_1(%arg0: i32) -> (i32, i32, i32) {
    %c0_i32 = arith.constant 0 : i32
    %c0_i32_0 = arith.constant 0 : i32
    %c0_i32_1 = arith.constant 0 : i32
    return %arg0, %c0_i32, %c0_i32_0 : i32, i32, i32
  }
  func.func @transform_2(%arg0: i32) -> (i32, i32) {
    %c0_i32 = arith.constant 0 : i32
    %c0_i32_0 = arith.constant 0 : i32
    %c0_i32_1 = arith.constant 0 : i32
    return %c0_i32, %c0_i32_0 : i32, i32
  }
  func.func @transform_3(%arg0: i32) -> (i32, i32) {
    %c0_i32 = arith.constant 0 : i32
    %c0_i32_0 = arith.constant 0 : i32
    %c0_i32_1 = arith.constant 0 : i32
    return %c0_i32, %c0_i32_0 : i32, i32
  }
  func.func @transform_4(%arg0: i32) -> (i32, i32) {
    %c0_i32 = arith.constant 0 : i32
    %c0_i32_0 = arith.constant 0 : i32
    %c0_i32_1 = arith.constant 0 : i32
    return %c0_i32, %c0_i32_0 : i32, i32
  }
  func.func @transform_5(%arg0: i32) -> (i32, i32) {
    %c0_i32 = arith.constant 0 : i32
    %c0_i32_0 = arith.constant 0 : i32
    %c0_i32_1 = arith.constant 0 : i32
    return %c0_i32, %c0_i32_0 : i32, i32
  }
  func.func @transform_6(%arg0: i32) -> (i32, i32) {
    %c0_i32 = arith.constant 0 : i32
    %c0_i32_0 = arith.constant 0 : i32
    %c0_i32_1 = arith.constant 0 : i32
    return %c0_i32, %c0_i32_0 : i32, i32
  }
  func.func @transform_7(%arg0: i32) -> (i32, i32) {
    %c0_i32 = arith.constant 0 : i32
    %c0_i32_0 = arith.constant 0 : i32
    %c0_i32_1 = arith.constant 0 : i32
    return %c0_i32, %c0_i32_0 : i32, i32
  }
  func.func @transform_8(%arg0: i32) -> (i32, i32) {
    %c0_i32 = arith.constant 0 : i32
    %c0_i32_0 = arith.constant 0 : i32
    %c0_i32_1 = arith.constant 0 : i32
    return %c0_i32, %c0_i32_0 : i32, i32
  }
  func.func @transform_9(%arg0: i32) -> (i32, i32) {
    %c0_i32 = arith.constant 0 : i32
    %c0_i32_0 = arith.constant 0 : i32
    %c0_i32_1 = arith.constant 0 : i32
    return %c0_i32, %c0_i32_0 : i32, i32
  }
  func.func @transform_10(%arg0: i32) -> (i32, i32) {
    %c0_i32 = arith.constant 0 : i32
    %c0_i32_0 = arith.constant 0 : i32
    %c0_i32_1 = arith.constant 0 : i32
    return %c0_i32, %c0_i32_0 : i32, i32
  }
  func.func @transform_11(%arg0: i32) -> (i32, i32) {
    %c0_i32 = arith.constant 0 : i32
    %c0_i32_0 = arith.constant 0 : i32
    %c0_i32_1 = arith.constant 0 : i32
    return %c0_i32, %c0_i32_0 : i32, i32
  }
  func.func @transform_12(%arg0: i32) -> (i32, i32) {
    %c0_i32 = arith.constant 0 : i32
    %c0_i32_0 = arith.constant 0 : i32
    %c0_i32_1 = arith.constant 0 : i32
    return %c0_i32, %c0_i32_0 : i32, i32
  }
  func.func @transform_13(%arg0: i32) -> (i32, i32) {
    %c0_i32 = arith.constant 0 : i32
    %c0_i32_0 = arith.constant 0 : i32
    %c0_i32_1 = arith.constant 0 : i32
    return %c0_i32, %c0_i32_0 : i32, i32
  }
  func.func @transform_14(%arg0: i32) -> (i32, i32) {
    %c0_i32 = arith.constant 0 : i32
    %c0_i32_0 = arith.constant 0 : i32
    %c0_i32_1 = arith.constant 0 : i32
    return %c0_i32, %c0_i32_0 : i32, i32
  }
  func.func @transform_15(%arg0: i32) -> (i32, i32) {
    %c0_i32 = arith.constant 0 : i32
    %c0_i32_0 = arith.constant 0 : i32
    %c0_i32_1 = arith.constant 0 : i32
    return %c0_i32, %c0_i32_0 : i32, i32
  }
  func.func @transform_16(%arg0: i32) -> (i32, i32) {
    %c0_i32 = arith.constant 0 : i32
    %c0_i32_0 = arith.constant 0 : i32
    %c0_i32_1 = arith.constant 0 : i32
    return %c0_i32, %c0_i32_0 : i32, i32
  }
  func.func @transform_17(%arg0: i32) -> (i32, i32) {
    %c0_i32 = arith.constant 0 : i32
    %c0_i32_0 = arith.constant 0 : i32
    %c0_i32_1 = arith.constant 0 : i32
    return %c0_i32, %c0_i32_0 : i32, i32
  }
  func.func @transform_18(%arg0: i32) -> (i32, i32) {
    %c0_i32 = arith.constant 0 : i32
    %c0_i32_0 = arith.constant 0 : i32
    %c0_i32_1 = arith.constant 0 : i32
    return %c0_i32, %c0_i32_0 : i32, i32
  }
  func.func @transform_19(%arg0: i32) -> (i32, i32) {
    %c0_i32 = arith.constant 0 : i32
    %c0_i32_0 = arith.constant 0 : i32
    %c0_i32_1 = arith.constant 0 : i32
    return %c0_i32, %c0_i32_0 : i32, i32
  }
  func.func @transform_20(%arg0: i32) -> (i32, i32, i32) {
    %c0_i32 = arith.constant 0 : i32
    %c0_i32_0 = arith.constant 0 : i32
    %c0_i32_1 = arith.constant 0 : i32
    return %arg0, %c0_i32, %c0_i32_0 : i32, i32, i32
  }
  func.func @transform_21(%arg0: i32) -> (i32, i32, i32) {
    %c0_i32 = arith.constant 0 : i32
    %c0_i32_0 = arith.constant 0 : i32
    %c0_i32_1 = arith.constant 0 : i32
    return %arg0, %c0_i32, %c0_i32_0 : i32, i32, i32
  }
  func.func @transform_22(%arg0: i32) -> (i32, i32, i32, i32) {
    %c0_i32 = arith.constant 0 : i32
    %c0_i32_0 = arith.constant 0 : i32
    %c0_i32_1 = arith.constant 0 : i32
    %c0_i32_2 = arith.constant 0 : i32
    return %arg0, %c0_i32, %c0_i32_0, %c0_i32_1 : i32, i32, i32, i32
  }
}

</mosaic_0001>

<llo_original>
// kernel: encoder_layer.1
$region0: #{encoder_layer.1}
  #allocation0 [shape = 'u32[]', space=smem, size = 0x4, offset = 0x4, fixed_abs, tag = 'smem constant byte address 0x4 - core index']
  #allocation1 [shape = 'u32[144,128]{1,0:T(1,128)}', space=vmem, size = 0x12000, scoped, tag = 'internal scratch']
  %s0 = inlined_call_operand.hbm [shape: f32[2,8,32], index: 0, kind: input, shape index: {}]
  %s1 = inlined_call_operand.hbm [shape: f32[2,8,32], index: 1, kind: input, shape index: {}]
  %s2 = inlined_call_operand.vmem [shape: f32[32,32], index: 2, kind: input, shape index: {}]
  %s3 = inlined_call_operand.vmem [shape: f32[32,32], index: 3, kind: input, shape index: {}]
  %s4 = inlined_call_operand.vmem [shape: f32[32,32], index: 4, kind: input, shape index: {}]
  %s5 = inlined_call_operand.vmem [shape: f32[32,32], index: 5, kind: input, shape index: {}]
  %s6 = inlined_call_operand.vmem [shape: f32[32,64], index: 6, kind: input, shape index: {}]
  %s7 = inlined_call_operand.vmem [shape: f32[64,32], index: 7, kind: input, shape index: {}]
  %s8 = inlined_call_operand.vmem [shape: f32[32,64], index: 8, kind: input, shape index: {}]
  %s9 = inlined_call_operand.vmem [shape: f32[64,32], index: 9, kind: input, shape index: {}]
  %s10 = inlined_call_operand.vmem [shape: f32[32,32], index: 10, kind: input, shape index: {}]
  %s11 = inlined_call_operand.vmem [shape: f32[32,32], index: 11, kind: input, shape index: {}]
  %s12 = inlined_call_operand.vmem [shape: f32[32,32], index: 12, kind: input, shape index: {}]
  %s13 = inlined_call_operand.hbm [shape: f32[32,32], index: 13, kind: input, shape index: {}]
  %s14 = inlined_call_operand.hbm [shape: f32[32,32], index: 14, kind: input, shape index: {}]
  %s15 = inlined_call_operand.hbm [shape: f32[32,32], index: 15, kind: input, shape index: {}]
  %s16 = inlined_call_operand.hbm [shape: f32[32,64], index: 16, kind: input, shape index: {}]
  %s17 = inlined_call_operand.vmem [shape: f32[64,32], index: 17, kind: input, shape index: {}]
  %s18 = inlined_call_operand.hbm [shape: f32[32,64], index: 18, kind: input, shape index: {}]
  %s19 = inlined_call_operand.vmem [shape: f32[64,32], index: 19, kind: input, shape index: {}]
  %s20 = inlined_call_operand.hbm [shape: f32[2,8,32], index: 20, kind: output, shape index: {0}]
  %s21 = inlined_call_operand.hbm [shape: f32[2,8,32], index: 21, kind: output, shape index: {1}]
  %s22 = inlined_call_operand.hbm [shape: f32[2,2,8,8], index: 22, kind: output, shape index: {2}]
  %23 = xla_tuple %s20, %s21, %s22
  %s24 = sld [smem:[#allocation0]]
  $region157: #{encoder_layer.1} parent=0
    _
  %s26 = ssub.s32 1, %s24
  %s27 = scalar_select 0, %s26, %s24
  $region1: #{encoder_layer.1} parent=0
    #allocation2 [shape = 'u8[8192]{0}', space=vmem, size = 0x2000, scoped, tag = 'input window, operand 0']
    #allocation3 [shape = 's32[2]{0}', space=sflag, size = 0x8, scoped, tag = 'scoped memory for encoder_layer.1']
    #allocation4 [shape = 's32[2]{0}', space=sflag, size = 0x8, scoped, tag = 'scoped memory for encoder_layer.1']
    #allocation5 [shape = 'u8[8192]{0}', space=vmem, size = 0x2000, scoped, tag = 'input window, operand 1']
    #allocation6 [shape = 's32[2]{0}', space=sflag, size = 0x8, scoped, tag = 'scoped memory for encoder_layer.1']
    #allocation7 [shape = 'u8[16384]{0}', space=vmem, size = 0x4000, scoped, tag = 'input window, operand 13, single buffered']
    #allocation8 [shape = 'u8[16384]{0}', space=vmem, size = 0x4000, scoped, tag = 'input window, operand 14, single buffered']
    #allocation9 [shape = 's32[1]{0}', space=sflag, size = 0x4, scoped, tag = 'scoped memory for encoder_layer.1']
    #allocation10 [shape = 'u8[16384]{0}', space=vmem, size = 0x4000, scoped, tag = 'input window, operand 15, single buffered']
    #allocation11 [shape = 'u8[16384]{0}', space=vmem, size = 0x4000, scoped, tag = 'input window, operand 16, single buffered']
    #allocation12 [shape = 's32[1]{0}', space=sflag, size = 0x4, scoped, tag = 'scoped memory for encoder_layer.1']
    #allocation13 [shape = 'u8[16384]{0}', space=vmem, size = 0x4000, scoped, tag = 'input window, operand 18, single buffered']
    #allocation14 [shape = 'u8[8192]{0}', space=vmem, size = 0x2000, scoped, tag = 'output window, operand 0']
    #allocation15 [shape = 'u8[8192]{0}', space=vmem, size = 0x2000, scoped, tag = 'output window, operand 1']
    #allocation16 [shape = 's32[2]{0}', space=sflag, size = 0x8, scoped, tag = 'scoped memory for encoder_layer.1']
    #allocation17 [shape = 'u8[16384]{0}', space=vmem, size = 0x4000, scoped, tag = 'output window, operand 2']
    %28 = vsyncpa [#allocation3], 0
    %s29 = scalar_lea.sflag [#allocation3], 1
    %30 = vsyncpa %s29, 0
    %31 = vsyncpa [#allocation6], 0
    %s32 = scalar_lea.sflag [#allocation6], 1
    %33 = vsyncpa %s32, 0
    %34 = vsyncpa [#allocation9], 0
    %35 = vsyncpa [#allocation12], 0
    %36 = vsyncpa [#allocation4], 0
    %s37 = scalar_lea.sflag [#allocation4], 1
    %38 = vsyncpa %s37, 0
    %39 = vsyncpa [#allocation16], 0
    %s40 = scalar_lea.sflag [#allocation16], 1
    %41 = vsyncpa %s40, 0
    loop: start=0, step=1, limit=4
    $region2: #{encoder_layer.1} parent=1 // loop_pre_header
      _
    $region3: #{encoder_layer.1} parent=1 // loop_header
      %s43 = sphi 0, %s47
      %p44 = scmp.ge.s32.totalorder %s43, 4
      %s53 = sphi 0, %s55
      %s56 = sphi 0, %s53
      %s57 = sphi 0, %s56
      %s73 = sphi 0, %s57
      %s79 = sphi 0, %s81
      %s82 = sphi 0, %s79
      %s83 = sphi 0, %s82
      %s99 = sphi 0, %s83
      %s103 = sphi 0, %s103
      %s105 = sphi 0, %s103
      %s106 = sphi 0, %s105
      %s120 = sphi 0, %s106
      %s124 = sphi 0, %s124
      %s126 = sphi 0, %s124
      %s127 = sphi 0, %s126
      %s141 = sphi 0, %s127
      %s145 = sphi 0, %s145
      %s147 = sphi 0, %s145
      %s148 = sphi 0, %s147
      %s162 = sphi 0, %s148
      %s166 = sphi 0, %s166
      %s168 = sphi 0, %s166
      %s169 = sphi 0, %s168
      %s183 = sphi 0, %s169
      %s187 = sphi 0, %s187
      %s189 = sphi 0, %s187
      %s190 = sphi 0, %s189
      %s204 = sphi 0, %s190
      %s208 = sphi 0, %s208
      %s210 = sphi 0, %s208
      %s211 = sphi 0, %s210
      %s225 = sphi 0, %s211
      %s229 = sphi 0, %s229
      %s231 = sphi 0, %s229
      %s232 = sphi 0, %s231
      %s246 = sphi 0, %s232
      %s250 = sphi 0, %s250
      %s252 = sphi 0, %s250
      %s253 = sphi 0, %s252
      %s267 = sphi 0, %s253
      %s271 = sphi 0, %s271
      %s273 = sphi 0, %s271
      %s274 = sphi 0, %s273
      %s288 = sphi 0, %s274
      %s292 = sphi 0, %s292
      %s294 = sphi 0, %s292
      %s295 = sphi 0, %s294
      %s309 = sphi 0, %s295
      %s313 = sphi 0, %s313
      %s315 = sphi 0, %s313
      %s316 = sphi 0, %s315
      %s330 = sphi 0, %s316
      %s334 = sphi 0, %s334
      %s336 = sphi 0, %s334
      %s337 = sphi 0, %s336
      %s351 = sphi 0, %s337
      %s355 = sphi 0, %s355
      %s357 = sphi 0, %s355
      %s358 = sphi 0, %s357
      %s372 = sphi 0, %s358
      %s376 = sphi 0, %s376
      %s378 = sphi 0, %s376
      %s379 = sphi 0, %s378
      %s393 = sphi 0, %s379
      %s397 = sphi 0, %s397
      %s399 = sphi 0, %s397
      %s400 = sphi 0, %s399
      %s414 = sphi 0, %s400
      %s418 = sphi 0, %s418
      %s420 = sphi 0, %s418
      %s421 = sphi 0, %s420
      %s435 = sphi 0, %s421
      %s439 = sphi 0, %s439
      %s441 = sphi 0, %s439
      %s442 = sphi 0, %s441
      %s456 = sphi 0, %s442
      %s460 = sphi 0, %s460
      %s462 = sphi 0, %s460
      %s463 = sphi 0, %s462
      %s477 = sphi 0, %s463
      %s483 = sphi 0, %s485
      %s486 = sphi 0, %s483
      %s487 = sphi 0, %s486
      %s503 = sphi 0, %s487
      %s509 = sphi 0, %s511
      %s512 = sphi 0, %s509
      %s513 = sphi 0, %s512
      %s529 = sphi 0, %s513
      %s535 = sphi 0, %s537
      %s538 = sphi 0, %s535
      %s539 = sphi 0, %s538
      %s555 = sphi 0, %s539
    $region4: #{encoder_layer.1} parent=1 // loop_header_branch
      %46 = sbr.rel (%p44) target = $region8
    $region5: #{encoder_layer.1} parent=1 // loop_body
      %s48 = ssub.s32 %s43, 1
      %s49 = ssub.s32 %s43, 2
      %s50 = sadd.s32 %s43, 1
      %s51 = ssub.s32 %s43, %s50
      %p52 = scmp.eq.s32.totalorder %s51, 0
      %s54 = sadd.s32 %s53, 1
      %s55 = scalar_select %p52, %s53, %s54
      %p58 = pneg %p52
      %p59 = scmp.eq.s32.totalorder %s43, 1
      %p60 = por %p58, %p59
      %p61 = scmp.ne.s32.totalorder %s53, %s56
      %p62 = scmp.eq.s32.totalorder %s43, 0
      %p63 = por %p61, %p62
      %p64 = scmp.ne.s32.totalorder %s53, %s56
      %p65 = scmp.eq.s32.totalorder %s48, 1
      %p66 = por %p64, %p65
      %p67 = scmp.ne.s32.totalorder %s56, %s57
      %p68 = scmp.eq.s32.totalorder %s48, 0
      %p69 = por %p67, %p68
      %p70 = scmp.ne.s32.totalorder %s56, %s57
      %p71 = scmp.eq.s32.totalorder %s49, 1
      %p72 = por %p70, %p71
      %p74 = scmp.ne.s32.totalorder %s57, %s73
      %p75 = scmp.eq.s32.totalorder %s49, 0
      %p76 = por %p74, %p75
      %s77 = ssub.s32 %s43, %s50
      %p78 = scmp.eq.s32.totalorder %s77, 0
      %s80 = sadd.s32 %s79, 1
      %s81 = scalar_select %p78, %s79, %s80
      %p84 = pneg %p78
      %p85 = scmp.eq.s32.totalorder %s43, 1
      %p86 = por %p84, %p85
      %p87 = scmp.ne.s32.totalorder %s79, %s82
      %p88 = scmp.eq.s32.totalorder %s43, 0
      %p89 = por %p87, %p88
      %p90 = scmp.ne.s32.totalorder %s79, %s82
      %p91 = scmp.eq.s32.totalorder %s48, 1
      %p92 = por %p90, %p91
      %p93 = scmp.ne.s32.totalorder %s82, %s83
      %p94 = scmp.eq.s32.totalorder %s48, 0
      %p95 = por %p93, %p94
      %p96 = scmp.ne.s32.totalorder %s82, %s83
      %p97 = scmp.eq.s32.totalorder %s49, 1
      %p98 = por %p96, %p97
      %p100 = scmp.ne.s32.totalorder %s83, %s99
      %p101 = scmp.eq.s32.totalorder %s49, 0
      %p102 = por %p100, %p101
      %s104 = sadd.s32 %s103, 1
      %p107 = scmp.eq.s32.totalorder %s43, 1
      %p108 = scmp.ne.s32.totalorder %s103, %s105
      %p109 = scmp.eq.s32.totalorder %s43, 0
      %p110 = por %p108, %p109
      %p111 = scmp.ne.s32.totalorder %s103, %s105
      %p112 = scmp.eq.s32.totalorder %s48, 1
      %p113 = por %p111, %p112
      %p114 = scmp.ne.s32.totalorder %s105, %s106
      %p115 = scmp.eq.s32.totalorder %s48, 0
      %p116 = por %p114, %p115
      %p117 = scmp.ne.s32.totalorder %s105, %s106
      %p118 = scmp.eq.s32.totalorder %s49, 1
      %p119 = por %p117, %p118
      %p121 = scmp.ne.s32.totalorder %s106, %s120
      %p122 = scmp.eq.s32.totalorder %s49, 0
      %p123 = por %p121, %p122
      %s125 = sadd.s32 %s124, 1
      %p128 = scmp.eq.s32.totalorder %s43, 1
      %p129 = scmp.ne.s32.totalorder %s124, %s126
      %p130 = scmp.eq.s32.totalorder %s43, 0
      %p131 = por %p129, %p130
      %p132 = scmp.ne.s32.totalorder %s124, %s126
      %p133 = scmp.eq.s32.totalorder %s48, 1
      %p134 = por %p132, %p133
      %p135 = scmp.ne.s32.totalorder %s126, %s127
      %p136 = scmp.eq.s32.totalorder %s48, 0
      %p137 = por %p135, %p136
      %p138 = scmp.ne.s32.totalorder %s126, %s127
      %p139 = scmp.eq.s32.totalorder %s49, 1
      %p140 = por %p138, %p139
      %p142 = scmp.ne.s32.totalorder %s127, %s141
      %p143 = scmp.eq.s32.totalorder %s49, 0
      %p144 = por %p142, %p143
      %s146 = sadd.s32 %s145, 1
      %p149 = scmp.eq.s32.totalorder %s43, 1
      %p150 = scmp.ne.s32.totalorder %s145, %s147
      %p151 = scmp.eq.s32.totalorder %s43, 0
      %p152 = por %p150, %p151
      %p153 = scmp.ne.s32.totalorder %s145, %s147
      %p154 = scmp.eq.s32.totalorder %s48, 1
      %p155 = por %p153, %p154
      %p156 = scmp.ne.s32.totalorder %s147, %s148
      %p157 = scmp.eq.s32.totalorder %s48, 0
      %p158 = por %p156, %p157
      %p159 = scmp.ne.s32.totalorder %s147, %s148
      %p160 = scmp.eq.s32.totalorder %s49, 1
      %p161 = por %p159, %p160
      %p163 = scmp.ne.s32.totalorder %s148, %s162
      %p164 = scmp.eq.s32.totalorder %s49, 0
      %p165 = por %p163, %p164
      %s167 = sadd.s32 %s166, 1
      %p170 = scmp.eq.s32.totalorder %s43, 1
      %p171 = scmp.ne.s32.totalorder %s166, %s168
      %p172 = scmp.eq.s32.totalorder %s43, 0
      %p173 = por %p171, %p172
      %p174 = scmp.ne.s32.totalorder %s166, %s168
      %p175 = scmp.eq.s32.totalorder %s48, 1
      %p176 = por %p174, %p175
      %p177 = scmp.ne.s32.totalorder %s168, %s169
      %p178 = scmp.eq.s32.totalorder %s48, 0
      %p179 = por %p177, %p178
      %p180 = scmp.ne.s32.totalorder %s168, %s169
      %p181 = scmp.eq.s32.totalorder %s49, 1
      %p182 = por %p180, %p181
      %p184 = scmp.ne.s32.totalorder %s169, %s183
      %p185 = scmp.eq.s32.totalorder %s49, 0
      %p186 = por %p184, %p185
      %s188 = sadd.s32 %s187, 1
      %p191 = scmp.eq.s32.totalorder %s43, 1
      %p192 = scmp.ne.s32.totalorder %s187, %s189
      %p193 = scmp.eq.s32.totalorder %s43, 0
      %p194 = por %p192, %p193
      %p195 = scmp.ne.s32.totalorder %s187, %s189
      %p196 = scmp.eq.s32.totalorder %s48, 1
      %p197 = por %p195, %p196
      %p198 = scmp.ne.s32.totalorder %s189, %s190
      %p199 = scmp.eq.s32.totalorder %s48, 0
      %p200 = por %p198, %p199
      %p201 = scmp.ne.s32.totalorder %s189, %s190
      %p202 = scmp.eq.s32.totalorder %s49, 1
      %p203 = por %p201, %p202
      %p205 = scmp.ne.s32.totalorder %s190, %s204
      %p206 = scmp.eq.s32.totalorder %s49, 0
      %p207 = por %p205, %p206
      %s209 = sadd.s32 %s208, 1
      %p212 = scmp.eq.s32.totalorder %s43, 1
      %p213 = scmp.ne.s32.totalorder %s208, %s210
      %p214 = scmp.eq.s32.totalorder %s43, 0
      %p215 = por %p213, %p214
      %p216 = scmp.ne.s32.totalorder %s208, %s210
      %p217 = scmp.eq.s32.totalorder %s48, 1
      %p218 = por %p216, %p217
      %p219 = scmp.ne.s32.totalorder %s210, %s211
      %p220 = scmp.eq.s32.totalorder %s48, 0
      %p221 = por %p219, %p220
      %p222 = scmp.ne.s32.totalorder %s210, %s211
      %p223 = scmp.eq.s32.totalorder %s49, 1
      %p224 = por %p222, %p223
      %p226 = scmp.ne.s32.totalorder %s211, %s225
      %p227 = scmp.eq.s32.totalorder %s49, 0
      %p228 = por %p226, %p227
      %s230 = sadd.s32 %s229, 1
      %p233 = scmp.eq.s32.totalorder %s43, 1
      %p234 = scmp.ne.s32.totalorder %s229, %s231
      %p235 = scmp.eq.s32.totalorder %s43, 0
      %p236 = por %p234, %p235
      %p237 = scmp.ne.s32.totalorder %s229, %s231
      %p238 = scmp.eq.s32.totalorder %s48, 1
      %p239 = por %p237, %p238
      %p240 = scmp.ne.s32.totalorder %s231, %s232
      %p241 = scmp.eq.s32.totalorder %s48, 0
      %p242 = por %p240, %p241
      %p243 = scmp.ne.s32.totalorder %s231, %s232
      %p244 = scmp.eq.s32.totalorder %s49, 1
      %p245 = por %p243, %p244
      %p247 = scmp.ne.s32.totalorder %s232, %s246
      %p248 = scmp.eq.s32.totalorder %s49, 0
      %p249 = por %p247, %p248
      %s251 = sadd.s32 %s250, 1
      %p254 = scmp.eq.s32.totalorder %s43, 1
      %p255 = scmp.ne.s32.totalorder %s250, %s252
      %p256 = scmp.eq.s32.totalorder %s43, 0
      %p257 = por %p255, %p256
      %p258 = scmp.ne.s32.totalorder %s250, %s252
      %p259 = scmp.eq.s32.totalorder %s48, 1
      %p260 = por %p258, %p259
      %p261 = scmp.ne.s32.totalorder %s252, %s253
      %p262 = scmp.eq.s32.totalorder %s48, 0
      %p263 = por %p261, %p262
      %p264 = scmp.ne.s32.totalorder %s252, %s253
      %p265 = scmp.eq.s32.totalorder %s49, 1
      %p266 = por %p264, %p265
      %p268 = scmp.ne.s32.totalorder %s253, %s267
      %p269 = scmp.eq.s32.totalorder %s49, 0
      %p270 = por %p268, %p269
      %s272 = sadd.s32 %s271, 1
      %p275 = scmp.eq.s32.totalorder %s43, 1
      %p276 = scmp.ne.s32.totalorder %s271, %s273
      %p277 = scmp.eq.s32.totalorder %s43, 0
      %p278 = por %p276, %p277
      %p279 = scmp.ne.s32.totalorder %s271, %s273
      %p280 = scmp.eq.s32.totalorder %s48, 1
      %p281 = por %p279, %p280
      %p282 = scmp.ne.s32.totalorder %s273, %s274
      %p283 = scmp.eq.s32.totalorder %s48, 0
      %p284 = por %p282, %p283
      %p285 = scmp.ne.s32.totalorder %s273, %s274
      %p286 = scmp.eq.s32.totalorder %s49, 1
      %p287 = por %p285, %p286
      %p289 = scmp.ne.s32.totalorder %s274, %s288
      %p290 = scmp.eq.s32.totalorder %s49, 0
      %p291 = por %p289, %p290
      %s293 = sadd.s32 %s292, 1
      %p296 = scmp.eq.s32.totalorder %s43, 1
      %p297 = scmp.ne.s32.totalorder %s292, %s294
      %p298 = scmp.eq.s32.totalorder %s43, 0
      %p299 = por %p297, %p298
      %p300 = scmp.ne.s32.totalorder %s292, %s294
      %p301 = scmp.eq.s32.totalorder %s48, 1
      %p302 = por %p300, %p301
      %p303 = scmp.ne.s32.totalorder %s294, %s295
      %p304 = scmp.eq.s32.totalorder %s48, 0
      %p305 = por %p303, %p304
      %p306 = scmp.ne.s32.totalorder %s294, %s295
      %p307 = scmp.eq.s32.totalorder %s49, 1
      %p308 = por %p306, %p307
      %p310 = scmp.ne.s32.totalorder %s295, %s309
      %p311 = scmp.eq.s32.totalorder %s49, 0
      %p312 = por %p310, %p311
      %s314 = sadd.s32 %s313, 1
      %p317 = scmp.eq.s32.totalorder %s43, 1
      %p318 = scmp.ne.s32.totalorder %s313, %s315
      %p319 = scmp.eq.s32.totalorder %s43, 0
      %p320 = por %p318, %p319
      %p321 = scmp.ne.s32.totalorder %s313, %s315
      %p322 = scmp.eq.s32.totalorder %s48, 1
      %p323 = por %p321, %p322
      %p324 = scmp.ne.s32.totalorder %s315, %s316
      %p325 = scmp.eq.s32.totalorder %s48, 0
      %p326 = por %p324, %p325
      %p327 = scmp.ne.s32.totalorder %s315, %s316
      %p328 = scmp.eq.s32.totalorder %s49, 1
      %p329 = por %p327, %p328
      %p331 = scmp.ne.s32.totalorder %s316, %s330
      %p332 = scmp.eq.s32.totalorder %s49, 0
      %p333 = por %p331, %p332
      %s335 = sadd.s32 %s334, 1
      %p338 = scmp.eq.s32.totalorder %s43, 1
      %p339 = scmp.ne.s32.totalorder %s334, %s336
      %p340 = scmp.eq.s32.totalorder %s43, 0
      %p341 = por %p339, %p340
      %p342 = scmp.ne.s32.totalorder %s334, %s336
      %p343 = scmp.eq.s32.totalorder %s48, 1
      %p344 = por %p342, %p343
      %p345 = scmp.ne.s32.totalorder %s336, %s337
      %p346 = scmp.eq.s32.totalorder %s48, 0
      %p347 = por %p345, %p346
      %p348 = scmp.ne.s32.totalorder %s336, %s337
      %p349 = scmp.eq.s32.totalorder %s49, 1
      %p350 = por %p348, %p349
      %p352 = scmp.ne.s32.totalorder %s337, %s351
      %p353 = scmp.eq.s32.totalorder %s49, 0
      %p354 = por %p352, %p353
      %s356 = sadd.s32 %s355, 1
      %p359 = scmp.eq.s32.totalorder %s43, 1
      %p360 = scmp.ne.s32.totalorder %s355, %s357
      %p361 = scmp.eq.s32.totalorder %s43, 0
      %p362 = por %p360, %p361
      %p363 = scmp.ne.s32.totalorder %s355, %s357
      %p364 = scmp.eq.s32.totalorder %s48, 1
      %p365 = por %p363, %p364
      %p366 = scmp.ne.s32.totalorder %s357, %s358
      %p367 = scmp.eq.s32.totalorder %s48, 0
      %p368 = por %p366, %p367
      %p369 = scmp.ne.s32.totalorder %s357, %s358
      %p370 = scmp.eq.s32.totalorder %s49, 1
      %p371 = por %p369, %p370
      %p373 = scmp.ne.s32.totalorder %s358, %s372
      %p374 = scmp.eq.s32.totalorder %s49, 0
      %p375 = por %p373, %p374
      %s377 = sadd.s32 %s376, 1
      %p380 = scmp.eq.s32.totalorder %s43, 1
      %p381 = scmp.ne.s32.totalorder %s376, %s378
      %p382 = scmp.eq.s32.totalorder %s43, 0
      %p383 = por %p381, %p382
      %p384 = scmp.ne.s32.totalorder %s376, %s378
      %p385 = scmp.eq.s32.totalorder %s48, 1
      %p386 = por %p384, %p385
      %p387 = scmp.ne.s32.totalorder %s378, %s379
      %p388 = scmp.eq.s32.totalorder %s48, 0
      %p389 = por %p387, %p388
      %p390 = scmp.ne.s32.totalorder %s378, %s379
      %p391 = scmp.eq.s32.totalorder %s49, 1
      %p392 = por %p390, %p391
      %p394 = scmp.ne.s32.totalorder %s379, %s393
      %p395 = scmp.eq.s32.totalorder %s49, 0
      %p396 = por %p394, %p395
      %s398 = sadd.s32 %s397, 1
      %p401 = scmp.eq.s32.totalorder %s43, 1
      %p402 = scmp.ne.s32.totalorder %s397, %s399
      %p403 = scmp.eq.s32.totalorder %s43, 0
      %p404 = por %p402, %p403
      %p405 = scmp.ne.s32.totalorder %s397, %s399
      %p406 = scmp.eq.s32.totalorder %s48, 1
      %p407 = por %p405, %p406
      %p408 = scmp.ne.s32.totalorder %s399, %s400
      %p409 = scmp.eq.s32.totalorder %s48, 0
      %p410 = por %p408, %p409
      %p411 = scmp.ne.s32.totalorder %s399, %s400
      %p412 = scmp.eq.s32.totalorder %s49, 1
      %p413 = por %p411, %p412
      %p415 = scmp.ne.s32.totalorder %s400, %s414
      %p416 = scmp.eq.s32.totalorder %s49, 0
      %p417 = por %p415, %p416
      %s419 = sadd.s32 %s418, 1
      %p422 = scmp.eq.s32.totalorder %s43, 1
      %p423 = scmp.ne.s32.totalorder %s418, %s420
      %p424 = scmp.eq.s32.totalorder %s43, 0
      %p425 = por %p423, %p424
      %p426 = scmp.ne.s32.totalorder %s418, %s420
      %p427 = scmp.eq.s32.totalorder %s48, 1
      %p428 = por %p426, %p427
      %p429 = scmp.ne.s32.totalorder %s420, %s421
      %p430 = scmp.eq.s32.totalorder %s48, 0
      %p431 = por %p429, %p430
      %p432 = scmp.ne.s32.totalorder %s420, %s421
      %p433 = scmp.eq.s32.totalorder %s49, 1
      %p434 = por %p432, %p433
      %p436 = scmp.ne.s32.totalorder %s421, %s435
      %p437 = scmp.eq.s32.totalorder %s49, 0
      %p438 = por %p436, %p437
      %s440 = sadd.s32 %s439, 1
      %p443 = scmp.eq.s32.totalorder %s43, 1
      %p444 = scmp.ne.s32.totalorder %s439, %s441
      %p445 = scmp.eq.s32.totalorder %s43, 0
      %p446 = por %p444, %p445
      %p447 = scmp.ne.s32.totalorder %s439, %s441
      %p448 = scmp.eq.s32.totalorder %s48, 1
      %p449 = por %p447, %p448
      %p450 = scmp.ne.s32.totalorder %s441, %s442
      %p451 = scmp.eq.s32.totalorder %s48, 0
      %p452 = por %p450, %p451
      %p453 = scmp.ne.s32.totalorder %s441, %s442
      %p454 = scmp.eq.s32.totalorder %s49, 1
      %p455 = por %p453, %p454
      %p457 = scmp.ne.s32.totalorder %s442, %s456
      %p458 = scmp.eq.s32.totalorder %s49, 0
      %p459 = por %p457, %p458
      %s461 = sadd.s32 %s460, 1
      %p464 = scmp.eq.s32.totalorder %s43, 1
      %p465 = scmp.ne.s32.totalorder %s460, %s462
      %p466 = scmp.eq.s32.totalorder %s43, 0
      %p467 = por %p465, %p466
      %p468 = scmp.ne.s32.totalorder %s460, %s462
      %p469 = scmp.eq.s32.totalorder %s48, 1
      %p470 = por %p468, %p469
      %p471 = scmp.ne.s32.totalorder %s462, %s463
      %p472 = scmp.eq.s32.totalorder %s48, 0
      %p473 = por %p471, %p472
      %p474 = scmp.ne.s32.totalorder %s462, %s463
      %p475 = scmp.eq.s32.totalorder %s49, 1
      %p476 = por %p474, %p475
      %p478 = scmp.ne.s32.totalorder %s463, %s477
      %p479 = scmp.eq.s32.totalorder %s49, 0
      %p480 = por %p478, %p479
      %s481 = ssub.s32 %s43, %s50
      %p482 = scmp.eq.s32.totalorder %s481, 0
      %s484 = sadd.s32 %s483, 1
      %s485 = scalar_select %p482, %s483, %s484
      %p488 = pneg %p482
      %p489 = scmp.eq.s32.totalorder %s43, 1
      %p490 = por %p488, %p489
      %p491 = scmp.ne.s32.totalorder %s483, %s486
      %p492 = scmp.eq.s32.totalorder %s43, 0
      %p493 = por %p491, %p492
      %p494 = scmp.ne.s32.totalorder %s483, %s486
      %p495 = scmp.eq.s32.totalorder %s48, 1
      %p496 = por %p494, %p495
      %p497 = scmp.ne.s32.totalorder %s486, %s487
      %p498 = scmp.eq.s32.totalorder %s48, 0
      %p499 = por %p497, %p498
      %p500 = scmp.ne.s32.totalorder %s486, %s487
      %p501 = scmp.eq.s32.totalorder %s49, 1
      %p502 = por %p500, %p501
      %p504 = scmp.ne.s32.totalorder %s487, %s503
      %p505 = scmp.eq.s32.totalorder %s49, 0
      %p506 = por %p504, %p505
      %s507 = ssub.s32 %s43, %s50
      %p508 = scmp.eq.s32.totalorder %s507, 0
      %s510 = sadd.s32 %s509, 1
      %s511 = scalar_select %p508, %s509, %s510
      %p514 = pneg %p508
      %p515 = scmp.eq.s32.totalorder %s43, 1
      %p516 = por %p514, %p515
      %p517 = scmp.ne.s32.totalorder %s509, %s512
      %p518 = scmp.eq.s32.totalorder %s43, 0
      %p519 = por %p517, %p518
      %p520 = scmp.ne.s32.totalorder %s509, %s512
      %p521 = scmp.eq.s32.totalorder %s48, 1
      %p522 = por %p520, %p521
      %p523 = scmp.ne.s32.totalorder %s512, %s513
      %p524 = scmp.eq.s32.totalorder %s48, 0
      %p525 = por %p523, %p524
      %p526 = scmp.ne.s32.totalorder %s512, %s513
      %p527 = scmp.eq.s32.totalorder %s49, 1
      %p528 = por %p526, %p527
      %p530 = scmp.ne.s32.totalorder %s513, %s529
      %p531 = scmp.eq.s32.totalorder %s49, 0
      %p532 = por %p530, %p531
      %s533 = ssub.s32 %s43, %s50
      %p534 = scmp.eq.s32.totalorder %s533, 0
      %s536 = sadd.s32 %s535, 1
      %s537 = scalar_select %p534, %s535, %s536
      %p540 = pneg %p534
      %p541 = scmp.eq.s32.totalorder %s43, 1
      %p542 = por %p540, %p541
      %p543 = scmp.ne.s32.totalorder %s535, %s538
      %p544 = scmp.eq.s32.totalorder %s43, 0
      %p545 = por %p543, %p544
      %p546 = scmp.ne.s32.totalorder %s535, %s538
      %p547 = scmp.eq.s32.totalorder %s48, 1
      %p548 = por %p546, %p547
      %p549 = scmp.ne.s32.totalorder %s538, %s539
      %p550 = scmp.eq.s32.totalorder %s48, 0
      %p551 = por %p549, %p550
      %p552 = scmp.ne.s32.totalorder %s538, %s539
      %p553 = scmp.eq.s32.totalorder %s49, 1
      %p554 = por %p552, %p553
      %p556 = scmp.ne.s32.totalorder %s539, %s555
      %p557 = scmp.eq.s32.totalorder %s49, 0
      %p558 = por %p556, %p557
      %p559 = scmp.le.s32.totalorder 1, %s43
      %p560 = scmp.lt.s32.totalorder %s43, 3
      %p561 = pnand %p559, %p560
      %p562 = pneg %p561
      // Predicated region
      $region9: #{encoder_layer.1} parent=5 // pred_check
        _
      $region10: #{encoder_layer.1} parent=5 // pred_check_branch
        %564 = sbr.rel (%p561) target = $region12
      $region11: #{encoder_layer.1} parent=5 // pred_region
        %s565 = ssub.s32 %s43, 1
        // Predicated region
        $region13: #{encoder_layer.1} parent=11 // pred_check
          %p566 = pneg %p116
        $region14: #{encoder_layer.1} parent=11 // pred_check_branch
          %568 = sbr.rel (%p566) target = $region16
        $region15: #{encoder_layer.1} parent=11 // pred_region
          _
        $region16: #{encoder_layer.1} parent=11 // pred_fallthru
          _
        // Predicated region
        $region17: #{encoder_layer.1} parent=11 // pred_check
          %p569 = pneg %p137
        $region18: #{encoder_layer.1} parent=11 // pred_check_branch
          %571 = sbr.rel (%p569) target = $region20
        $region19: #{encoder_layer.1} parent=11 // pred_region
          _
        $region20: #{encoder_layer.1} parent=11 // pred_fallthru
          _
        // Predicated region
        $region21: #{encoder_layer.1} parent=11 // pred_check
          %p572 = pneg %p158
        $region22: #{encoder_layer.1} parent=11 // pred_check_branch
          %574 = sbr.rel (%p572) target = $region24
        $region23: #{encoder_layer.1} parent=11 // pred_region
          _
        $region24: #{encoder_layer.1} parent=11 // pred_fallthru
          _
        // Predicated region
        $region25: #{encoder_layer.1} parent=11 // pred_check
          %p575 = pneg %p179
        $region26: #{encoder_layer.1} parent=11 // pred_check_branch
          %577 = sbr.rel (%p575) target = $region28
        $region27: #{encoder_layer.1} parent=11 // pred_region
          _
        $region28: #{encoder_layer.1} parent=11 // pred_fallthru
          _
        // Predicated region
        $region29: #{encoder_layer.1} parent=11 // pred_check
          %p578 = pneg %p200
        $region30: #{encoder_layer.1} parent=11 // pred_check_branch
          %580 = sbr.rel (%p578) target = $region32
        $region31: #{encoder_layer.1} parent=11 // pred_region
          _
        $region32: #{encoder_layer.1} parent=11 // pred_fallthru
          _
        // Predicated region
        $region33: #{encoder_layer.1} parent=11 // pred_check
          %p581 = pneg %p221
        $region34: #{encoder_layer.1} parent=11 // pred_check_branch
          %583 = sbr.rel (%p581) target = $region36
        $region35: #{encoder_layer.1} parent=11 // pred_region
          _
        $region36: #{encoder_layer.1} parent=11 // pred_fallthru
          _
        // Predicated region
        $region37: #{encoder_layer.1} parent=11 // pred_check
          %p584 = pneg %p242
        $region38: #{encoder_layer.1} parent=11 // pred_check_branch
          %586 = sbr.rel (%p584) target = $region40
        $region39: #{encoder_layer.1} parent=11 // pred_region
          _
        $region40: #{encoder_layer.1} parent=11 // pred_fallthru
          _
        // Predicated region
        $region41: #{encoder_layer.1} parent=11 // pred_check
          %p587 = pneg %p263
        $region42: #{encoder_layer.1} parent=11 // pred_check_branch
          %589 = sbr.rel (%p587) target = $region44
        $region43: #{encoder_layer.1} parent=11 // pred_region
          _
        $region44: #{encoder_layer.1} parent=11 // pred_fallthru
          _
        // Predicated region
        $region45: #{encoder_layer.1} parent=11 // pred_check
          %p590 = pneg %p284
        $region46: #{encoder_layer.1} parent=11 // pred_check_branch
          %592 = sbr.rel (%p590) target = $region48
        $region47: #{encoder_layer.1} parent=11 // pred_region
          _
        $region48: #{encoder_layer.1} parent=11 // pred_fallthru
          _
        // Predicated region
        $region49: #{encoder_layer.1} parent=11 // pred_check
          %p593 = pneg %p305
        $region50: #{encoder_layer.1} parent=11 // pred_check_branch
          %595 = sbr.rel (%p593) target = $region52
        $region51: #{encoder_layer.1} parent=11 // pred_region
          _
        $region52: #{encoder_layer.1} parent=11 // pred_fallthru
          _
        // Predicated region
        $region53: #{encoder_layer.1} parent=11 // pred_check
          %p596 = pneg %p326
        $region54: #{encoder_layer.1} parent=11 // pred_check_branch
          %598 = sbr.rel (%p596) target = $region56
        $region55: #{encoder_layer.1} parent=11 // pred_region
          _
        $region56: #{encoder_layer.1} parent=11 // pred_fallthru
          _
        // Predicated region
        $region57: #{encoder_layer.1} parent=11 // pred_check
          %p599 = pneg %p347
        $region58: #{encoder_layer.1} parent=11 // pred_check_branch
          %601 = sbr.rel (%p599) target = $region60
        $region59: #{encoder_layer.1} parent=11 // pred_region
          %s603 = ssub.s32 512, 512
          %604 = vsyncadd [#allocation6], %s603
          %s605 = sshll.u32 [#allocation7], 4
          %s606 = int_to_ptr.vmem [resolvable:$true] %s605
          %611 = dma.hbm_to_vmem [thread:$0]  %s13, 512, %s606, [#allocation6], 128, 128, 8
        $region60: #{encoder_layer.1} parent=11 // pred_fallthru
          _
        // Predicated region
        $region61: #{encoder_layer.1} parent=11 // pred_check
          %p612 = pneg %p368
        $region62: #{encoder_layer.1} parent=11 // pred_check_branch
          %614 = sbr.rel (%p612) target = $region64
        $region63: #{encoder_layer.1} parent=11 // pred_region
          %s616 = ssub.s32 512, 512
          %617 = vsyncadd [#allocation9], %s616
          %s618 = sshll.u32 [#allocation8], 4
          %s619 = int_to_ptr.vmem [resolvable:$true] %s618
          %624 = dma.hbm_to_vmem [thread:$0]  %s14, 512, %s619, [#allocation9], 128, 128, 8
        $region64: #{encoder_layer.1} parent=11 // pred_fallthru
          _
        // Predicated region
        $region65: #{encoder_layer.1} parent=11 // pred_check
          %p625 = pneg %p389
        $region66: #{encoder_layer.1} parent=11 // pred_check_branch
          %627 = sbr.rel (%p625) target = $region68
        $region67: #{encoder_layer.1} parent=11 // pred_region
          %s629 = ssub.s32 512, 512
          %630 = vsyncadd [#allocation9], %s629
          %s631 = sshll.u32 [#allocation10], 4
          %s632 = int_to_ptr.vmem [resolvable:$true] %s631
          %637 = dma.hbm_to_vmem [thread:$0]  %s15, 512, %s632, [#allocation9], 128, 128, 8
        $region68: #{encoder_layer.1} parent=11 // pred_fallthru
          _
        // Predicated region
        $region69: #{encoder_layer.1} parent=11 // pred_check
          %p638 = pneg %p410
        $region70: #{encoder_layer.1} parent=11 // pred_check_branch
          %640 = sbr.rel (%p638) target = $region72
        $region71: #{encoder_layer.1} parent=11 // pred_region
          %s642 = ssub.s32 512, 512
          %643 = vsyncadd [#allocation12], %s642
          %s644 = sshll.u32 [#allocation11], 4
          %s645 = int_to_ptr.vmem [resolvable:$true] %s644
          %650 = dma.hbm_to_vmem [thread:$0]  %s16, 512, %s645, [#allocation12], 128, 128, 8
        $region72: #{encoder_layer.1} parent=11 // pred_fallthru
          _
        // Predicated region
        $region73: #{encoder_layer.1} parent=11 // pred_check
          %p651 = pneg %p431
        $region74: #{encoder_layer.1} parent=11 // pred_check_branch
          %653 = sbr.rel (%p651) target = $region76
        $region75: #{encoder_layer.1} parent=11 // pred_region
          _
        $region76: #{encoder_layer.1} parent=11 // pred_fallthru
          _
        // Predicated region
        $region77: #{encoder_layer.1} parent=11 // pred_check
          %p654 = pneg %p452
        $region78: #{encoder_layer.1} parent=11 // pred_check_branch
          %656 = sbr.rel (%p654) target = $region80
        $region79: #{encoder_layer.1} parent=11 // pred_region
          %s658 = ssub.s32 512, 512
          %659 = vsyncadd [#allocation12], %s658
          %s660 = sshll.u32 [#allocation13], 4
          %s661 = int_to_ptr.vmem [resolvable:$true] %s660
          %666 = dma.hbm_to_vmem [thread:$0]  %s18, 512, %s661, [#allocation12], 128, 128, 8
        $region80: #{encoder_layer.1} parent=11 // pred_fallthru
          _
        // Predicated region
        $region81: #{encoder_layer.1} parent=11 // pred_check
          %p667 = pneg %p473
        $region82: #{encoder_layer.1} parent=11 // pred_check_branch
          %669 = sbr.rel (%p667) target = $region84
        $region83: #{encoder_layer.1} parent=11 // pred_region
          _
        $region84: #{encoder_layer.1} parent=11 // pred_fallthru
          _
      $region12: #{encoder_layer.1} parent=5 // pred_fallthru
        _
      %p670 = scmp.lt.s32.totalorder %s43, 2
      // Predicated region
      $region85: #{encoder_layer.1} parent=5 // pred_check
        %p671 = pneg %p670
      $region86: #{encoder_layer.1} parent=5 // pred_check_branch
        %673 = sbr.rel (%p671) target = $region88
      $region87: #{encoder_layer.1} parent=5 // pred_region
        // Predicated region
        $region89: #{encoder_layer.1} parent=87 // pred_check
          %p674 = pneg %p63
        $region90: #{encoder_layer.1} parent=87 // pred_check_branch
          %676 = sbr.rel (%p674) target = $region92
        $region91: #{encoder_layer.1} parent=87 // pred_region
          %s677 = sand.u32 %s53, 1
          %s678 = scalar_lea.sflag [#allocation3], %s677
          %s679 = sand.u32 %s53, 1
          %s680 = smul.addr %s679, 8
          %s681 = scalar_lea.vmem [#allocation2], %s680
          %s683 = ssub.s32 128, 128
          %684 = vsyncadd %s678, %s683
          %s685 = smul.addr %s43, 128
          %s686 = scalar_lea.hbm %s0, %s685
          %s688 = sshll.u32 %s681, 4
          %s689 = int_to_ptr.vmem [resolvable:$true] %s688
          %691 = dma.hbm_to_vmem [thread:$0]  %s686, 128, %s689, %s678
        $region92: #{encoder_layer.1} parent=87 // pred_fallthru
          _
        // Predicated region
        $region93: #{encoder_layer.1} parent=87 // pred_check
          %p692 = pneg %p89
        $region94: #{encoder_layer.1} parent=87 // pred_check_branch
          %694 = sbr.rel (%p692) target = $region96
        $region95: #{encoder_layer.1} parent=87 // pred_region
          %s695 = sand.u32 %s43, 1
          %s696 = scalar_lea.sflag [#allocation6], %s695
          %s697 = sand.u32 %s79, 1
          %s698 = smul.addr %s697, 8
          %s699 = scalar_lea.vmem [#allocation5], %s698
          %s701 = ssub.s32 128, 128
          %702 = vsyncadd %s696, %s701
          %s703 = smul.addr %s43, 128
          %s704 = scalar_lea.hbm %s1, %s703
          %s706 = sshll.u32 %s699, 4
          %s707 = int_to_ptr.vmem [resolvable:$true] %s706
          %709 = dma.hbm_to_vmem [thread:$0]  %s704, 128, %s707, %s696
        $region96: #{encoder_layer.1} parent=87 // pred_fallthru
          _
      $region88: #{encoder_layer.1} parent=5 // pred_fallthru
        _
      %p710 = scmp.le.s32.totalorder 1, %s43
      %p711 = scmp.lt.s32.totalorder %s43, 3
      %p712 = pnand %p710, %p711
      %p713 = pneg %p712
      // Predicated region
      $region97: #{encoder_layer.1} parent=5 // pred_check
        _
      $region98: #{encoder_layer.1} parent=5 // pred_check_branch
        %715 = sbr.rel (%p712) target = $region100
      $region99: #{encoder_layer.1} parent=5 // pred_region
        %s716 = ssub.s32 %s43, 1
        %s717 = sand.u32 %s56, 1
        %s718 = scalar_lea.sflag [#allocation3], %s717
        %s719 = sand.u32 %s56, 1
        %s720 = smul.addr %s719, 8
        %s721 = scalar_lea.vmem [#allocation2], %s720
        // Predicated region
        $region101: #{encoder_layer.1} parent=99 // pred_check
          %p722 = pneg %p69
        $region102: #{encoder_layer.1} parent=99 // pred_check_branch
          %724 = sbr.rel (%p722) target = $region104
        $region103: #{encoder_layer.1} parent=99 // pred_region
          %725 = dma.done %s718, 128
        $region104: #{encoder_layer.1} parent=99 // pred_fallthru
          _
        %s726 = sand.u32 %s48, 1
        %s727 = scalar_lea.sflag [#allocation6], %s726
        %s728 = sand.u32 %s82, 1
        %s729 = smul.addr %s728, 8
        %s730 = scalar_lea.vmem [#allocation5], %s729
        // Predicated region
        $region105: #{encoder_layer.1} parent=99 // pred_check
          %p731 = pneg %p95
        $region106: #{encoder_layer.1} parent=99 // pred_check_branch
          %733 = sbr.rel (%p731) target = $region108
        $region107: #{encoder_layer.1} parent=99 // pred_region
          %734 = dma.done %s727, 128
        $region108: #{encoder_layer.1} parent=99 // pred_fallthru
          _
        // Predicated region
        $region109: #{encoder_layer.1} parent=99 // pred_check
          %p735 = pneg %p347
        $region110: #{encoder_layer.1} parent=99 // pred_check_branch
          %737 = sbr.rel (%p735) target = $region112
        $region111: #{encoder_layer.1} parent=99 // pred_region
          %738 = dma.done [#allocation6], 512
        $region112: #{encoder_layer.1} parent=99 // pred_fallthru
          _
        // Predicated region
        $region113: #{encoder_layer.1} parent=99 // pred_check
          %p739 = pneg %p368
        $region114: #{encoder_layer.1} parent=99 // pred_check_branch
          %741 = sbr.rel (%p739) target = $region116
        $region115: #{encoder_layer.1} parent=99 // pred_region
          %742 = dma.done [#allocation9], 512
        $region116: #{encoder_layer.1} parent=99 // pred_fallthru
          _
        // Predicated region
        $region117: #{encoder_layer.1} parent=99 // pred_check
          %p743 = pneg %p389
        $region118: #{encoder_layer.1} parent=99 // pred_check_branch
          %745 = sbr.rel (%p743) target = $region120
        $region119: #{encoder_layer.1} parent=99 // pred_region
          %746 = dma.done [#allocation9], 512
        $region120: #{encoder_layer.1} parent=99 // pred_fallthru
          _
        // Predicated region
        $region121: #{encoder_layer.1} parent=99 // pred_check
          %p747 = pneg %p410
        $region122: #{encoder_layer.1} parent=99 // pred_check_branch
          %749 = sbr.rel (%p747) target = $region124
        $region123: #{encoder_layer.1} parent=99 // pred_region
          %750 = dma.done [#allocation12], 512
        $region124: #{encoder_layer.1} parent=99 // pred_fallthru
          _
        // Predicated region
        $region125: #{encoder_layer.1} parent=99 // pred_check
          %p751 = pneg %p452
        $region126: #{encoder_layer.1} parent=99 // pred_check_branch
          %753 = sbr.rel (%p751) target = $region128
        $region127: #{encoder_layer.1} parent=99 // pred_region
          %754 = dma.done [#allocation12], 512
        $region128: #{encoder_layer.1} parent=99 // pred_fallthru
          _
        %s755 = sand.u32 %s56, 1
        %s756 = scalar_lea.sflag [#allocation3], %s755
        %s757 = sand.u32 %s56, 1
        %s758 = smul.addr %s757, 8
        %s759 = scalar_lea.vmem [#allocation2], %s758
        %p760 = pneg %p69
        %p761 = pneg %p66
        %s762 = sand.u32 %s48, 1
        %s763 = scalar_lea.sflag [#allocation6], %s762
        %s764 = sand.u32 %s82, 1
        %s765 = smul.addr %s764, 8
        %s766 = scalar_lea.vmem [#allocation5], %s765
        %p767 = pneg %p95
        %p768 = pneg %p92
        %p769 = pneg %p116
        %p770 = pneg %p113
        %p771 = pneg %p137
        %p772 = pneg %p134
        %p773 = pneg %p158
        %p774 = pneg %p155
        %p775 = pneg %p179
        %p776 = pneg %p176
        %p777 = pneg %p200
        %p778 = pneg %p197
        %p779 = pneg %p221
        %p780 = pneg %p218
        %p781 = pneg %p242
        %p782 = pneg %p239
        %p783 = pneg %p263
        %p784 = pneg %p260
        %p785 = pneg %p284
        %p786 = pneg %p281
        %p787 = pneg %p305
        %p788 = pneg %p302
        %p789 = pneg %p326
        %p790 = pneg %p323
        %p791 = pneg %p347
        %p792 = pneg %p344
        %p793 = pneg %p368
        %p794 = pneg %p365
        %p795 = pneg %p389
        %p796 = pneg %p386
        %p797 = pneg %p410
        %p798 = pneg %p407
        %p799 = pneg %p431
        %p800 = pneg %p428
        %p801 = pneg %p452
        %p802 = pneg %p449
        %p803 = pneg %p473
        %p804 = pneg %p470
        %p805 = pneg %p499
        %p806 = pneg %p496
        %s807 = sand.u32 %s486, 1
        %s808 = scalar_lea.sflag [#allocation4], %s807
        %s809 = sand.u32 %s486, 1
        %s810 = smul.addr %s809, 8
        %s811 = scalar_lea.vmem [#allocation14], %s810
        %p812 = pneg %p525
        %p813 = pneg %p522
        %s814 = sand.u32 %s48, 1
        %s815 = scalar_lea.sflag [#allocation16], %s814
        %s816 = sand.u32 %s512, 1
        %s817 = smul.addr %s816, 8
        %s818 = scalar_lea.vmem [#allocation15], %s817
        %p819 = pneg %p551
        %p820 = pneg %p548
        %s821 = sand.u32 %s48, 1
        %s822 = scalar_lea.sflag [#allocation16], %s821
        %s823 = sand.u32 %s538, 1
        %s824 = smul.addr %s823, 16
        %s825 = scalar_lea.vmem [#allocation17], %s824
        %v826 = vld [vmem:[%s721] sm:$0xff]
        %v827 = vld [vmem:[%s730] sm:$0xff]
        %v828 = vld [vmem:[%s2] sm:$0xff]
        %v829 = vld [vmem:[%s2 + $0x8] sm:$0xff]
        %v830 = vld [vmem:[%s2 + $0x10] sm:$0xff]
        %v831 = vld [vmem:[%s2 + $0x18] sm:$0xff]
        %v832 = vld [vmem:[%s3] sm:$0xff]
        %v833 = vld [vmem:[%s3 + $0x8] sm:$0xff]
        %v834 = vld [vmem:[%s3 + $0x10] sm:$0xff]
        %v835 = vld [vmem:[%s3 + $0x18] sm:$0xff]
        %v836 = vld [vmem:[%s4] sm:$0xff]
        %v837 = vld [vmem:[%s4 + $0x8] sm:$0xff]
        %v838 = vld [vmem:[%s4 + $0x10] sm:$0xff]
        %v839 = vld [vmem:[%s4 + $0x18] sm:$0xff]
        %v840 = vld [vmem:[%s5] sm:$0xff]
        %v841 = vld [vmem:[%s5 + $0x8] sm:$0xff]
        %v842 = vld [vmem:[%s5 + $0x10] sm:$0xff]
        %v843 = vld [vmem:[%s5 + $0x18] sm:$0xff]
        %vm844 = vcmask 261120
        %v846 = vsel %vm844, %v826, 0
        %848 = vmatprep.subr.mxu0 0.0
        %849 = vmatpush1.msra.mxu0 %v828
        %850 = vmatprep.subr.mxu0 0.0
        %851 = vmatpush1.msra.mxu0 %v829
        %852 = vmatprep.subr.mxu0 0.0
        %853 = vmatpush1.msra.mxu0 %v830
        %854 = vmatprep.subr.mxu0 0.0
        %855 = vmatpush1.msra.mxu0 %v831
        %856 = vmatprep.subr.mxu0 0.0
        %857 = vmatpush1.msra.mxu0 0.0
        %858 = vmatprep.subr.mxu0 0.0
        %859 = vmatpush1.msra.mxu0 0.0
        %860 = vmatprep.subr.mxu0 0.0
        %861 = vmatpush1.msra.mxu0 0.0
        %862 = vmatprep.subr.mxu0 0.0
        %863 = vmatpush1.msra.mxu0 0.0
        %864 = vmatprep.subr.mxu0 0.0
        %865 = vmatpush1.msra.mxu0 0.0
        %866 = vmatprep.subr.mxu0 0.0
        %867 = vmatpush1.msra.mxu0 0.0
        %868 = vmatprep.subr.mxu0 0.0
        %869 = vmatpush1.msra.mxu0 0.0
        %870 = vmatprep.subr.mxu0 0.0
        %871 = vmatpush1.msra.mxu0 0.0
        %872 = vmatprep.subr.mxu0 0.0
        %873 = vmatpush1.msra.mxu0 0.0
        %874 = vmatprep.subr.mxu0 0.0
        %875 = vmatpush1.msra.mxu0 0.0
        %876 = vmatprep.subr.mxu0 0.0
        %877 = vmatpush1.msra.mxu0 0.0
        %878 = vmatprep.subr.mxu0 0.0
        %879 = vmatpush1.msra.mxu0 0.0
        %880 = vmatprep.subr.mxu0 0.0
        %881 = vmatpush1.msra.mxu0 0.0
        %882 = vmatprep.subr.mxu0 0.0
        %883 = vmatpush1.msra.mxu0 0.0
        %884 = vmatprep.subr.mxu0 0.0
        %885 = vmatpush1.msra.mxu0 0.0
        %886 = vmatprep.subr.mxu0 0.0
        %887 = vmatpush1.msra.mxu0 0.0
        %888 = vmatprep.subr.mxu0 0.0
        %889 = vmatpush1.msra.mxu0 0.0
        %890 = vmatprep.subr.mxu0 0.0
        %891 = vmatpush1.msra.mxu0 0.0
        %892 = vmatprep.subr.mxu0 0.0
        %893 = vmatpush1.msra.mxu0 0.0
        %894 = vmatprep.subr.mxu0 0.0
        %895 = vmatpush1.msra.mxu0 0.0
        %896 = vmatprep.subr.mxu0 0.0
        %897 = vmatpush1.msra.mxu0 0.0
        %898 = vmatprep.subr.mxu0 0.0
        %899 = vmatpush1.msra.mxu0 0.0
        %900 = vmatprep.subr.mxu0 0.0
        %901 = vmatpush1.msra.mxu0 0.0
        %902 = vmatprep.subr.mxu0 0.0
        %903 = vmatpush1.msra.mxu0 0.0
        %904 = vmatprep.subr.mxu0 0.0
        %905 = vmatpush1.msra.mxu0 0.0
        %906 = vmatprep.subr.mxu0 0.0
        %907 = vmatpush1.msra.mxu0 0.0
        %908 = vmatprep.subr.mxu0 0.0
        %909 = vmatpush1.msra.mxu0 0.0
        %910 = vmatprep.subr.mxu0 0.0
        %911 = vmatpush1.msra.mxu0 0.0
        %912 = vmatprep.mubr.f32.mxu0 0.0
        %913 = vmatmul.mubr.f32.gmra.mrb[0].mxu0 %v846
        %v914 = vpop.f32.mrb[0].mxu0
        %v915 = vadd.f32 0.0, %v914
        %v916 = vpop.f32.mrb[0].mxu0
        %917 = vdwg.mxu0
        %918 = vmatprep.subr.mxu0 0.0
        %919 = vmatpush1.msra.mxu0 %v832
        %920 = vmatprep.subr.mxu0 0.0
        %921 = vmatpush1.msra.mxu0 %v833
        %922 = vmatprep.subr.mxu0 0.0
        %923 = vmatpush1.msra.mxu0 %v834
        %924 = vmatprep.subr.mxu0 0.0
        %925 = vmatpush1.msra.mxu0 %v835
        %926 = vmatprep.subr.mxu0 0.0
        %927 = vmatpush1.msra.mxu0 0.0
        %928 = vmatprep.subr.mxu0 0.0
        %929 = vmatpush1.msra.mxu0 0.0
        %930 = vmatprep.subr.mxu0 0.0
        %931 = vmatpush1.msra.mxu0 0.0
        %932 = vmatprep.subr.mxu0 0.0
        %933 = vmatpush1.msra.mxu0 0.0
        %934 = vmatprep.subr.mxu0 0.0
        %935 = vmatpush1.msra.mxu0 0.0
        %936 = vmatprep.subr.mxu0 0.0
        %937 = vmatpush1.msra.mxu0 0.0
        %938 = vmatprep.subr.mxu0 0.0
        %939 = vmatpush1.msra.mxu0 0.0
        %940 = vmatprep.subr.mxu0 0.0
        %941 = vmatpush1.msra.mxu0 0.0
        %942 = vmatprep.subr.mxu0 0.0
        %943 = vmatpush1.msra.mxu0 0.0
        %944 = vmatprep.subr.mxu0 0.0
        %945 = vmatpush1.msra.mxu0 0.0
        %946 = vmatprep.subr.mxu0 0.0
        %947 = vmatpush1.msra.mxu0 0.0
        %948 = vmatprep.subr.mxu0 0.0
        %949 = vmatpush1.msra.mxu0 0.0
        %950 = vmatprep.subr.mxu0 0.0
        %951 = vmatpush1.msra.mxu0 0.0
        %952 = vmatprep.subr.mxu0 0.0
        %953 = vmatpush1.msra.mxu0 0.0
        %954 = vmatprep.subr.mxu0 0.0
        %955 = vmatpush1.msra.mxu0 0.0
        %956 = vmatprep.subr.mxu0 0.0
        %957 = vmatpush1.msra.mxu0 0.0
        %958 = vmatprep.subr.mxu0 0.0
        %959 = vmatpush1.msra.mxu0 0.0
        %960 = vmatprep.subr.mxu0 0.0
        %961 = vmatpush1.msra.mxu0 0.0
        %962 = vmatprep.subr.mxu0 0.0
        %963 = vmatpush1.msra.mxu0 0.0
        %964 = vmatprep.subr.mxu0 0.0
        %965 = vmatpush1.msra.mxu0 0.0
        %966 = vmatprep.subr.mxu0 0.0
        %967 = vmatpush1.msra.mxu0 0.0
        %968 = vmatprep.subr.mxu0 0.0
        %969 = vmatpush1.msra.mxu0 0.0
        %970 = vmatprep.subr.mxu0 0.0
        %971 = vmatpush1.msra.mxu0 0.0
        %972 = vmatprep.subr.mxu0 0.0
        %973 = vmatpush1.msra.mxu0 0.0
        %974 = vmatprep.subr.mxu0 0.0
        %975 = vmatpush1.msra.mxu0 0.0
        %976 = vmatprep.subr.mxu0 0.0
        %977 = vmatpush1.msra.mxu0 0.0
        %978 = vmatprep.subr.mxu0 0.0
        %979 = vmatpush1.msra.mxu0 0.0
        %980 = vmatprep.subr.mxu0 0.0
        %981 = vmatpush1.msra.mxu0 0.0
        %982 = vmatprep.mubr.f32.mxu0 0.0
        %983 = vmatmul.mubr.f32.gmra.mrb[0].mxu0 %v846
        %v984 = vpop.f32.mrb[0].mxu0
        %v985 = vadd.f32 0.0, %v984
        %v986 = vpop.f32.mrb[0].mxu0
        %987 = vdwg.mxu0
        %988 = vmatprep.subr.mxu0 0.0
        %989 = vmatpush1.msra.mxu0 %v836
        %990 = vmatprep.subr.mxu0 0.0
        %991 = vmatpush1.msra.mxu0 %v837
        %992 = vmatprep.subr.mxu0 0.0
        %993 = vmatpush1.msra.mxu0 %v838
        %994 = vmatprep.subr.mxu0 0.0
        %995 = vmatpush1.msra.mxu0 %v839
        %996 = vmatprep.subr.mxu0 0.0
        %997 = vmatpush1.msra.mxu0 0.0
        %998 = vmatprep.subr.mxu0 0.0
        %999 = vmatpush1.msra.mxu0 0.0
        %1000 = vmatprep.subr.mxu0 0.0
        %1001 = vmatpush1.msra.mxu0 0.0
        %1002 = vmatprep.subr.mxu0 0.0
        %1003 = vmatpush1.msra.mxu0 0.0
        %1004 = vmatprep.subr.mxu0 0.0
        %1005 = vmatpush1.msra.mxu0 0.0
        %1006 = vmatprep.subr.mxu0 0.0
        %1007 = vmatpush1.msra.mxu0 0.0
        %1008 = vmatprep.subr.mxu0 0.0
        %1009 = vmatpush1.msra.mxu0 0.0
        %1010 = vmatprep.subr.mxu0 0.0
        %1011 = vmatpush1.msra.mxu0 0.0
        %1012 = vmatprep.subr.mxu0 0.0
        %1013 = vmatpush1.msra.mxu0 0.0
        %1014 = vmatprep.subr.mxu0 0.0
        %1015 = vmatpush1.msra.mxu0 0.0
        %1016 = vmatprep.subr.mxu0 0.0
        %1017 = vmatpush1.msra.mxu0 0.0
        %1018 = vmatprep.subr.mxu0 0.0
        %1019 = vmatpush1.msra.mxu0 0.0
        %1020 = vmatprep.subr.mxu0 0.0
        %1021 = vmatpush1.msra.mxu0 0.0
        %1022 = vmatprep.subr.mxu0 0.0
        %1023 = vmatpush1.msra.mxu0 0.0
        %1024 = vmatprep.subr.mxu0 0.0
        %1025 = vmatpush1.msra.mxu0 0.0
        %1026 = vmatprep.subr.mxu0 0.0
        %1027 = vmatpush1.msra.mxu0 0.0
        %1028 = vmatprep.subr.mxu0 0.0
        %1029 = vmatpush1.msra.mxu0 0.0
        %1030 = vmatprep.subr.mxu0 0.0
        %1031 = vmatpush1.msra.mxu0 0.0
        %1032 = vmatprep.subr.mxu0 0.0
        %1033 = vmatpush1.msra.mxu0 0.0
        %1034 = vmatprep.subr.mxu0 0.0
        %1035 = vmatpush1.msra.mxu0 0.0
        %1036 = vmatprep.subr.mxu0 0.0
        %1037 = vmatpush1.msra.mxu0 0.0
        %1038 = vmatprep.subr.mxu0 0.0
        %1039 = vmatpush1.msra.mxu0 0.0
        %1040 = vmatprep.subr.mxu0 0.0
        %1041 = vmatpush1.msra.mxu0 0.0
        %1042 = vmatprep.subr.mxu0 0.0
        %1043 = vmatpush1.msra.mxu0 0.0
        %1044 = vmatprep.subr.mxu0 0.0
        %1045 = vmatpush1.msra.mxu0 0.0
        %1046 = vmatprep.subr.mxu0 0.0
        %1047 = vmatpush1.msra.mxu0 0.0
        %1048 = vmatprep.subr.mxu0 0.0
        %1049 = vmatpush1.msra.mxu0 0.0
        %1050 = vmatprep.subr.mxu0 0.0
        %1051 = vmatpush1.msra.mxu0 0.0
        %1052 = vmatprep.mubr.f32.mxu0 0.0
        %1053 = vmatmul.mubr.f32.gmra.mrb[0].mxu0 %v846
        %v1054 = vpop.f32.mrb[0].mxu0
        %v1055 = vadd.f32 0.0, %v1054
        %v1056 = vpop.f32.mrb[0].mxu0
        %1057 = vdwg.mxu0
        %vm1058 = vcmask 130048
        %v1060 = vsel %vm1058, %v915, 0
        %v1063 = vsel %vm1058, %v985, 0
        %1065 = vmatprep.subr.mxu0 0.0
        %1066 = vmatpush1.xpose.msra.mxu0 %v1063
        %1067 = vmatprep.subr.mxu0 0.0
        %1068 = vmatpush1.xpose.msra.mxu0 0.0
        %1069 = vmatprep.subr.mxu0 0.0
        %1070 = vmatpush1.xpose.msra.mxu0 0.0
        %1071 = vmatprep.subr.mxu0 0.0
        %1072 = vmatpush1.xpose.msra.mxu0 0.0
        %1073 = vmatprep.subr.mxu0 0.0
        %1074 = vmatpush1.xpose.msra.mxu0 0.0
        %1075 = vmatprep.subr.mxu0 0.0
        %1076 = vmatpush1.xpose.msra.mxu0 0.0
        %1077 = vmatprep.subr.mxu0 0.0
        %1078 = vmatpush1.xpose.msra.mxu0 0.0
        %1079 = vmatprep.subr.mxu0 0.0
        %1080 = vmatpush1.xpose.msra.mxu0 0.0
        %1081 = vmatprep.subr.mxu0 0.0
        %1082 = vmatpush1.xpose.msra.mxu0 0.0
        %1083 = vmatprep.subr.mxu0 0.0
        %1084 = vmatpush1.xpose.msra.mxu0 0.0
        %1085 = vmatprep.subr.mxu0 0.0
        %1086 = vmatpush1.xpose.msra.mxu0 0.0
        %1087 = vmatprep.subr.mxu0 0.0
        %1088 = vmatpush1.xpose.msra.mxu0 0.0
        %1089 = vmatprep.subr.mxu0 0.0
        %1090 = vmatpush1.xpose.msra.mxu0 0.0
        %1091 = vmatprep.subr.mxu0 0.0
        %1092 = vmatpush1.xpose.msra.mxu0 0.0
        %1093 = vmatprep.subr.mxu0 0.0
        %1094 = vmatpush1.xpose.msra.mxu0 0.0
        %1095 = vmatprep.subr.mxu0 0.0
        %1096 = vmatpush1.xpose.msra.mxu0 0.0
        %1097 = vmatprep.subr.mxu0 0.0
        %1098 = vmatpush1.xpose.msra.mxu0 0.0
        %1099 = vmatprep.subr.mxu0 0.0
        %1100 = vmatpush1.xpose.msra.mxu0 0.0
        %1101 = vmatprep.subr.mxu0 0.0
        %1102 = vmatpush1.xpose.msra.mxu0 0.0
        %1103 = vmatprep.subr.mxu0 0.0
        %1104 = vmatpush1.xpose.msra.mxu0 0.0
        %1105 = vmatprep.subr.mxu0 0.0
        %1106 = vmatpush1.xpose.msra.mxu0 0.0
        %1107 = vmatprep.subr.mxu0 0.0
        %1108 = vmatpush1.xpose.msra.mxu0 0.0
        %1109 = vmatprep.subr.mxu0 0.0
        %1110 = vmatpush1.xpose.msra.mxu0 0.0
        %1111 = vmatprep.subr.mxu0 0.0
        %1112 = vmatpush1.xpose.msra.mxu0 0.0
        %1113 = vmatprep.subr.mxu0 0.0
        %1114 = vmatpush1.xpose.msra.mxu0 0.0
        %1115 = vmatprep.subr.mxu0 0.0
        %1116 = vmatpush1.xpose.msra.mxu0 0.0
        %1117 = vmatprep.subr.mxu0 0.0
        %1118 = vmatpush1.xpose.msra.mxu0 0.0
        %1119 = vmatprep.subr.mxu0 0.0
        %1120 = vmatpush1.xpose.msra.mxu0 0.0
        %1121 = vmatprep.subr.mxu0 0.0
        %1122 = vmatpush1.xpose.msra.mxu0 0.0
        %1123 = vmatprep.subr.mxu0 0.0
        %1124 = vmatpush1.xpose.msra.mxu0 0.0
        %1125 = vmatprep.subr.mxu0 0.0
        %1126 = vmatpush1.xpose.msra.mxu0 0.0
        %1127 = vmatprep.subr.mxu0 0.0
        %1128 = vmatpush1.xpose.msra.mxu0 0.0
        %1129 = vmatprep.mubr.f32.mxu0 0.0
        %1130 = vmatmul.mubr.f32.gmra.mrb[0].mxu0 %v1060
        %v1131 = vpop.f32.mrb[0].mxu0
        %v1132 = vadd.f32 0.0, %v1131
        %v1133 = vpop.f32.mrb[0].mxu0
        %1134 = vdwg.mxu0
        %v1135 = vmul.f32 %v1132, 0.25
        %vm1136 = vcmask 64512
        %v1137 = vsel %vm1136, %v1135, -inf
        %1138 = vmax.xlane.f32.xlu0 %v1137
        %v1139 = vpop.xlane.xlu0 %1138
        %v1140 = vsub.f32 %v1135, %v1139
        %v1141 = vmul.f32 %v1140, 1.442695
        %v1142 = vpow.pop %v1141
        %v1143 = vsel %vm1136, %v1142, 0.0
        %1144 = vadd.xlane.f32.xlu0 %v1143
        %v1145 = vpop.xlane.xlu0 %1144
        %v1146 = vrcp.pop %v1145
        %v1147 = vmul.f32 %v1142, %v1146
        %v1149 = vsel %vm1136, %v1147, 0
        %1151 = vmatprep.subr.mxu0 0.0
        %1152 = vmatpush1.msra.mxu0 %v1055
        %1153 = vmatprep.subr.mxu0 0.0
        %1154 = vmatpush1.msra.mxu0 0.0
        %1155 = vmatprep.subr.mxu0 0.0
        %1156 = vmatpush1.msra.mxu0 0.0
        %1157 = vmatprep.subr.mxu0 0.0
        %1158 = vmatpush1.msra.mxu0 0.0
        %1159 = vmatprep.subr.mxu0 0.0
        %1160 = vmatpush1.msra.mxu0 0.0
        %1161 = vmatprep.subr.mxu0 0.0
        %1162 = vmatpush1.msra.mxu0 0.0
        %1163 = vmatprep.subr.mxu0 0.0
        %1164 = vmatpush1.msra.mxu0 0.0
        %1165 = vmatprep.subr.mxu0 0.0
        %1166 = vmatpush1.msra.mxu0 0.0
        %1167 = vmatprep.subr.mxu0 0.0
        %1168 = vmatpush1.msra.mxu0 0.0
        %1169 = vmatprep.subr.mxu0 0.0
        %1170 = vmatpush1.msra.mxu0 0.0
        %1171 = vmatprep.subr.mxu0 0.0
        %1172 = vmatpush1.msra.mxu0 0.0
        %1173 = vmatprep.subr.mxu0 0.0
        %1174 = vmatpush1.msra.mxu0 0.0
        %1175 = vmatprep.subr.mxu0 0.0
        %1176 = vmatpush1.msra.mxu0 0.0
        %1177 = vmatprep.subr.mxu0 0.0
        %1178 = vmatpush1.msra.mxu0 0.0
        %1179 = vmatprep.subr.mxu0 0.0
        %1180 = vmatpush1.msra.mxu0 0.0
        %1181 = vmatprep.subr.mxu0 0.0
        %1182 = vmatpush1.msra.mxu0 0.0
        %1183 = vmatprep.subr.mxu0 0.0
        %1184 = vmatpush1.msra.mxu0 0.0
        %1185 = vmatprep.subr.mxu0 0.0
        %1186 = vmatpush1.msra.mxu0 0.0
        %1187 = vmatprep.subr.mxu0 0.0
        %1188 = vmatpush1.msra.mxu0 0.0
        %1189 = vmatprep.subr.mxu0 0.0
        %1190 = vmatpush1.msra.mxu0 0.0
        %1191 = vmatprep.subr.mxu0 0.0
        %1192 = vmatpush1.msra.mxu0 0.0
        %1193 = vmatprep.subr.mxu0 0.0
        %1194 = vmatpush1.msra.mxu0 0.0
        %1195 = vmatprep.subr.mxu0 0.0
        %1196 = vmatpush1.msra.mxu0 0.0
        %1197 = vmatprep.subr.mxu0 0.0
        %1198 = vmatpush1.msra.mxu0 0.0
        %1199 = vmatprep.subr.mxu0 0.0
        %1200 = vmatpush1.msra.mxu0 0.0
        %1201 = vmatprep.subr.mxu0 0.0
        %1202 = vmatpush1.msra.mxu0 0.0
        %1203 = vmatprep.subr.mxu0 0.0
        %1204 = vmatpush1.msra.mxu0 0.0
        %1205 = vmatprep.subr.mxu0 0.0
        %1206 = vmatpush1.msra.mxu0 0.0
        %1207 = vmatprep.subr.mxu0 0.0
        %1208 = vmatpush1.msra.mxu0 0.0
        %1209 = vmatprep.subr.mxu0 0.0
        %1210 = vmatpush1.msra.mxu0 0.0
        %1211 = vmatprep.subr.mxu0 0.0
        %1212 = vmatpush1.msra.mxu0 0.0
        %1213 = vmatprep.subr.mxu0 0.0
        %1214 = vmatpush1.msra.mxu0 0.0
        %1215 = vmatprep.mubr.f32.mxu0 0.0
        %1216 = vmatmul.mubr.f32.gmra.mrb[0].mxu0 %v1149
        %v1217 = vpop.f32.mrb[0].mxu0
        %v1218 = vadd.f32 0.0, %v1217
        %v1219 = vpop.f32.mrb[0].mxu0
        %1220 = vdwg.mxu0
        %1221 = vrot.lane.b32.xlu0 %v915, 112
        %v1222 = vpop.permute.xlu0 %1221
        %1223 = vrot.lane.b32.xlu0 %v985, 112
        %v1224 = vpop.permute.xlu0 %1223
        %v1225 = vsel %vm1058, %v1222, 0
        %v1227 = vsel %vm1058, %v1224, 0
        %1229 = vmatprep.subr.mxu0 0.0
        %1230 = vmatpush1.xpose.msra.mxu0 %v1227
        %1231 = vmatprep.subr.mxu0 0.0
        %1232 = vmatpush1.xpose.msra.mxu0 0.0
        %1233 = vmatprep.subr.mxu0 0.0
        %1234 = vmatpush1.xpose.msra.mxu0 0.0
        %1235 = vmatprep.subr.mxu0 0.0
        %1236 = vmatpush1.xpose.msra.mxu0 0.0
        %1237 = vmatprep.subr.mxu0 0.0
        %1238 = vmatpush1.xpose.msra.mxu0 0.0
        %1239 = vmatprep.subr.mxu0 0.0
        %1240 = vmatpush1.xpose.msra.mxu0 0.0
        %1241 = vmatprep.subr.mxu0 0.0
        %1242 = vmatpush1.xpose.msra.mxu0 0.0
        %1243 = vmatprep.subr.mxu0 0.0
        %1244 = vmatpush1.xpose.msra.mxu0 0.0
        %1245 = vmatprep.subr.mxu0 0.0
        %1246 = vmatpush1.xpose.msra.mxu0 0.0
        %1247 = vmatprep.subr.mxu0 0.0
        %1248 = vmatpush1.xpose.msra.mxu0 0.0
        %1249 = vmatprep.subr.mxu0 0.0
        %1250 = vmatpush1.xpose.msra.mxu0 0.0
        %1251 = vmatprep.subr.mxu0 0.0
        %1252 = vmatpush1.xpose.msra.mxu0 0.0
        %1253 = vmatprep.subr.mxu0 0.0
        %1254 = vmatpush1.xpose.msra.mxu0 0.0
        %1255 = vmatprep.subr.mxu0 0.0
        %1256 = vmatpush1.xpose.msra.mxu0 0.0
        %1257 = vmatprep.subr.mxu0 0.0
        %1258 = vmatpush1.xpose.msra.mxu0 0.0
        %1259 = vmatprep.subr.mxu0 0.0
        %1260 = vmatpush1.xpose.msra.mxu0 0.0
        %1261 = vmatprep.subr.mxu0 0.0
        %1262 = vmatpush1.xpose.msra.mxu0 0.0
        %1263 = vmatprep.subr.mxu0 0.0
        %1264 = vmatpush1.xpose.msra.mxu0 0.0
        %1265 = vmatprep.subr.mxu0 0.0
        %1266 = vmatpush1.xpose.msra.mxu0 0.0
        %1267 = vmatprep.subr.mxu0 0.0
        %1268 = vmatpush1.xpose.msra.mxu0 0.0
        %1269 = vmatprep.subr.mxu0 0.0
        %1270 = vmatpush1.xpose.msra.mxu0 0.0
        %1271 = vmatprep.subr.mxu0 0.0
        %1272 = vmatpush1.xpose.msra.mxu0 0.0
        %1273 = vmatprep.subr.mxu0 0.0
        %1274 = vmatpush1.xpose.msra.mxu0 0.0
        %1275 = vmatprep.subr.mxu0 0.0
        %1276 = vmatpush1.xpose.msra.mxu0 0.0
        %1277 = vmatprep.subr.mxu0 0.0
        %1278 = vmatpush1.xpose.msra.mxu0 0.0
        %1279 = vmatprep.subr.mxu0 0.0
        %1280 = vmatpush1.xpose.msra.mxu0 0.0
        %1281 = vmatprep.subr.mxu0 0.0
        %1282 = vmatpush1.xpose.msra.mxu0 0.0
        %1283 = vmatprep.subr.mxu0 0.0
        %1284 = vmatpush1.xpose.msra.mxu0 0.0
        %1285 = vmatprep.subr.mxu0 0.0
        %1286 = vmatpush1.xpose.msra.mxu0 0.0
        %1287 = vmatprep.subr.mxu0 0.0
        %1288 = vmatpush1.xpose.msra.mxu0 0.0
        %1289 = vmatprep.subr.mxu0 0.0
        %1290 = vmatpush1.xpose.msra.mxu0 0.0
        %1291 = vmatprep.subr.mxu0 0.0
        %1292 = vmatpush1.xpose.msra.mxu0 0.0
        %1293 = vmatprep.mubr.f32.mxu0 0.0
        %1294 = vmatmul.mubr.f32.gmra.mrb[0].mxu0 %v1225
        %v1295 = vpop.f32.mrb[0].mxu0
        %v1296 = vadd.f32 0.0, %v1295
        %v1297 = vpop.f32.mrb[0].mxu0
        %1298 = vdwg.mxu0
        %v1299 = vmul.f32 %v1296, 0.25
        %v1300 = vsel %vm1136, %v1299, -inf
        %1301 = vmax.xlane.f32.xlu0 %v1300
        %v1302 = vpop.xlane.xlu0 %1301
        %v1303 = vsub.f32 %v1299, %v1302
        %v1304 = vmul.f32 %v1303, 1.442695
        %v1305 = vpow.pop %v1304
        %v1306 = vsel %vm1136, %v1305, 0.0
        %1307 = vadd.xlane.f32.xlu0 %v1306
        %v1308 = vpop.xlane.xlu0 %1307
        %v1309 = vrcp.pop %v1308
        %v1310 = vmul.f32 %v1305, %v1309
        %1312 = vrot.lane.b32.xlu0 %v1055, 112
        %v1313 = vpop.permute.xlu0 %1312
        %v1316 = vsel %vm1136, %v1310, 0
        %1318 = vmatprep.subr.mxu0 0.0
        %1319 = vmatpush1.msra.mxu0 %v1313
        %1320 = vmatprep.subr.mxu0 0.0
        %1321 = vmatpush1.msra.mxu0 0.0
        %1322 = vmatprep.subr.mxu0 0.0
        %1323 = vmatpush1.msra.mxu0 0.0
        %1324 = vmatprep.subr.mxu0 0.0
        %1325 = vmatpush1.msra.mxu0 0.0
        %1326 = vmatprep.subr.mxu0 0.0
        %1327 = vmatpush1.msra.mxu0 0.0
        %1328 = vmatprep.subr.mxu0 0.0
        %1329 = vmatpush1.msra.mxu0 0.0
        %1330 = vmatprep.subr.mxu0 0.0
        %1331 = vmatpush1.msra.mxu0 0.0
        %1332 = vmatprep.subr.mxu0 0.0
        %1333 = vmatpush1.msra.mxu0 0.0
        %1334 = vmatprep.subr.mxu0 0.0
        %1335 = vmatpush1.msra.mxu0 0.0
        %1336 = vmatprep.subr.mxu0 0.0
        %1337 = vmatpush1.msra.mxu0 0.0
        %1338 = vmatprep.subr.mxu0 0.0
        %1339 = vmatpush1.msra.mxu0 0.0
        %1340 = vmatprep.subr.mxu0 0.0
        %1341 = vmatpush1.msra.mxu0 0.0
        %1342 = vmatprep.subr.mxu0 0.0
        %1343 = vmatpush1.msra.mxu0 0.0
        %1344 = vmatprep.subr.mxu0 0.0
        %1345 = vmatpush1.msra.mxu0 0.0
        %1346 = vmatprep.subr.mxu0 0.0
        %1347 = vmatpush1.msra.mxu0 0.0
        %1348 = vmatprep.subr.mxu0 0.0
        %1349 = vmatpush1.msra.mxu0 0.0
        %1350 = vmatprep.subr.mxu0 0.0
        %1351 = vmatpush1.msra.mxu0 0.0
        %1352 = vmatprep.subr.mxu0 0.0
        %1353 = vmatpush1.msra.mxu0 0.0
        %1354 = vmatprep.subr.mxu0 0.0
        %1355 = vmatpush1.msra.mxu0 0.0
        %1356 = vmatprep.subr.mxu0 0.0
        %1357 = vmatpush1.msra.mxu0 0.0
        %1358 = vmatprep.subr.mxu0 0.0
        %1359 = vmatpush1.msra.mxu0 0.0
        %1360 = vmatprep.subr.mxu0 0.0
        %1361 = vmatpush1.msra.mxu0 0.0
        %1362 = vmatprep.subr.mxu0 0.0
        %1363 = vmatpush1.msra.mxu0 0.0
        %1364 = vmatprep.subr.mxu0 0.0
        %1365 = vmatpush1.msra.mxu0 0.0
        %1366 = vmatprep.subr.mxu0 0.0
        %1367 = vmatpush1.msra.mxu0 0.0
        %1368 = vmatprep.subr.mxu0 0.0
        %1369 = vmatpush1.msra.mxu0 0.0
        %1370 = vmatprep.subr.mxu0 0.0
        %1371 = vmatpush1.msra.mxu0 0.0
        %1372 = vmatprep.subr.mxu0 0.0
        %1373 = vmatpush1.msra.mxu0 0.0
        %1374 = vmatprep.subr.mxu0 0.0
        %1375 = vmatpush1.msra.mxu0 0.0
        %1376 = vmatprep.subr.mxu0 0.0
        %1377 = vmatpush1.msra.mxu0 0.0
        %1378 = vmatprep.subr.mxu0 0.0
        %1379 = vmatpush1.msra.mxu0 0.0
        %1380 = vmatprep.subr.mxu0 0.0
        %1381 = vmatpush1.msra.mxu0 0.0
        %1382 = vmatprep.mubr.f32.mxu0 0.0
        %1383 = vmatmul.mubr.f32.gmra.mrb[0].mxu0 %v1316
        %v1384 = vpop.f32.mrb[0].mxu0
        %v1385 = vadd.f32 0.0, %v1384
        %v1386 = vpop.f32.mrb[0].mxu0
        %1387 = vdwg.mxu0
        %1389 = vrot.lane.b32.xlu0 %v1385, 16
        %v1390 = vpop.permute.xlu0 %1389
        %v1392 = vsel %vm1058, %v1218, %v1390
        %v1394 = vsel %vm844, %v1392, 0
        %1396 = vmatprep.subr.mxu0 0.0
        %1397 = vmatpush1.msra.mxu0 %v840
        %1398 = vmatprep.subr.mxu0 0.0
        %1399 = vmatpush1.msra.mxu0 %v841
        %1400 = vmatprep.subr.mxu0 0.0
        %1401 = vmatpush1.msra.mxu0 %v842
        %1402 = vmatprep.subr.mxu0 0.0
        %1403 = vmatpush1.msra.mxu0 %v843
        %1404 = vmatprep.subr.mxu0 0.0
        %1405 = vmatpush1.msra.mxu0 0.0
        %1406 = vmatprep.subr.mxu0 0.0
        %1407 = vmatpush1.msra.mxu0 0.0
        %1408 = vmatprep.subr.mxu0 0.0
        %1409 = vmatpush1.msra.mxu0 0.0
        %1410 = vmatprep.subr.mxu0 0.0
        %1411 = vmatpush1.msra.mxu0 0.0
        %1412 = vmatprep.subr.mxu0 0.0
        %1413 = vmatpush1.msra.mxu0 0.0
        %1414 = vmatprep.subr.mxu0 0.0
        %1415 = vmatpush1.msra.mxu0 0.0
        %1416 = vmatprep.subr.mxu0 0.0
        %1417 = vmatpush1.msra.mxu0 0.0
        %1418 = vmatprep.subr.mxu0 0.0
        %1419 = vmatpush1.msra.mxu0 0.0
        %1420 = vmatprep.subr.mxu0 0.0
        %1421 = vmatpush1.msra.mxu0 0.0
        %1422 = vmatprep.subr.mxu0 0.0
        %1423 = vmatpush1.msra.mxu0 0.0
        %1424 = vmatprep.subr.mxu0 0.0
        %1425 = vmatpush1.msra.mxu0 0.0
        %1426 = vmatprep.subr.mxu0 0.0
        %1427 = vmatpush1.msra.mxu0 0.0
        %1428 = vmatprep.subr.mxu0 0.0
        %1429 = vmatpush1.msra.mxu0 0.0
        %1430 = vmatprep.subr.mxu0 0.0
        %1431 = vmatpush1.msra.mxu0 0.0
        %1432 = vmatprep.subr.mxu0 0.0
        %1433 = vmatpush1.msra.mxu0 0.0
        %1434 = vmatprep.subr.mxu0 0.0
        %1435 = vmatpush1.msra.mxu0 0.0
        %1436 = vmatprep.subr.mxu0 0.0
        %1437 = vmatpush1.msra.mxu0 0.0
        %1438 = vmatprep.subr.mxu0 0.0
        %1439 = vmatpush1.msra.mxu0 0.0
        %1440 = vmatprep.subr.mxu0 0.0
        %1441 = vmatpush1.msra.mxu0 0.0
        %1442 = vmatprep.subr.mxu0 0.0
        %1443 = vmatpush1.msra.mxu0 0.0
        %1444 = vmatprep.subr.mxu0 0.0
        %1445 = vmatpush1.msra.mxu0 0.0
        %1446 = vmatprep.subr.mxu0 0.0
        %1447 = vmatpush1.msra.mxu0 0.0
        %1448 = vmatprep.subr.mxu0 0.0
        %1449 = vmatpush1.msra.mxu0 0.0
        %1450 = vmatprep.subr.mxu0 0.0
        %1451 = vmatpush1.msra.mxu0 0.0
        %1452 = vmatprep.subr.mxu0 0.0
        %1453 = vmatpush1.msra.mxu0 0.0
        %1454 = vmatprep.subr.mxu0 0.0
        %1455 = vmatpush1.msra.mxu0 0.0
        %1456 = vmatprep.subr.mxu0 0.0
        %1457 = vmatpush1.msra.mxu0 0.0
        %1458 = vmatprep.subr.mxu0 0.0
        %1459 = vmatpush1.msra.mxu0 0.0
        %1460 = vmatprep.mubr.f32.mxu0 0.0
        %1461 = vmatmul.mubr.f32.gmra.mrb[0].mxu0 %v1394
        %v1462 = vpop.f32.mrb[0].mxu0
        %v1463 = vadd.f32 %v826, %v1462
        %v1464 = vpop.f32.mrb[0].mxu0
        %1465 = vdwg.mxu0
        %v1466 = vsel %vm844, %v1463, 0.0
        %1467 = vadd.xlane.f32.xlu0 %v1466
        %v1468 = vpop.xlane.xlu0 %1467
        %v1469 = vrcp.pop 32.0
        %v1470 = vmul.f32 %v1468, %v1469
        %v1471 = vsub.f32 %v1463, %v1470
        %v1472 = vmul.f32 %v1471, %v1471
        %v1473 = vsel %vm844, %v1472, 0.0
        %1474 = vadd.xlane.f32.xlu0 %v1473
        %v1475 = vpop.xlane.xlu0 %1474
        %v1476 = vmul.f32 %v1475, %v1469
        %v1477 = vadd.f32 %v1476, 1e-05
        %v1478 = vrsqrt.pop %v1477
        %v1479 = vmul.f32 %v1471, %v1478
        %v1481 = vsel %vm844, %v827, 0
        %1483 = vmatprep.subr.mxu0 0.0
        %1484 = vmatpush1.msra.mxu0 %v828
        %1485 = vmatprep.subr.mxu0 0.0
        %1486 = vmatpush1.msra.mxu0 %v829
        %1487 = vmatprep.subr.mxu0 0.0
        %1488 = vmatpush1.msra.mxu0 %v830
        %1489 = vmatprep.subr.mxu0 0.0
        %1490 = vmatpush1.msra.mxu0 %v831
        %1491 = vmatprep.subr.mxu0 0.0
        %1492 = vmatpush1.msra.mxu0 0.0
        %1493 = vmatprep.subr.mxu0 0.0
        %1494 = vmatpush1.msra.mxu0 0.0
        %1495 = vmatprep.subr.mxu0 0.0
        %1496 = vmatpush1.msra.mxu0 0.0
        %1497 = vmatprep.subr.mxu0 0.0
        %1498 = vmatpush1.msra.mxu0 0.0
        %1499 = vmatprep.subr.mxu0 0.0
        %1500 = vmatpush1.msra.mxu0 0.0
        %1501 = vmatprep.subr.mxu0 0.0
        %1502 = vmatpush1.msra.mxu0 0.0
        %1503 = vmatprep.subr.mxu0 0.0
        %1504 = vmatpush1.msra.mxu0 0.0
        %1505 = vmatprep.subr.mxu0 0.0
        %1506 = vmatpush1.msra.mxu0 0.0
        %1507 = vmatprep.subr.mxu0 0.0
        %1508 = vmatpush1.msra.mxu0 0.0
        %1509 = vmatprep.subr.mxu0 0.0
        %1510 = vmatpush1.msra.mxu0 0.0
        %1511 = vmatprep.subr.mxu0 0.0
        %1512 = vmatpush1.msra.mxu0 0.0
        %1513 = vmatprep.subr.mxu0 0.0
        %1514 = vmatpush1.msra.mxu0 0.0
        %1515 = vmatprep.subr.mxu0 0.0
        %1516 = vmatpush1.msra.mxu0 0.0
        %1517 = vmatprep.subr.mxu0 0.0
        %1518 = vmatpush1.msra.mxu0 0.0
        %1519 = vmatprep.subr.mxu0 0.0
        %1520 = vmatpush1.msra.mxu0 0.0
        %1521 = vmatprep.subr.mxu0 0.0
        %1522 = vmatpush1.msra.mxu0 0.0
        %1523 = vmatprep.subr.mxu0 0.0
        %1524 = vmatpush1.msra.mxu0 0.0
        %1525 = vmatprep.subr.mxu0 0.0
        %1526 = vmatpush1.msra.mxu0 0.0
        %1527 = vmatprep.subr.mxu0 0.0
        %1528 = vmatpush1.msra.mxu0 0.0
        %1529 = vmatprep.subr.mxu0 0.0
        %1530 = vmatpush1.msra.mxu0 0.0
        %1531 = vmatprep.subr.mxu0 0.0
        %1532 = vmatpush1.msra.mxu0 0.0
        %1533 = vmatprep.subr.mxu0 0.0
        %1534 = vmatpush1.msra.mxu0 0.0
        %1535 = vmatprep.subr.mxu0 0.0
        %1536 = vmatpush1.msra.mxu0 0.0
        %1537 = vmatprep.subr.mxu0 0.0
        %1538 = vmatpush1.msra.mxu0 0.0
        %1539 = vmatprep.subr.mxu0 0.0
        %1540 = vmatpush1.msra.mxu0 0.0
        %1541 = vmatprep.subr.mxu0 0.0
        %1542 = vmatpush1.msra.mxu0 0.0
        %1543 = vmatprep.subr.mxu0 0.0
        %1544 = vmatpush1.msra.mxu0 0.0
        %1545 = vmatprep.subr.mxu0 0.0
        %1546 = vmatpush1.msra.mxu0 0.0
        %1547 = vmatprep.mubr.f32.mxu0 0.0
        %1548 = vmatmul.mubr.f32.gmra.mrb[0].mxu0 %v1481
        %v1549 = vpop.f32.mrb[0].mxu0
        %v1550 = vadd.f32 0.0, %v1549
        %v1551 = vpop.f32.mrb[0].mxu0
        %1552 = vdwg.mxu0
        %1553 = vmatprep.subr.mxu0 0.0
        %1554 = vmatpush1.msra.mxu0 %v832
        %1555 = vmatprep.subr.mxu0 0.0
        %1556 = vmatpush1.msra.mxu0 %v833
        %1557 = vmatprep.subr.mxu0 0.0
        %1558 = vmatpush1.msra.mxu0 %v834
        %1559 = vmatprep.subr.mxu0 0.0
        %1560 = vmatpush1.msra.mxu0 %v835
        %1561 = vmatprep.subr.mxu0 0.0
        %1562 = vmatpush1.msra.mxu0 0.0
        %1563 = vmatprep.subr.mxu0 0.0
        %1564 = vmatpush1.msra.mxu0 0.0
        %1565 = vmatprep.subr.mxu0 0.0
        %1566 = vmatpush1.msra.mxu0 0.0
        %1567 = vmatprep.subr.mxu0 0.0
        %1568 = vmatpush1.msra.mxu0 0.0
        %1569 = vmatprep.subr.mxu0 0.0
        %1570 = vmatpush1.msra.mxu0 0.0
        %1571 = vmatprep.subr.mxu0 0.0
        %1572 = vmatpush1.msra.mxu0 0.0
        %1573 = vmatprep.subr.mxu0 0.0
        %1574 = vmatpush1.msra.mxu0 0.0
        %1575 = vmatprep.subr.mxu0 0.0
        %1576 = vmatpush1.msra.mxu0 0.0
        %1577 = vmatprep.subr.mxu0 0.0
        %1578 = vmatpush1.msra.mxu0 0.0
        %1579 = vmatprep.subr.mxu0 0.0
        %1580 = vmatpush1.msra.mxu0 0.0
        %1581 = vmatprep.subr.mxu0 0.0
        %1582 = vmatpush1.msra.mxu0 0.0
        %1583 = vmatprep.subr.mxu0 0.0
        %1584 = vmatpush1.msra.mxu0 0.0
        %1585 = vmatprep.subr.mxu0 0.0
        %1586 = vmatpush1.msra.mxu0 0.0
        %1587 = vmatprep.subr.mxu0 0.0
        %1588 = vmatpush1.msra.mxu0 0.0
        %1589 = vmatprep.subr.mxu0 0.0
        %1590 = vmatpush1.msra.mxu0 0.0
        %1591 = vmatprep.subr.mxu0 0.0
        %1592 = vmatpush1.msra.mxu0 0.0
        %1593 = vmatprep.subr.mxu0 0.0
        %1594 = vmatpush1.msra.mxu0 0.0
        %1595 = vmatprep.subr.mxu0 0.0
        %1596 = vmatpush1.msra.mxu0 0.0
        %1597 = vmatprep.subr.mxu0 0.0
        %1598 = vmatpush1.msra.mxu0 0.0
        %1599 = vmatprep.subr.mxu0 0.0
        %1600 = vmatpush1.msra.mxu0 0.0
        %1601 = vmatprep.subr.mxu0 0.0
        %1602 = vmatpush1.msra.mxu0 0.0
        %1603 = vmatprep.subr.mxu0 0.0
        %1604 = vmatpush1.msra.mxu0 0.0
        %1605 = vmatprep.subr.mxu0 0.0
        %1606 = vmatpush1.msra.mxu0 0.0
        %1607 = vmatprep.subr.mxu0 0.0
        %1608 = vmatpush1.msra.mxu0 0.0
        %1609 = vmatprep.subr.mxu0 0.0
        %1610 = vmatpush1.msra.mxu0 0.0
        %1611 = vmatprep.subr.mxu0 0.0
        %1612 = vmatpush1.msra.mxu0 0.0
        %1613 = vmatprep.subr.mxu0 0.0
        %1614 = vmatpush1.msra.mxu0 0.0
        %1615 = vmatprep.subr.mxu0 0.0
        %1616 = vmatpush1.msra.mxu0 0.0
        %1617 = vmatprep.mubr.f32.mxu0 0.0
        %1618 = vmatmul.mubr.f32.gmra.mrb[0].mxu0 %v1481
        %v1619 = vpop.f32.mrb[0].mxu0
        %v1620 = vadd.f32 0.0, %v1619
        %v1621 = vpop.f32.mrb[0].mxu0
        %1622 = vdwg.mxu0
        %1623 = vmatprep.subr.mxu0 0.0
        %1624 = vmatpush1.msra.mxu0 %v836
        %1625 = vmatprep.subr.mxu0 0.0
        %1626 = vmatpush1.msra.mxu0 %v837
        %1627 = vmatprep.subr.mxu0 0.0
        %1628 = vmatpush1.msra.mxu0 %v838
        %1629 = vmatprep.subr.mxu0 0.0
        %1630 = vmatpush1.msra.mxu0 %v839
        %1631 = vmatprep.subr.mxu0 0.0
        %1632 = vmatpush1.msra.mxu0 0.0
        %1633 = vmatprep.subr.mxu0 0.0
        %1634 = vmatpush1.msra.mxu0 0.0
        %1635 = vmatprep.subr.mxu0 0.0
        %1636 = vmatpush1.msra.mxu0 0.0
        %1637 = vmatprep.subr.mxu0 0.0
        %1638 = vmatpush1.msra.mxu0 0.0
        %1639 = vmatprep.subr.mxu0 0.0
        %1640 = vmatpush1.msra.mxu0 0.0
        %1641 = vmatprep.subr.mxu0 0.0
        %1642 = vmatpush1.msra.mxu0 0.0
        %1643 = vmatprep.subr.mxu0 0.0
        %1644 = vmatpush1.msra.mxu0 0.0
        %1645 = vmatprep.subr.mxu0 0.0
        %1646 = vmatpush1.msra.mxu0 0.0
        %1647 = vmatprep.subr.mxu0 0.0
        %1648 = vmatpush1.msra.mxu0 0.0
        %1649 = vmatprep.subr.mxu0 0.0
        %1650 = vmatpush1.msra.mxu0 0.0
        %1651 = vmatprep.subr.mxu0 0.0
        %1652 = vmatpush1.msra.mxu0 0.0
        %1653 = vmatprep.subr.mxu0 0.0
        %1654 = vmatpush1.msra.mxu0 0.0
        %1655 = vmatprep.subr.mxu0 0.0
        %1656 = vmatpush1.msra.mxu0 0.0
        %1657 = vmatprep.subr.mxu0 0.0
        %1658 = vmatpush1.msra.mxu0 0.0
        %1659 = vmatprep.subr.mxu0 0.0
        %1660 = vmatpush1.msra.mxu0 0.0
        %1661 = vmatprep.subr.mxu0 0.0
        %1662 = vmatpush1.msra.mxu0 0.0
        %1663 = vmatprep.subr.mxu0 0.0
        %1664 = vmatpush1.msra.mxu0 0.0
        %1665 = vmatprep.subr.mxu0 0.0
        %1666 = vmatpush1.msra.mxu0 0.0
        %1667 = vmatprep.subr.mxu0 0.0
        %1668 = vmatpush1.msra.mxu0 0.0
        %1669 = vmatprep.subr.mxu0 0.0
        %1670 = vmatpush1.msra.mxu0 0.0
        %1671 = vmatprep.subr.mxu0 0.0
        %1672 = vmatpush1.msra.mxu0 0.0
        %1673 = vmatprep.subr.mxu0 0.0
        %1674 = vmatpush1.msra.mxu0 0.0
        %1675 = vmatprep.subr.mxu0 0.0
        %1676 = vmatpush1.msra.mxu0 0.0
        %1677 = vmatprep.subr.mxu0 0.0
        %1678 = vmatpush1.msra.mxu0 0.0
        %1679 = vmatprep.subr.mxu0 0.0
        %1680 = vmatpush1.msra.mxu0 0.0
        %1681 = vmatprep.subr.mxu0 0.0
        %1682 = vmatpush1.msra.mxu0 0.0
        %1683 = vmatprep.subr.mxu0 0.0
        %1684 = vmatpush1.msra.mxu0 0.0
        %1685 = vmatprep.subr.mxu0 0.0
        %1686 = vmatpush1.msra.mxu0 0.0
        %1687 = vmatprep.mubr.f32.mxu0 0.0
        %1688 = vmatmul.mubr.f32.gmra.mrb[0].mxu0 %v1481
        %v1689 = vpop.f32.mrb[0].mxu0
        %v1690 = vadd.f32 0.0, %v1689
        %v1691 = vpop.f32.mrb[0].mxu0
        %1692 = vdwg.mxu0
        %v1694 = vsel %vm1058, %v1550, 0
        %v1697 = vsel %vm1058, %v1620, 0
        %1699 = vmatprep.subr.mxu0 0.0
        %1700 = vmatpush1.xpose.msra.mxu0 %v1697
        %1701 = vmatprep.subr.mxu0 0.0
        %1702 = vmatpush1.xpose.msra.mxu0 0.0
        %1703 = vmatprep.subr.mxu0 0.0
        %1704 = vmatpush1.xpose.msra.mxu0 0.0
        %1705 = vmatprep.subr.mxu0 0.0
        %1706 = vmatpush1.xpose.msra.mxu0 0.0
        %1707 = vmatprep.subr.mxu0 0.0
        %1708 = vmatpush1.xpose.msra.mxu0 0.0
        %1709 = vmatprep.subr.mxu0 0.0
        %1710 = vmatpush1.xpose.msra.mxu0 0.0
        %1711 = vmatprep.subr.mxu0 0.0
        %1712 = vmatpush1.xpose.msra.mxu0 0.0
        %1713 = vmatprep.subr.mxu0 0.0
        %1714 = vmatpush1.xpose.msra.mxu0 0.0
        %1715 = vmatprep.subr.mxu0 0.0
        %1716 = vmatpush1.xpose.msra.mxu0 0.0
        %1717 = vmatprep.subr.mxu0 0.0
        %1718 = vmatpush1.xpose.msra.mxu0 0.0
        %1719 = vmatprep.subr.mxu0 0.0
        %1720 = vmatpush1.xpose.msra.mxu0 0.0
        %1721 = vmatprep.subr.mxu0 0.0
        %1722 = vmatpush1.xpose.msra.mxu0 0.0
        %1723 = vmatprep.subr.mxu0 0.0
        %1724 = vmatpush1.xpose.msra.mxu0 0.0
        %1725 = vmatprep.subr.mxu0 0.0
        %1726 = vmatpush1.xpose.msra.mxu0 0.0
        %1727 = vmatprep.subr.mxu0 0.0
        %1728 = vmatpush1.xpose.msra.mxu0 0.0
        %1729 = vmatprep.subr.mxu0 0.0
        %1730 = vmatpush1.xpose.msra.mxu0 0.0
        %1731 = vmatprep.subr.mxu0 0.0
        %1732 = vmatpush1.xpose.msra.mxu0 0.0
        %1733 = vmatprep.subr.mxu0 0.0
        %1734 = vmatpush1.xpose.msra.mxu0 0.0
        %1735 = vmatprep.subr.mxu0 0.0
        %1736 = vmatpush1.xpose.msra.mxu0 0.0
        %1737 = vmatprep.subr.mxu0 0.0
        %1738 = vmatpush1.xpose.msra.mxu0 0.0
        %1739 = vmatprep.subr.mxu0 0.0
        %1740 = vmatpush1.xpose.msra.mxu0 0.0
        %1741 = vmatprep.subr.mxu0 0.0
        %1742 = vmatpush1.xpose.msra.mxu0 0.0
        %1743 = vmatprep.subr.mxu0 0.0
        %1744 = vmatpush1.xpose.msra.mxu0 0.0
        %1745 = vmatprep.subr.mxu0 0.0
        %1746 = vmatpush1.xpose.msra.mxu0 0.0
        %1747 = vmatprep.subr.mxu0 0.0
        %1748 = vmatpush1.xpose.msra.mxu0 0.0
        %1749 = vmatprep.subr.mxu0 0.0
        %1750 = vmatpush1.xpose.msra.mxu0 0.0
        %1751 = vmatprep.subr.mxu0 0.0
        %1752 = vmatpush1.xpose.msra.mxu0 0.0
        %1753 = vmatprep.subr.mxu0 0.0
        %1754 = vmatpush1.xpose.msra.mxu0 0.0
        %1755 = vmatprep.subr.mxu0 0.0
        %1756 = vmatpush1.xpose.msra.mxu0 0.0
        %1757 = vmatprep.subr.mxu0 0.0
        %1758 = vmatpush1.xpose.msra.mxu0 0.0
        %1759 = vmatprep.subr.mxu0 0.0
        %1760 = vmatpush1.xpose.msra.mxu0 0.0
        %1761 = vmatprep.subr.mxu0 0.0
        %1762 = vmatpush1.xpose.msra.mxu0 0.0
        %1763 = vmatprep.mubr.f32.mxu0 0.0
        %1764 = vmatmul.mubr.f32.gmra.mrb[0].mxu0 %v1694
        %v1765 = vpop.f32.mrb[0].mxu0
        %v1766 = vadd.f32 0.0, %v1765
        %v1767 = vpop.f32.mrb[0].mxu0
        %1768 = vdwg.mxu0
        %v1769 = vmul.f32 %v1766, 0.25
        %v1770 = vsel %vm1136, %v1769, -inf
        %1771 = vmax.xlane.f32.xlu0 %v1770
        %v1772 = vpop.xlane.xlu0 %1771
        %v1773 = vsub.f32 %v1769, %v1772
        %v1774 = vmul.f32 %v1773, 1.442695
        %v1775 = vpow.pop %v1774
        %v1776 = vsel %vm1136, %v1775, 0.0
        %1777 = vadd.xlane.f32.xlu0 %v1776
        %v1778 = vpop.xlane.xlu0 %1777
        %v1779 = vrcp.pop %v1778
        %v1780 = vmul.f32 %v1775, %v1779
        %v1782 = vsel %vm1136, %v1780, 0
        %1784 = vmatprep.subr.mxu0 0.0
        %1785 = vmatpush1.msra.mxu0 %v1690
        %1786 = vmatprep.subr.mxu0 0.0
        %1787 = vmatpush1.msra.mxu0 0.0
        %1788 = vmatprep.subr.mxu0 0.0
        %1789 = vmatpush1.msra.mxu0 0.0
        %1790 = vmatprep.subr.mxu0 0.0
        %1791 = vmatpush1.msra.mxu0 0.0
        %1792 = vmatprep.subr.mxu0 0.0
        %1793 = vmatpush1.msra.mxu0 0.0
        %1794 = vmatprep.subr.mxu0 0.0
        %1795 = vmatpush1.msra.mxu0 0.0
        %1796 = vmatprep.subr.mxu0 0.0
        %1797 = vmatpush1.msra.mxu0 0.0
        %1798 = vmatprep.subr.mxu0 0.0
        %1799 = vmatpush1.msra.mxu0 0.0
        %1800 = vmatprep.subr.mxu0 0.0
        %1801 = vmatpush1.msra.mxu0 0.0
        %1802 = vmatprep.subr.mxu0 0.0
        %1803 = vmatpush1.msra.mxu0 0.0
        %1804 = vmatprep.subr.mxu0 0.0
        %1805 = vmatpush1.msra.mxu0 0.0
        %1806 = vmatprep.subr.mxu0 0.0
        %1807 = vmatpush1.msra.mxu0 0.0
        %1808 = vmatprep.subr.mxu0 0.0
        %1809 = vmatpush1.msra.mxu0 0.0
        %1810 = vmatprep.subr.mxu0 0.0
        %1811 = vmatpush1.msra.mxu0 0.0
        %1812 = vmatprep.subr.mxu0 0.0
        %1813 = vmatpush1.msra.mxu0 0.0
        %1814 = vmatprep.subr.mxu0 0.0
        %1815 = vmatpush1.msra.mxu0 0.0
        %1816 = vmatprep.subr.mxu0 0.0
        %1817 = vmatpush1.msra.mxu0 0.0
        %1818 = vmatprep.subr.mxu0 0.0
        %1819 = vmatpush1.msra.mxu0 0.0
        %1820 = vmatprep.subr.mxu0 0.0
        %1821 = vmatpush1.msra.mxu0 0.0
        %1822 = vmatprep.subr.mxu0 0.0
        %1823 = vmatpush1.msra.mxu0 0.0
        %1824 = vmatprep.subr.mxu0 0.0
        %1825 = vmatpush1.msra.mxu0 0.0
        %1826 = vmatprep.subr.mxu0 0.0
        %1827 = vmatpush1.msra.mxu0 0.0
        %1828 = vmatprep.subr.mxu0 0.0
        %1829 = vmatpush1.msra.mxu0 0.0
        %1830 = vmatprep.subr.mxu0 0.0
        %1831 = vmatpush1.msra.mxu0 0.0
        %1832 = vmatprep.subr.mxu0 0.0
        %1833 = vmatpush1.msra.mxu0 0.0
        %1834 = vmatprep.subr.mxu0 0.0
        %1835 = vmatpush1.msra.mxu0 0.0
        %1836 = vmatprep.subr.mxu0 0.0
        %1837 = vmatpush1.msra.mxu0 0.0
        %1838 = vmatprep.subr.mxu0 0.0
        %1839 = vmatpush1.msra.mxu0 0.0
        %1840 = vmatprep.subr.mxu0 0.0
        %1841 = vmatpush1.msra.mxu0 0.0
        %1842 = vmatprep.subr.mxu0 0.0
        %1843 = vmatpush1.msra.mxu0 0.0
        %1844 = vmatprep.subr.mxu0 0.0
        %1845 = vmatpush1.msra.mxu0 0.0
        %1846 = vmatprep.subr.mxu0 0.0
        %1847 = vmatpush1.msra.mxu0 0.0
        %1848 = vmatprep.mubr.f32.mxu0 0.0
        %1849 = vmatmul.mubr.f32.gmra.mrb[0].mxu0 %v1782
        %v1850 = vpop.f32.mrb[0].mxu0
        %v1851 = vadd.f32 0.0, %v1850
        %v1852 = vpop.f32.mrb[0].mxu0
        %1853 = vdwg.mxu0
        %1854 = vrot.lane.b32.xlu0 %v1550, 112
        %v1855 = vpop.permute.xlu0 %1854
        %1856 = vrot.lane.b32.xlu0 %v1620, 112
        %v1857 = vpop.permute.xlu0 %1856
        %v1858 = vsel %vm1058, %v1855, 0
        %v1860 = vsel %vm1058, %v1857, 0
        %1862 = vmatprep.subr.mxu0 0.0
        %1863 = vmatpush1.xpose.msra.mxu0 %v1860
        %1864 = vmatprep.subr.mxu0 0.0
        %1865 = vmatpush1.xpose.msra.mxu0 0.0
        %1866 = vmatprep.subr.mxu0 0.0
        %1867 = vmatpush1.xpose.msra.mxu0 0.0
        %1868 = vmatprep.subr.mxu0 0.0
        %1869 = vmatpush1.xpose.msra.mxu0 0.0
        %1870 = vmatprep.subr.mxu0 0.0
        %1871 = vmatpush1.xpose.msra.mxu0 0.0
        %1872 = vmatprep.subr.mxu0 0.0
        %1873 = vmatpush1.xpose.msra.mxu0 0.0
        %1874 = vmatprep.subr.mxu0 0.0
        %1875 = vmatpush1.xpose.msra.mxu0 0.0
        %1876 = vmatprep.subr.mxu0 0.0
        %1877 = vmatpush1.xpose.msra.mxu0 0.0
        %1878 = vmatprep.subr.mxu0 0.0
        %1879 = vmatpush1.xpose.msra.mxu0 0.0
        %1880 = vmatprep.subr.mxu0 0.0
        %1881 = vmatpush1.xpose.msra.mxu0 0.0
        %1882 = vmatprep.subr.mxu0 0.0
        %1883 = vmatpush1.xpose.msra.mxu0 0.0
        %1884 = vmatprep.subr.mxu0 0.0
        %1885 = vmatpush1.xpose.msra.mxu0 0.0
        %1886 = vmatprep.subr.mxu0 0.0
        %1887 = vmatpush1.xpose.msra.mxu0 0.0
        %1888 = vmatprep.subr.mxu0 0.0
        %1889 = vmatpush1.xpose.msra.mxu0 0.0
        %1890 = vmatprep.subr.mxu0 0.0
        %1891 = vmatpush1.xpose.msra.mxu0 0.0
        %1892 = vmatprep.subr.mxu0 0.0
        %1893 = vmatpush1.xpose.msra.mxu0 0.0
        %1894 = vmatprep.subr.mxu0 0.0
        %1895 = vmatpush1.xpose.msra.mxu0 0.0
        %1896 = vmatprep.subr.mxu0 0.0
        %1897 = vmatpush1.xpose.msra.mxu0 0.0
        %1898 = vmatprep.subr.mxu0 0.0
        %1899 = vmatpush1.xpose.msra.mxu0 0.0
        %1900 = vmatprep.subr.mxu0 0.0
        %1901 = vmatpush1.xpose.msra.mxu0 0.0
        %1902 = vmatprep.subr.mxu0 0.0
        %1903 = vmatpush1.xpose.msra.mxu0 0.0
        %1904 = vmatprep.subr.mxu0 0.0
        %1905 = vmatpush1.xpose.msra.mxu0 0.0
        %1906 = vmatprep.subr.mxu0 0.0
        %1907 = vmatpush1.xpose.msra.mxu0 0.0
        %1908 = vmatprep.subr.mxu0 0.0
        %1909 = vmatpush1.xpose.msra.mxu0 0.0
        %1910 = vmatprep.subr.mxu0 0.0
        %1911 = vmatpush1.xpose.msra.mxu0 0.0
        %1912 = vmatprep.subr.mxu0 0.0
        %1913 = vmatpush1.xpose.msra.mxu0 0.0
        %1914 = vmatprep.subr.mxu0 0.0
        %1915 = vmatpush1.xpose.msra.mxu0 0.0
        %1916 = vmatprep.subr.mxu0 0.0
        %1917 = vmatpush1.xpose.msra.mxu0 0.0
        %1918 = vmatprep.subr.mxu0 0.0
        %1919 = vmatpush1.xpose.msra.mxu0 0.0
        %1920 = vmatprep.subr.mxu0 0.0
        %1921 = vmatpush1.xpose.msra.mxu0 0.0
        %1922 = vmatprep.subr.mxu0 0.0
        %1923 = vmatpush1.xpose.msra.mxu0 0.0
        %1924 = vmatprep.subr.mxu0 0.0
        %1925 = vmatpush1.xpose.msra.mxu0 0.0
        %1926 = vmatprep.mubr.f32.mxu0 0.0
        %1927 = vmatmul.mubr.f32.gmra.mrb[0].mxu0 %v1858
        %v1928 = vpop.f32.mrb[0].mxu0
        %v1929 = vadd.f32 0.0, %v1928
        %v1930 = vpop.f32.mrb[0].mxu0
        %1931 = vdwg.mxu0
        %v1932 = vmul.f32 %v1929, 0.25
        %v1933 = vsel %vm1136, %v1932, -inf
        %1934 = vmax.xlane.f32.xlu0 %v1933
        %v1935 = vpop.xlane.xlu0 %1934
        %v1936 = vsub.f32 %v1932, %v1935
        %v1937 = vmul.f32 %v1936, 1.442695
        %v1938 = vpow.pop %v1937
        %v1939 = vsel %vm1136, %v1938, 0.0
        %1940 = vadd.xlane.f32.xlu0 %v1939
        %v1941 = vpop.xlane.xlu0 %1940
        %v1942 = vrcp.pop %v1941
        %v1943 = vmul.f32 %v1938, %v1942
        %1945 = vrot.lane.b32.xlu0 %v1690, 112
        %v1946 = vpop.permute.xlu0 %1945
        %v1949 = vsel %vm1136, %v1943, 0
        %1951 = vmatprep.subr.mxu0 0.0
        %1952 = vmatpush1.msra.mxu0 %v1946
        %1953 = vmatprep.subr.mxu0 0.0
        %1954 = vmatpush1.msra.mxu0 0.0
        %1955 = vmatprep.subr.mxu0 0.0
        %1956 = vmatpush1.msra.mxu0 0.0
        %1957 = vmatprep.subr.mxu0 0.0
        %1958 = vmatpush1.msra.mxu0 0.0
        %1959 = vmatprep.subr.mxu0 0.0
        %1960 = vmatpush1.msra.mxu0 0.0
        %1961 = vmatprep.subr.mxu0 0.0
        %1962 = vmatpush1.msra.mxu0 0.0
        %1963 = vmatprep.subr.mxu0 0.0
        %1964 = vmatpush1.msra.mxu0 0.0
        %1965 = vmatprep.subr.mxu0 0.0
        %1966 = vmatpush1.msra.mxu0 0.0
        %1967 = vmatprep.subr.mxu0 0.0
        %1968 = vmatpush1.msra.mxu0 0.0
        %1969 = vmatprep.subr.mxu0 0.0
        %1970 = vmatpush1.msra.mxu0 0.0
        %1971 = vmatprep.subr.mxu0 0.0
        %1972 = vmatpush1.msra.mxu0 0.0
        %1973 = vmatprep.subr.mxu0 0.0
        %1974 = vmatpush1.msra.mxu0 0.0
        %1975 = vmatprep.subr.mxu0 0.0
        %1976 = vmatpush1.msra.mxu0 0.0
        %1977 = vmatprep.subr.mxu0 0.0
        %1978 = vmatpush1.msra.mxu0 0.0
        %1979 = vmatprep.subr.mxu0 0.0
        %1980 = vmatpush1.msra.mxu0 0.0
        %1981 = vmatprep.subr.mxu0 0.0
        %1982 = vmatpush1.msra.mxu0 0.0
        %1983 = vmatprep.subr.mxu0 0.0
        %1984 = vmatpush1.msra.mxu0 0.0
        %1985 = vmatprep.subr.mxu0 0.0
        %1986 = vmatpush1.msra.mxu0 0.0
        %1987 = vmatprep.subr.mxu0 0.0
        %1988 = vmatpush1.msra.mxu0 0.0
        %1989 = vmatprep.subr.mxu0 0.0
        %1990 = vmatpush1.msra.mxu0 0.0
        %1991 = vmatprep.subr.mxu0 0.0
        %1992 = vmatpush1.msra.mxu0 0.0
        %1993 = vmatprep.subr.mxu0 0.0
        %1994 = vmatpush1.msra.mxu0 0.0
        %1995 = vmatprep.subr.mxu0 0.0
        %1996 = vmatpush1.msra.mxu0 0.0
        %1997 = vmatprep.subr.mxu0 0.0
        %1998 = vmatpush1.msra.mxu0 0.0
        %1999 = vmatprep.subr.mxu0 0.0
        %2000 = vmatpush1.msra.mxu0 0.0
        %2001 = vmatprep.subr.mxu0 0.0
        %2002 = vmatpush1.msra.mxu0 0.0
        %2003 = vmatprep.subr.mxu0 0.0
        %2004 = vmatpush1.msra.mxu0 0.0
        %2005 = vmatprep.subr.mxu0 0.0
        %2006 = vmatpush1.msra.mxu0 0.0
        %2007 = vmatprep.subr.mxu0 0.0
        %2008 = vmatpush1.msra.mxu0 0.0
        %2009 = vmatprep.subr.mxu0 0.0
        %2010 = vmatpush1.msra.mxu0 0.0
        %2011 = vmatprep.subr.mxu0 0.0
        %2012 = vmatpush1.msra.mxu0 0.0
        %2013 = vmatprep.subr.mxu0 0.0
        %2014 = vmatpush1.msra.mxu0 0.0
        %2015 = vmatprep.mubr.f32.mxu0 0.0
        %2016 = vmatmul.mubr.f32.gmra.mrb[0].mxu0 %v1949
        %v2017 = vpop.f32.mrb[0].mxu0
        %v2018 = vadd.f32 0.0, %v2017
        %v2019 = vpop.f32.mrb[0].mxu0
        %2020 = vdwg.mxu0
        %2022 = vrot.lane.b32.xlu0 %v2018, 16
        %v2023 = vpop.permute.xlu0 %2022
        %v2025 = vsel %vm1058, %v1851, %v2023
        %v2027 = vsel %vm844, %v2025, 0
        %2029 = vmatprep.subr.mxu0 0.0
        %2030 = vmatpush1.msra.mxu0 %v840
        %2031 = vmatprep.subr.mxu0 0.0
        %2032 = vmatpush1.msra.mxu0 %v841
        %2033 = vmatprep.subr.mxu0 0.0
        %2034 = vmatpush1.msra.mxu0 %v842
        %2035 = vmatprep.subr.mxu0 0.0
        %2036 = vmatpush1.msra.mxu0 %v843
        %2037 = vmatprep.subr.mxu0 0.0
        %2038 = vmatpush1.msra.mxu0 0.0
        %2039 = vmatprep.subr.mxu0 0.0
        %2040 = vmatpush1.msra.mxu0 0.0
        %2041 = vmatprep.subr.mxu0 0.0
        %2042 = vmatpush1.msra.mxu0 0.0
        %2043 = vmatprep.subr.mxu0 0.0
        %2044 = vmatpush1.msra.mxu0 0.0
        %2045 = vmatprep.subr.mxu0 0.0
        %2046 = vmatpush1.msra.mxu0 0.0
        %2047 = vmatprep.subr.mxu0 0.0
        %2048 = vmatpush1.msra.mxu0 0.0
        %2049 = vmatprep.subr.mxu0 0.0
        %2050 = vmatpush1.msra.mxu0 0.0
        %2051 = vmatprep.subr.mxu0 0.0
        %2052 = vmatpush1.msra.mxu0 0.0
        %2053 = vmatprep.subr.mxu0 0.0
        %2054 = vmatpush1.msra.mxu0 0.0
        %2055 = vmatprep.subr.mxu0 0.0
        %2056 = vmatpush1.msra.mxu0 0.0
        %2057 = vmatprep.subr.mxu0 0.0
        %2058 = vmatpush1.msra.mxu0 0.0
        %2059 = vmatprep.subr.mxu0 0.0
        %2060 = vmatpush1.msra.mxu0 0.0
        %2061 = vmatprep.subr.mxu0 0.0
        %2062 = vmatpush1.msra.mxu0 0.0
        %2063 = vmatprep.subr.mxu0 0.0
        %2064 = vmatpush1.msra.mxu0 0.0
        %2065 = vmatprep.subr.mxu0 0.0
        %2066 = vmatpush1.msra.mxu0 0.0
        %2067 = vmatprep.subr.mxu0 0.0
        %2068 = vmatpush1.msra.mxu0 0.0
        %2069 = vmatprep.subr.mxu0 0.0
        %2070 = vmatpush1.msra.mxu0 0.0
        %2071 = vmatprep.subr.mxu0 0.0
        %2072 = vmatpush1.msra.mxu0 0.0
        %2073 = vmatprep.subr.mxu0 0.0
        %2074 = vmatpush1.msra.mxu0 0.0
        %2075 = vmatprep.subr.mxu0 0.0
        %2076 = vmatpush1.msra.mxu0 0.0
        %2077 = vmatprep.subr.mxu0 0.0
        %2078 = vmatpush1.msra.mxu0 0.0
        %2079 = vmatprep.subr.mxu0 0.0
        %2080 = vmatpush1.msra.mxu0 0.0
        %2081 = vmatprep.subr.mxu0 0.0
        %2082 = vmatpush1.msra.mxu0 0.0
        %2083 = vmatprep.subr.mxu0 0.0
        %2084 = vmatpush1.msra.mxu0 0.0
        %2085 = vmatprep.subr.mxu0 0.0
        %2086 = vmatpush1.msra.mxu0 0.0
        %2087 = vmatprep.subr.mxu0 0.0
        %2088 = vmatpush1.msra.mxu0 0.0
        %2089 = vmatprep.subr.mxu0 0.0
        %2090 = vmatpush1.msra.mxu0 0.0
        %2091 = vmatprep.subr.mxu0 0.0
        %2092 = vmatpush1.msra.mxu0 0.0
        %2093 = vmatprep.mubr.f32.mxu0 0.0
        %2094 = vmatmul.mubr.f32.gmra.mrb[0].mxu0 %v2027
        %v2095 = vpop.f32.mrb[0].mxu0
        %v2096 = vadd.f32 %v827, %v2095
        %v2097 = vpop.f32.mrb[0].mxu0
        %2098 = vdwg.mxu0
        %v2099 = vsel %vm844, %v2096, 0.0
        %2100 = vadd.xlane.f32.xlu0 %v2099
        %v2101 = vpop.xlane.xlu0 %2100
        %v2102 = vmul.f32 %v2101, %v1469
        %v2103 = vsub.f32 %v2096, %v2102
        %v2104 = vmul.f32 %v2103, %v2103
        %v2105 = vsel %vm844, %v2104, 0.0
        %2106 = vadd.xlane.f32.xlu0 %v2105
        %v2107 = vpop.xlane.xlu0 %2106
        %v2108 = vmul.f32 %v2107, %v1469
        %v2109 = vadd.f32 %v2108, 1e-05
        %v2110 = vrsqrt.pop %v2109
        %v2111 = vmul.f32 %v2103, %v2110
        %v2112 = vld [vmem:[%s6] sm:$0xff]
        %v2113 = vld [vmem:[%s6 + $0x8] sm:$0xff]
        %v2114 = vld [vmem:[%s6 + $0x10] sm:$0xff]
        %v2115 = vld [vmem:[%s6 + $0x18] sm:$0xff]
        %v2116 = vld [vmem:[%s7] sm:$0xff]
        %v2117 = vld [vmem:[%s7 + $0x8] sm:$0xff]
        %v2118 = vld [vmem:[%s7 + $0x10] sm:$0xff]
        %v2119 = vld [vmem:[%s7 + $0x18] sm:$0xff]
        %v2120 = vld [vmem:[%s7 + $0x20] sm:$0xff]
        %v2121 = vld [vmem:[%s7 + $0x28] sm:$0xff]
        %v2122 = vld [vmem:[%s7 + $0x30] sm:$0xff]
        %v2123 = vld [vmem:[%s7 + $0x38] sm:$0xff]
        %v2125 = vsel %vm844, %v1479, 0
        %2127 = vmatprep.subr.mxu0 0.0
        %2128 = vmatpush1.msra.mxu0 %v2112
        %2129 = vmatprep.subr.mxu0 0.0
        %2130 = vmatpush1.msra.mxu0 %v2113
        %2131 = vmatprep.subr.mxu0 0.0
        %2132 = vmatpush1.msra.mxu0 %v2114
        %2133 = vmatprep.subr.mxu0 0.0
        %2134 = vmatpush1.msra.mxu0 %v2115
        %2135 = vmatprep.subr.mxu0 0.0
        %2136 = vmatpush1.msra.mxu0 0.0
        %2137 = vmatprep.subr.mxu0 0.0
        %2138 = vmatpush1.msra.mxu0 0.0
        %2139 = vmatprep.subr.mxu0 0.0
        %2140 = vmatpush1.msra.mxu0 0.0
        %2141 = vmatprep.subr.mxu0 0.0
        %2142 = vmatpush1.msra.mxu0 0.0
        %2143 = vmatprep.subr.mxu0 0.0
        %2144 = vmatpush1.msra.mxu0 0.0
        %2145 = vmatprep.subr.mxu0 0.0
        %2146 = vmatpush1.msra.mxu0 0.0
        %2147 = vmatprep.subr.mxu0 0.0
        %2148 = vmatpush1.msra.mxu0 0.0
        %2149 = vmatprep.subr.mxu0 0.0
        %2150 = vmatpush1.msra.mxu0 0.0
        %2151 = vmatprep.subr.mxu0 0.0
        %2152 = vmatpush1.msra.mxu0 0.0
        %2153 = vmatprep.subr.mxu0 0.0
        %2154 = vmatpush1.msra.mxu0 0.0
        %2155 = vmatprep.subr.mxu0 0.0
        %2156 = vmatpush1.msra.mxu0 0.0
        %2157 = vmatprep.subr.mxu0 0.0
        %2158 = vmatpush1.msra.mxu0 0.0
        %2159 = vmatprep.subr.mxu0 0.0
        %2160 = vmatpush1.msra.mxu0 0.0
        %2161 = vmatprep.subr.mxu0 0.0
        %2162 = vmatpush1.msra.mxu0 0.0
        %2163 = vmatprep.subr.mxu0 0.0
        %2164 = vmatpush1.msra.mxu0 0.0
        %2165 = vmatprep.subr.mxu0 0.0
        %2166 = vmatpush1.msra.mxu0 0.0
        %2167 = vmatprep.subr.mxu0 0.0
        %2168 = vmatpush1.msra.mxu0 0.0
        %2169 = vmatprep.subr.mxu0 0.0
        %2170 = vmatpush1.msra.mxu0 0.0
        %2171 = vmatprep.subr.mxu0 0.0
        %2172 = vmatpush1.msra.mxu0 0.0
        %2173 = vmatprep.subr.mxu0 0.0
        %2174 = vmatpush1.msra.mxu0 0.0
        %2175 = vmatprep.subr.mxu0 0.0
        %2176 = vmatpush1.msra.mxu0 0.0
        %2177 = vmatprep.subr.mxu0 0.0
        %2178 = vmatpush1.msra.mxu0 0.0
        %2179 = vmatprep.subr.mxu0 0.0
        %2180 = vmatpush1.msra.mxu0 0.0
        %2181 = vmatprep.subr.mxu0 0.0
        %2182 = vmatpush1.msra.mxu0 0.0
        %2183 = vmatprep.subr.mxu0 0.0
        %2184 = vmatpush1.msra.mxu0 0.0
        %2185 = vmatprep.subr.mxu0 0.0
        %2186 = vmatpush1.msra.mxu0 0.0
        %2187 = vmatprep.subr.mxu0 0.0
        %2188 = vmatpush1.msra.mxu0 0.0
        %2189 = vmatprep.subr.mxu0 0.0
        %2190 = vmatpush1.msra.mxu0 0.0
        %2191 = vmatprep.mubr.f32.mxu0 0.0
        %2192 = vmatmul.mubr.f32.gmra.mrb[0].mxu0 %v2125
        %v2193 = vpop.f32.mrb[0].mxu0
        %v2194 = vadd.f32 0.0, %v2193
        %v2195 = vpop.f32.mrb[0].mxu0
        %2196 = vdwg.mxu0
        %v2197 = vmax.f32 %v2194, 0.0
        %vm2198 = vcmask 523264
        %v2200 = vsel %vm2198, %v2197, 0
        %2202 = vmatprep.subr.mxu0 0.0
        %2203 = vmatpush1.msra.mxu0 %v2116
        %2204 = vmatprep.subr.mxu0 0.0
        %2205 = vmatpush1.msra.mxu0 %v2117
        %2206 = vmatprep.subr.mxu0 0.0
        %2207 = vmatpush1.msra.mxu0 %v2118
        %2208 = vmatprep.subr.mxu0 0.0
        %2209 = vmatpush1.msra.mxu0 %v2119
        %2210 = vmatprep.subr.mxu0 0.0
        %2211 = vmatpush1.msra.mxu0 %v2120
        %2212 = vmatprep.subr.mxu0 0.0
        %2213 = vmatpush1.msra.mxu0 %v2121
        %2214 = vmatprep.subr.mxu0 0.0
        %2215 = vmatpush1.msra.mxu0 %v2122
        %2216 = vmatprep.subr.mxu0 0.0
        %2217 = vmatpush1.msra.mxu0 %v2123
        %2218 = vmatprep.subr.mxu0 0.0
        %2219 = vmatpush1.msra.mxu0 0.0
        %2220 = vmatprep.subr.mxu0 0.0
        %2221 = vmatpush1.msra.mxu0 0.0
        %2222 = vmatprep.subr.mxu0 0.0
        %2223 = vmatpush1.msra.mxu0 0.0
        %2224 = vmatprep.subr.mxu0 0.0
        %2225 = vmatpush1.msra.mxu0 0.0
        %2226 = vmatprep.subr.mxu0 0.0
        %2227 = vmatpush1.msra.mxu0 0.0
        %2228 = vmatprep.subr.mxu0 0.0
        %2229 = vmatpush1.msra.mxu0 0.0
        %2230 = vmatprep.subr.mxu0 0.0
        %2231 = vmatpush1.msra.mxu0 0.0
        %2232 = vmatprep.subr.mxu0 0.0
        %2233 = vmatpush1.msra.mxu0 0.0
        %2234 = vmatprep.subr.mxu0 0.0
        %2235 = vmatpush1.msra.mxu0 0.0
        %2236 = vmatprep.subr.mxu0 0.0
        %2237 = vmatpush1.msra.mxu0 0.0
        %2238 = vmatprep.subr.mxu0 0.0
        %2239 = vmatpush1.msra.mxu0 0.0
        %2240 = vmatprep.subr.mxu0 0.0
        %2241 = vmatpush1.msra.mxu0 0.0
        %2242 = vmatprep.subr.mxu0 0.0
        %2243 = vmatpush1.msra.mxu0 0.0
        %2244 = vmatprep.subr.mxu0 0.0
        %2245 = vmatpush1.msra.mxu0 0.0
        %2246 = vmatprep.subr.mxu0 0.0
        %2247 = vmatpush1.msra.mxu0 0.0
        %2248 = vmatprep.subr.mxu0 0.0
        %2249 = vmatpush1.msra.mxu0 0.0
        %2250 = vmatprep.subr.mxu0 0.0
        %2251 = vmatpush1.msra.mxu0 0.0
        %2252 = vmatprep.subr.mxu0 0.0
        %2253 = vmatpush1.msra.mxu0 0.0
        %2254 = vmatprep.subr.mxu0 0.0
        %2255 = vmatpush1.msra.mxu0 0.0
        %2256 = vmatprep.subr.mxu0 0.0
        %2257 = vmatpush1.msra.mxu0 0.0
        %2258 = vmatprep.subr.mxu0 0.0
        %2259 = vmatpush1.msra.mxu0 0.0
        %2260 = vmatprep.subr.mxu0 0.0
        %2261 = vmatpush1.msra.mxu0 0.0
        %2262 = vmatprep.subr.mxu0 0.0
        %2263 = vmatpush1.msra.mxu0 0.0
        %2264 = vmatprep.subr.mxu0 0.0
        %2265 = vmatpush1.msra.mxu0 0.0
        %2266 = vmatprep.mubr.f32.mxu0 0.0
        %2267 = vmatmul.mubr.f32.gmra.mrb[0].mxu0 %v2200
        %v2268 = vpop.f32.mrb[0].mxu0
        %v2269 = vadd.f32 %v1479, %v2268
        %v2270 = vpop.f32.mrb[0].mxu0
        %2271 = vdwg.mxu0
        %v2272 = vsel %vm844, %v2269, 0.0
        %2273 = vadd.xlane.f32.xlu0 %v2272
        %v2274 = vpop.xlane.xlu0 %2273
        %v2275 = vmul.f32 %v2274, %v1469
        %v2276 = vsub.f32 %v2269, %v2275
        %v2277 = vmul.f32 %v2276, %v2276
        %v2278 = vsel %vm844, %v2277, 0.0
        %2279 = vadd.xlane.f32.xlu0 %v2278
        %v2280 = vpop.xlane.xlu0 %2279
        %v2281 = vmul.f32 %v2280, %v1469
        %v2282 = vadd.f32 %v2281, 1e-05
        %v2283 = vrsqrt.pop %v2282
        %v2284 = vmul.f32 %v2276, %v2283
        %v2285 = vld [vmem:[%s8] sm:$0xff]
        %v2286 = vld [vmem:[%s8 + $0x8] sm:$0xff]
        %v2287 = vld [vmem:[%s8 + $0x10] sm:$0xff]
        %v2288 = vld [vmem:[%s8 + $0x18] sm:$0xff]
        %v2289 = vld [vmem:[%s9] sm:$0xff]
        %v2290 = vld [vmem:[%s9 + $0x8] sm:$0xff]
        %v2291 = vld [vmem:[%s9 + $0x10] sm:$0xff]
        %v2292 = vld [vmem:[%s9 + $0x18] sm:$0xff]
        %v2293 = vld [vmem:[%s9 + $0x20] sm:$0xff]
        %v2294 = vld [vmem:[%s9 + $0x28] sm:$0xff]
        %v2295 = vld [vmem:[%s9 + $0x30] sm:$0xff]
        %v2296 = vld [vmem:[%s9 + $0x38] sm:$0xff]
        %v2298 = vsel %vm844, %v2111, 0
        %2300 = vmatprep.subr.mxu0 0.0
        %2301 = vmatpush1.msra.mxu0 %v2285
        %2302 = vmatprep.subr.mxu0 0.0
        %2303 = vmatpush1.msra.mxu0 %v2286
        %2304 = vmatprep.subr.mxu0 0.0
        %2305 = vmatpush1.msra.mxu0 %v2287
        %2306 = vmatprep.subr.mxu0 0.0
        %2307 = vmatpush1.msra.mxu0 %v2288
        %2308 = vmatprep.subr.mxu0 0.0
        %2309 = vmatpush1.msra.mxu0 0.0
        %2310 = vmatprep.subr.mxu0 0.0
        %2311 = vmatpush1.msra.mxu0 0.0
        %2312 = vmatprep.subr.mxu0 0.0
        %2313 = vmatpush1.msra.mxu0 0.0
        %2314 = vmatprep.subr.mxu0 0.0
        %2315 = vmatpush1.msra.mxu0 0.0
        %2316 = vmatprep.subr.mxu0 0.0
        %2317 = vmatpush1.msra.mxu0 0.0
        %2318 = vmatprep.subr.mxu0 0.0
        %2319 = vmatpush1.msra.mxu0 0.0
        %2320 = vmatprep.subr.mxu0 0.0
        %2321 = vmatpush1.msra.mxu0 0.0
        %2322 = vmatprep.subr.mxu0 0.0
        %2323 = vmatpush1.msra.mxu0 0.0
        %2324 = vmatprep.subr.mxu0 0.0
        %2325 = vmatpush1.msra.mxu0 0.0
        %2326 = vmatprep.subr.mxu0 0.0
        %2327 = vmatpush1.msra.mxu0 0.0
        %2328 = vmatprep.subr.mxu0 0.0
        %2329 = vmatpush1.msra.mxu0 0.0
        %2330 = vmatprep.subr.mxu0 0.0
        %2331 = vmatpush1.msra.mxu0 0.0
        %2332 = vmatprep.subr.mxu0 0.0
        %2333 = vmatpush1.msra.mxu0 0.0
        %2334 = vmatprep.subr.mxu0 0.0
        %2335 = vmatpush1.msra.mxu0 0.0
        %2336 = vmatprep.subr.mxu0 0.0
        %2337 = vmatpush1.msra.mxu0 0.0
        %2338 = vmatprep.subr.mxu0 0.0
        %2339 = vmatpush1.msra.mxu0 0.0
        %2340 = vmatprep.subr.mxu0 0.0
        %2341 = vmatpush1.msra.mxu0 0.0
        %2342 = vmatprep.subr.mxu0 0.0
        %2343 = vmatpush1.msra.mxu0 0.0
        %2344 = vmatprep.subr.mxu0 0.0
        %2345 = vmatpush1.msra.mxu0 0.0
        %2346 = vmatprep.subr.mxu0 0.0
        %2347 = vmatpush1.msra.mxu0 0.0
        %2348 = vmatprep.subr.mxu0 0.0
        %2349 = vmatpush1.msra.mxu0 0.0
        %2350 = vmatprep.subr.mxu0 0.0
        %2351 = vmatpush1.msra.mxu0 0.0
        %2352 = vmatprep.subr.mxu0 0.0
        %2353 = vmatpush1.msra.mxu0 0.0
        %2354 = vmatprep.subr.mxu0 0.0
        %2355 = vmatpush1.msra.mxu0 0.0
        %2356 = vmatprep.subr.mxu0 0.0
        %2357 = vmatpush1.msra.mxu0 0.0
        %2358 = vmatprep.subr.mxu0 0.0
        %2359 = vmatpush1.msra.mxu0 0.0
        %2360 = vmatprep.subr.mxu0 0.0
        %2361 = vmatpush1.msra.mxu0 0.0
        %2362 = vmatprep.subr.mxu0 0.0
        %2363 = vmatpush1.msra.mxu0 0.0
        %2364 = vmatprep.mubr.f32.mxu0 0.0
        %2365 = vmatmul.mubr.f32.gmra.mrb[0].mxu0 %v2298
        %v2366 = vpop.f32.mrb[0].mxu0
        %v2367 = vadd.f32 0.0, %v2366
        %v2368 = vpop.f32.mrb[0].mxu0
        %2369 = vdwg.mxu0
        %v2370 = vmax.f32 %v2367, 0.0
        %v2372 = vsel %vm2198, %v2370, 0
        %2374 = vmatprep.subr.mxu0 0.0
        %2375 = vmatpush1.msra.mxu0 %v2289
        %2376 = vmatprep.subr.mxu0 0.0
        %2377 = vmatpush1.msra.mxu0 %v2290
        %2378 = vmatprep.subr.mxu0 0.0
        %2379 = vmatpush1.msra.mxu0 %v2291
        %2380 = vmatprep.subr.mxu0 0.0
        %2381 = vmatpush1.msra.mxu0 %v2292
        %2382 = vmatprep.subr.mxu0 0.0
        %2383 = vmatpush1.msra.mxu0 %v2293
        %2384 = vmatprep.subr.mxu0 0.0
        %2385 = vmatpush1.msra.mxu0 %v2294
        %2386 = vmatprep.subr.mxu0 0.0
        %2387 = vmatpush1.msra.mxu0 %v2295
        %2388 = vmatprep.subr.mxu0 0.0
        %2389 = vmatpush1.msra.mxu0 %v2296
        %2390 = vmatprep.subr.mxu0 0.0
        %2391 = vmatpush1.msra.mxu0 0.0
        %2392 = vmatprep.subr.mxu0 0.0
        %2393 = vmatpush1.msra.mxu0 0.0
        %2394 = vmatprep.subr.mxu0 0.0
        %2395 = vmatpush1.msra.mxu0 0.0
        %2396 = vmatprep.subr.mxu0 0.0
        %2397 = vmatpush1.msra.mxu0 0.0
        %2398 = vmatprep.subr.mxu0 0.0
        %2399 = vmatpush1.msra.mxu0 0.0
        %2400 = vmatprep.subr.mxu0 0.0
        %2401 = vmatpush1.msra.mxu0 0.0
        %2402 = vmatprep.subr.mxu0 0.0
        %2403 = vmatpush1.msra.mxu0 0.0
        %2404 = vmatprep.subr.mxu0 0.0
        %2405 = vmatpush1.msra.mxu0 0.0
        %2406 = vmatprep.subr.mxu0 0.0
        %2407 = vmatpush1.msra.mxu0 0.0
        %2408 = vmatprep.subr.mxu0 0.0
        %2409 = vmatpush1.msra.mxu0 0.0
        %2410 = vmatprep.subr.mxu0 0.0
        %2411 = vmatpush1.msra.mxu0 0.0
        %2412 = vmatprep.subr.mxu0 0.0
        %2413 = vmatpush1.msra.mxu0 0.0
        %2414 = vmatprep.subr.mxu0 0.0
        %2415 = vmatpush1.msra.mxu0 0.0
        %2416 = vmatprep.subr.mxu0 0.0
        %2417 = vmatpush1.msra.mxu0 0.0
        %2418 = vmatprep.subr.mxu0 0.0
        %2419 = vmatpush1.msra.mxu0 0.0
        %2420 = vmatprep.subr.mxu0 0.0
        %2421 = vmatpush1.msra.mxu0 0.0
        %2422 = vmatprep.subr.mxu0 0.0
        %2423 = vmatpush1.msra.mxu0 0.0
        %2424 = vmatprep.subr.mxu0 0.0
        %2425 = vmatpush1.msra.mxu0 0.0
        %2426 = vmatprep.subr.mxu0 0.0
        %2427 = vmatpush1.msra.mxu0 0.0
        %2428 = vmatprep.subr.mxu0 0.0
        %2429 = vmatpush1.msra.mxu0 0.0
        %2430 = vmatprep.subr.mxu0 0.0
        %2431 = vmatpush1.msra.mxu0 0.0
        %2432 = vmatprep.subr.mxu0 0.0
        %2433 = vmatpush1.msra.mxu0 0.0
        %2434 = vmatprep.subr.mxu0 0.0
        %2435 = vmatpush1.msra.mxu0 0.0
        %2436 = vmatprep.subr.mxu0 0.0
        %2437 = vmatpush1.msra.mxu0 0.0
        %2438 = vmatprep.mubr.f32.mxu0 0.0
        %2439 = vmatmul.mubr.f32.gmra.mrb[0].mxu0 %v2372
        %v2440 = vpop.f32.mrb[0].mxu0
        %v2441 = vadd.f32 %v2111, %v2440
        %v2442 = vpop.f32.mrb[0].mxu0
        %2443 = vdwg.mxu0
        %v2444 = vsel %vm844, %v2441, 0.0
        %2445 = vadd.xlane.f32.xlu0 %v2444
        %v2446 = vpop.xlane.xlu0 %2445
        %v2447 = vmul.f32 %v2446, %v1469
        %v2448 = vsub.f32 %v2441, %v2447
        %v2449 = vmul.f32 %v2448, %v2448
        %v2450 = vsel %vm844, %v2449, 0.0
        %2451 = vadd.xlane.f32.xlu0 %v2450
        %v2452 = vpop.xlane.xlu0 %2451
        %v2453 = vmul.f32 %v2452, %v1469
        %v2454 = vadd.f32 %v2453, 1e-05
        %v2455 = vrsqrt.pop %v2454
        %v2456 = vmul.f32 %v2448, %v2455
        %v2457 = vld [vmem:[%s10] sm:$0xff]
        %v2458 = vld [vmem:[%s10 + $0x8] sm:$0xff]
        %v2459 = vld [vmem:[%s10 + $0x10] sm:$0xff]
        %v2460 = vld [vmem:[%s10 + $0x18] sm:$0xff]
        %v2461 = vld [vmem:[%s11] sm:$0xff]
        %v2462 = vld [vmem:[%s11 + $0x8] sm:$0xff]
        %v2463 = vld [vmem:[%s11 + $0x10] sm:$0xff]
        %v2464 = vld [vmem:[%s11 + $0x18] sm:$0xff]
        %v2465 = vld [vmem:[%s12] sm:$0xff]
        %v2466 = vld [vmem:[%s12 + $0x8] sm:$0xff]
        %v2467 = vld [vmem:[%s12 + $0x10] sm:$0xff]
        %v2468 = vld [vmem:[%s12 + $0x18] sm:$0xff]
        %v2469 = vld [vmem:[#allocation7] sm:$0xff]
        %v2470 = vld [vmem:[#allocation7 + $0x8] sm:$0xff]
        %v2471 = vld [vmem:[#allocation7 + $0x10] sm:$0xff]
        %v2472 = vld [vmem:[#allocation7 + $0x18] sm:$0xff]
        %v2473 = vld [vmem:[#allocation8] sm:$0xff]
        %v2474 = vld [vmem:[#allocation8 + $0x8] sm:$0xff]
        %v2475 = vld [vmem:[#allocation8 + $0x10] sm:$0xff]
        %v2476 = vld [vmem:[#allocation8 + $0x18] sm:$0xff]
        %v2477 = vld [vmem:[#allocation10] sm:$0xff]
        %v2478 = vld [vmem:[#allocation10 + $0x8] sm:$0xff]
        %v2479 = vld [vmem:[#allocation10 + $0x10] sm:$0xff]
        %v2480 = vld [vmem:[#allocation10 + $0x18] sm:$0xff]
        %v2482 = vsel %vm844, %v2284, 0
        %2484 = vmatprep.subr.mxu0 0.0
        %2485 = vmatpush1.msra.mxu0 %v2457
        %2486 = vmatprep.subr.mxu0 0.0
        %2487 = vmatpush1.msra.mxu0 %v2458
        %2488 = vmatprep.subr.mxu0 0.0
        %2489 = vmatpush1.msra.mxu0 %v2459
        %2490 = vmatprep.subr.mxu0 0.0
        %2491 = vmatpush1.msra.mxu0 %v2460
        %2492 = vmatprep.subr.mxu0 0.0
        %2493 = vmatpush1.msra.mxu0 0.0
        %2494 = vmatprep.subr.mxu0 0.0
        %2495 = vmatpush1.msra.mxu0 0.0
        %2496 = vmatprep.subr.mxu0 0.0
        %2497 = vmatpush1.msra.mxu0 0.0
        %2498 = vmatprep.subr.mxu0 0.0
        %2499 = vmatpush1.msra.mxu0 0.0
        %2500 = vmatprep.subr.mxu0 0.0
        %2501 = vmatpush1.msra.mxu0 0.0
        %2502 = vmatprep.subr.mxu0 0.0
        %2503 = vmatpush1.msra.mxu0 0.0
        %2504 = vmatprep.subr.mxu0 0.0
        %2505 = vmatpush1.msra.mxu0 0.0
        %2506 = vmatprep.subr.mxu0 0.0
        %2507 = vmatpush1.msra.mxu0 0.0
        %2508 = vmatprep.subr.mxu0 0.0
        %2509 = vmatpush1.msra.mxu0 0.0
        %2510 = vmatprep.subr.mxu0 0.0
        %2511 = vmatpush1.msra.mxu0 0.0
        %2512 = vmatprep.subr.mxu0 0.0
        %2513 = vmatpush1.msra.mxu0 0.0
        %2514 = vmatprep.subr.mxu0 0.0
        %2515 = vmatpush1.msra.mxu0 0.0
        %2516 = vmatprep.subr.mxu0 0.0
        %2517 = vmatpush1.msra.mxu0 0.0
        %2518 = vmatprep.subr.mxu0 0.0
        %2519 = vmatpush1.msra.mxu0 0.0
        %2520 = vmatprep.subr.mxu0 0.0
        %2521 = vmatpush1.msra.mxu0 0.0
        %2522 = vmatprep.subr.mxu0 0.0
        %2523 = vmatpush1.msra.mxu0 0.0
        %2524 = vmatprep.subr.mxu0 0.0
        %2525 = vmatpush1.msra.mxu0 0.0
        %2526 = vmatprep.subr.mxu0 0.0
        %2527 = vmatpush1.msra.mxu0 0.0
        %2528 = vmatprep.subr.mxu0 0.0
        %2529 = vmatpush1.msra.mxu0 0.0
        %2530 = vmatprep.subr.mxu0 0.0
        %2531 = vmatpush1.msra.mxu0 0.0
        %2532 = vmatprep.subr.mxu0 0.0
        %2533 = vmatpush1.msra.mxu0 0.0
        %2534 = vmatprep.subr.mxu0 0.0
        %2535 = vmatpush1.msra.mxu0 0.0
        %2536 = vmatprep.subr.mxu0 0.0
        %2537 = vmatpush1.msra.mxu0 0.0
        %2538 = vmatprep.subr.mxu0 0.0
        %2539 = vmatpush1.msra.mxu0 0.0
        %2540 = vmatprep.subr.mxu0 0.0
        %2541 = vmatpush1.msra.mxu0 0.0
        %2542 = vmatprep.subr.mxu0 0.0
        %2543 = vmatpush1.msra.mxu0 0.0
        %2544 = vmatprep.subr.mxu0 0.0
        %2545 = vmatpush1.msra.mxu0 0.0
        %2546 = vmatprep.subr.mxu0 0.0
        %2547 = vmatpush1.msra.mxu0 0.0
        %2548 = vmatprep.mubr.f32.mxu0 0.0
        %2549 = vmatmul.mubr.f32.gmra.mrb[0].mxu0 %v2482
        %v2550 = vpop.f32.mrb[0].mxu0
        %v2551 = vadd.f32 0.0, %v2550
        %v2552 = vpop.f32.mrb[0].mxu0
        %2553 = vdwg.mxu0
        %v2555 = vsel %vm844, %v2456, 0
        %2557 = vmatprep.subr.mxu0 0.0
        %2558 = vmatpush1.msra.mxu0 %v2461
        %2559 = vmatprep.subr.mxu0 0.0
        %2560 = vmatpush1.msra.mxu0 %v2462
        %2561 = vmatprep.subr.mxu0 0.0
        %2562 = vmatpush1.msra.mxu0 %v2463
        %2563 = vmatprep.subr.mxu0 0.0
        %2564 = vmatpush1.msra.mxu0 %v2464
        %2565 = vmatprep.subr.mxu0 0.0
        %2566 = vmatpush1.msra.mxu0 0.0
        %2567 = vmatprep.subr.mxu0 0.0
        %2568 = vmatpush1.msra.mxu0 0.0
        %2569 = vmatprep.subr.mxu0 0.0
        %2570 = vmatpush1.msra.mxu0 0.0
        %2571 = vmatprep.subr.mxu0 0.0
        %2572 = vmatpush1.msra.mxu0 0.0
        %2573 = vmatprep.subr.mxu0 0.0
        %2574 = vmatpush1.msra.mxu0 0.0
        %2575 = vmatprep.subr.mxu0 0.0
        %2576 = vmatpush1.msra.mxu0 0.0
        %2577 = vmatprep.subr.mxu0 0.0
        %2578 = vmatpush1.msra.mxu0 0.0
        %2579 = vmatprep.subr.mxu0 0.0
        %2580 = vmatpush1.msra.mxu0 0.0
        %2581 = vmatprep.subr.mxu0 0.0
        %2582 = vmatpush1.msra.mxu0 0.0
        %2583 = vmatprep.subr.mxu0 0.0
        %2584 = vmatpush1.msra.mxu0 0.0
        %2585 = vmatprep.subr.mxu0 0.0
        %2586 = vmatpush1.msra.mxu0 0.0
        %2587 = vmatprep.subr.mxu0 0.0
        %2588 = vmatpush1.msra.mxu0 0.0
        %2589 = vmatprep.subr.mxu0 0.0
        %2590 = vmatpush1.msra.mxu0 0.0
        %2591 = vmatprep.subr.mxu0 0.0
        %2592 = vmatpush1.msra.mxu0 0.0
        %2593 = vmatprep.subr.mxu0 0.0
        %2594 = vmatpush1.msra.mxu0 0.0
        %2595 = vmatprep.subr.mxu0 0.0
        %2596 = vmatpush1.msra.mxu0 0.0
        %2597 = vmatprep.subr.mxu0 0.0
        %2598 = vmatpush1.msra.mxu0 0.0
        %2599 = vmatprep.subr.mxu0 0.0
        %2600 = vmatpush1.msra.mxu0 0.0
        %2601 = vmatprep.subr.mxu0 0.0
        %2602 = vmatpush1.msra.mxu0 0.0
        %2603 = vmatprep.subr.mxu0 0.0
        %2604 = vmatpush1.msra.mxu0 0.0
        %2605 = vmatprep.subr.mxu0 0.0
        %2606 = vmatpush1.msra.mxu0 0.0
        %2607 = vmatprep.subr.mxu0 0.0
        %2608 = vmatpush1.msra.mxu0 0.0
        %2609 = vmatprep.subr.mxu0 0.0
        %2610 = vmatpush1.msra.mxu0 0.0
        %2611 = vmatprep.subr.mxu0 0.0
        %2612 = vmatpush1.msra.mxu0 0.0
        %2613 = vmatprep.subr.mxu0 0.0
        %2614 = vmatpush1.msra.mxu0 0.0
        %2615 = vmatprep.subr.mxu0 0.0
        %2616 = vmatpush1.msra.mxu0 0.0
        %2617 = vmatprep.subr.mxu0 0.0
        %2618 = vmatpush1.msra.mxu0 0.0
        %2619 = vmatprep.subr.mxu0 0.0
        %2620 = vmatpush1.msra.mxu0 0.0
        %2621 = vmatprep.mubr.f32.mxu0 0.0
        %2622 = vmatmul.mubr.f32.gmra.mrb[0].mxu0 %v2555
        %v2623 = vpop.f32.mrb[0].mxu0
        %v2624 = vadd.f32 0.0, %v2623
        %v2625 = vpop.f32.mrb[0].mxu0
        %2626 = vdwg.mxu0
        %2627 = vmatprep.subr.mxu0 0.0
        %2628 = vmatpush1.msra.mxu0 %v2465
        %2629 = vmatprep.subr.mxu0 0.0
        %2630 = vmatpush1.msra.mxu0 %v2466
        %2631 = vmatprep.subr.mxu0 0.0
        %2632 = vmatpush1.msra.mxu0 %v2467
        %2633 = vmatprep.subr.mxu0 0.0
        %2634 = vmatpush1.msra.mxu0 %v2468
        %2635 = vmatprep.subr.mxu0 0.0
        %2636 = vmatpush1.msra.mxu0 0.0
        %2637 = vmatprep.subr.mxu0 0.0
        %2638 = vmatpush1.msra.mxu0 0.0
        %2639 = vmatprep.subr.mxu0 0.0
        %2640 = vmatpush1.msra.mxu0 0.0
        %2641 = vmatprep.subr.mxu0 0.0
        %2642 = vmatpush1.msra.mxu0 0.0
        %2643 = vmatprep.subr.mxu0 0.0
        %2644 = vmatpush1.msra.mxu0 0.0
        %2645 = vmatprep.subr.mxu0 0.0
        %2646 = vmatpush1.msra.mxu0 0.0
        %2647 = vmatprep.subr.mxu0 0.0
        %2648 = vmatpush1.msra.mxu0 0.0
        %2649 = vmatprep.subr.mxu0 0.0
        %2650 = vmatpush1.msra.mxu0 0.0
        %2651 = vmatprep.subr.mxu0 0.0
        %2652 = vmatpush1.msra.mxu0 0.0
        %2653 = vmatprep.subr.mxu0 0.0
        %2654 = vmatpush1.msra.mxu0 0.0
        %2655 = vmatprep.subr.mxu0 0.0
        %2656 = vmatpush1.msra.mxu0 0.0
        %2657 = vmatprep.subr.mxu0 0.0
        %2658 = vmatpush1.msra.mxu0 0.0
        %2659 = vmatprep.subr.mxu0 0.0
        %2660 = vmatpush1.msra.mxu0 0.0
        %2661 = vmatprep.subr.mxu0 0.0
        %2662 = vmatpush1.msra.mxu0 0.0
        %2663 = vmatprep.subr.mxu0 0.0
        %2664 = vmatpush1.msra.mxu0 0.0
        %2665 = vmatprep.subr.mxu0 0.0
        %2666 = vmatpush1.msra.mxu0 0.0
        %2667 = vmatprep.subr.mxu0 0.0
        %2668 = vmatpush1.msra.mxu0 0.0
        %2669 = vmatprep.subr.mxu0 0.0
        %2670 = vmatpush1.msra.mxu0 0.0
        %2671 = vmatprep.subr.mxu0 0.0
        %2672 = vmatpush1.msra.mxu0 0.0
        %2673 = vmatprep.subr.mxu0 0.0
        %2674 = vmatpush1.msra.mxu0 0.0
        %2675 = vmatprep.subr.mxu0 0.0
        %2676 = vmatpush1.msra.mxu0 0.0
        %2677 = vmatprep.subr.mxu0 0.0
        %2678 = vmatpush1.msra.mxu0 0.0
        %2679 = vmatprep.subr.mxu0 0.0
        %2680 = vmatpush1.msra.mxu0 0.0
        %2681 = vmatprep.subr.mxu0 0.0
        %2682 = vmatpush1.msra.mxu0 0.0
        %2683 = vmatprep.subr.mxu0 0.0
        %2684 = vmatpush1.msra.mxu0 0.0
        %2685 = vmatprep.subr.mxu0 0.0
        %2686 = vmatpush1.msra.mxu0 0.0
        %2687 = vmatprep.subr.mxu0 0.0
        %2688 = vmatpush1.msra.mxu0 0.0
        %2689 = vmatprep.subr.mxu0 0.0
        %2690 = vmatpush1.msra.mxu0 0.0
        %2691 = vmatprep.mubr.f32.mxu0 0.0
        %2692 = vmatmul.mubr.f32.gmra.mrb[0].mxu0 %v2482
        %v2693 = vpop.f32.mrb[0].mxu0
        %v2694 = vadd.f32 0.0, %v2693
        %v2695 = vpop.f32.mrb[0].mxu0
        %2696 = vdwg.mxu0
        %2697 = vmatprep.subr.mxu0 0.0
        %2698 = vmatpush1.msra.mxu0 %v2469
        %2699 = vmatprep.subr.mxu0 0.0
        %2700 = vmatpush1.msra.mxu0 %v2470
        %2701 = vmatprep.subr.mxu0 0.0
        %2702 = vmatpush1.msra.mxu0 %v2471
        %2703 = vmatprep.subr.mxu0 0.0
        %2704 = vmatpush1.msra.mxu0 %v2472
        %2705 = vmatprep.subr.mxu0 0.0
        %2706 = vmatpush1.msra.mxu0 0.0
        %2707 = vmatprep.subr.mxu0 0.0
        %2708 = vmatpush1.msra.mxu0 0.0
        %2709 = vmatprep.subr.mxu0 0.0
        %2710 = vmatpush1.msra.mxu0 0.0
        %2711 = vmatprep.subr.mxu0 0.0
        %2712 = vmatpush1.msra.mxu0 0.0
        %2713 = vmatprep.subr.mxu0 0.0
        %2714 = vmatpush1.msra.mxu0 0.0
        %2715 = vmatprep.subr.mxu0 0.0
        %2716 = vmatpush1.msra.mxu0 0.0
        %2717 = vmatprep.subr.mxu0 0.0
        %2718 = vmatpush1.msra.mxu0 0.0
        %2719 = vmatprep.subr.mxu0 0.0
        %2720 = vmatpush1.msra.mxu0 0.0
        %2721 = vmatprep.subr.mxu0 0.0
        %2722 = vmatpush1.msra.mxu0 0.0
        %2723 = vmatprep.subr.mxu0 0.0
        %2724 = vmatpush1.msra.mxu0 0.0
        %2725 = vmatprep.subr.mxu0 0.0
        %2726 = vmatpush1.msra.mxu0 0.0
        %2727 = vmatprep.subr.mxu0 0.0
        %2728 = vmatpush1.msra.mxu0 0.0
        %2729 = vmatprep.subr.mxu0 0.0
        %2730 = vmatpush1.msra.mxu0 0.0
        %2731 = vmatprep.subr.mxu0 0.0
        %2732 = vmatpush1.msra.mxu0 0.0
        %2733 = vmatprep.subr.mxu0 0.0
        %2734 = vmatpush1.msra.mxu0 0.0
        %2735 = vmatprep.subr.mxu0 0.0
        %2736 = vmatpush1.msra.mxu0 0.0
        %2737 = vmatprep.subr.mxu0 0.0
        %2738 = vmatpush1.msra.mxu0 0.0
        %2739 = vmatprep.subr.mxu0 0.0
        %2740 = vmatpush1.msra.mxu0 0.0
        %2741 = vmatprep.subr.mxu0 0.0
        %2742 = vmatpush1.msra.mxu0 0.0
        %2743 = vmatprep.subr.mxu0 0.0
        %2744 = vmatpush1.msra.mxu0 0.0
        %2745 = vmatprep.subr.mxu0 0.0
        %2746 = vmatpush1.msra.mxu0 0.0
        %2747 = vmatprep.subr.mxu0 0.0
        %2748 = vmatpush1.msra.mxu0 0.0
        %2749 = vmatprep.subr.mxu0 0.0
        %2750 = vmatpush1.msra.mxu0 0.0
        %2751 = vmatprep.subr.mxu0 0.0
        %2752 = vmatpush1.msra.mxu0 0.0
        %2753 = vmatprep.subr.mxu0 0.0
        %2754 = vmatpush1.msra.mxu0 0.0
        %2755 = vmatprep.subr.mxu0 0.0
        %2756 = vmatpush1.msra.mxu0 0.0
        %2757 = vmatprep.subr.mxu0 0.0
        %2758 = vmatpush1.msra.mxu0 0.0
        %2759 = vmatprep.subr.mxu0 0.0
        %2760 = vmatpush1.msra.mxu0 0.0
        %2761 = vmatprep.mubr.f32.mxu0 0.0
        %2762 = vmatmul.mubr.f32.gmra.mrb[0].mxu0 %v2555
        %v2763 = vpop.f32.mrb[0].mxu0
        %v2764 = vadd.f32 0.0, %v2763
        %v2765 = vpop.f32.mrb[0].mxu0
        %2766 = vdwg.mxu0
        %v2768 = vsel %vm1058, %v2551, 0
        %v2771 = vsel %vm1058, %v2624, 0
        %2773 = vmatprep.subr.mxu0 0.0
        %2774 = vmatpush1.xpose.msra.mxu0 %v2771
        %2775 = vmatprep.subr.mxu0 0.0
        %2776 = vmatpush1.xpose.msra.mxu0 0.0
        %2777 = vmatprep.subr.mxu0 0.0
        %2778 = vmatpush1.xpose.msra.mxu0 0.0
        %2779 = vmatprep.subr.mxu0 0.0
        %2780 = vmatpush1.xpose.msra.mxu0 0.0
        %2781 = vmatprep.subr.mxu0 0.0
        %2782 = vmatpush1.xpose.msra.mxu0 0.0
        %2783 = vmatprep.subr.mxu0 0.0
        %2784 = vmatpush1.xpose.msra.mxu0 0.0
        %2785 = vmatprep.subr.mxu0 0.0
        %2786 = vmatpush1.xpose.msra.mxu0 0.0
        %2787 = vmatprep.subr.mxu0 0.0
        %2788 = vmatpush1.xpose.msra.mxu0 0.0
        %2789 = vmatprep.subr.mxu0 0.0
        %2790 = vmatpush1.xpose.msra.mxu0 0.0
        %2791 = vmatprep.subr.mxu0 0.0
        %2792 = vmatpush1.xpose.msra.mxu0 0.0
        %2793 = vmatprep.subr.mxu0 0.0
        %2794 = vmatpush1.xpose.msra.mxu0 0.0
        %2795 = vmatprep.subr.mxu0 0.0
        %2796 = vmatpush1.xpose.msra.mxu0 0.0
        %2797 = vmatprep.subr.mxu0 0.0
        %2798 = vmatpush1.xpose.msra.mxu0 0.0
        %2799 = vmatprep.subr.mxu0 0.0
        %2800 = vmatpush1.xpose.msra.mxu0 0.0
        %2801 = vmatprep.subr.mxu0 0.0
        %2802 = vmatpush1.xpose.msra.mxu0 0.0
        %2803 = vmatprep.subr.mxu0 0.0
        %2804 = vmatpush1.xpose.msra.mxu0 0.0
        %2805 = vmatprep.subr.mxu0 0.0
        %2806 = vmatpush1.xpose.msra.mxu0 0.0
        %2807 = vmatprep.subr.mxu0 0.0
        %2808 = vmatpush1.xpose.msra.mxu0 0.0
        %2809 = vmatprep.subr.mxu0 0.0
        %2810 = vmatpush1.xpose.msra.mxu0 0.0
        %2811 = vmatprep.subr.mxu0 0.0
        %2812 = vmatpush1.xpose.msra.mxu0 0.0
        %2813 = vmatprep.subr.mxu0 0.0
        %2814 = vmatpush1.xpose.msra.mxu0 0.0
        %2815 = vmatprep.subr.mxu0 0.0
        %2816 = vmatpush1.xpose.msra.mxu0 0.0
        %2817 = vmatprep.subr.mxu0 0.0
        %2818 = vmatpush1.xpose.msra.mxu0 0.0
        %2819 = vmatprep.subr.mxu0 0.0
        %2820 = vmatpush1.xpose.msra.mxu0 0.0
        %2821 = vmatprep.subr.mxu0 0.0
        %2822 = vmatpush1.xpose.msra.mxu0 0.0
        %2823 = vmatprep.subr.mxu0 0.0
        %2824 = vmatpush1.xpose.msra.mxu0 0.0
        %2825 = vmatprep.subr.mxu0 0.0
        %2826 = vmatpush1.xpose.msra.mxu0 0.0
        %2827 = vmatprep.subr.mxu0 0.0
        %2828 = vmatpush1.xpose.msra.mxu0 0.0
        %2829 = vmatprep.subr.mxu0 0.0
        %2830 = vmatpush1.xpose.msra.mxu0 0.0
        %2831 = vmatprep.subr.mxu0 0.0
        %2832 = vmatpush1.xpose.msra.mxu0 0.0
        %2833 = vmatprep.subr.mxu0 0.0
        %2834 = vmatpush1.xpose.msra.mxu0 0.0
        %2835 = vmatprep.subr.mxu0 0.0
        %2836 = vmatpush1.xpose.msra.mxu0 0.0
        %2837 = vmatprep.mubr.f32.mxu0 0.0
        %2838 = vmatmul.mubr.f32.gmra.mrb[0].mxu0 %v2768
        %v2839 = vpop.f32.mrb[0].mxu0
        %v2840 = vadd.f32 0.0, %v2839
        %v2841 = vpop.f32.mrb[0].mxu0
        %2842 = vdwg.mxu0
        %v2843 = vmul.f32 %v2840, 0.25
        %v2844 = vsel %vm1136, %v2843, -inf
        %2845 = vmax.xlane.f32.xlu0 %v2844
        %v2846 = vpop.xlane.xlu0 %2845
        %v2847 = vsub.f32 %v2843, %v2846
        %v2848 = vmul.f32 %v2847, 1.442695
        %v2849 = vpow.pop %v2848
        %v2850 = vsel %vm1136, %v2849, 0.0
        %2851 = vadd.xlane.f32.xlu0 %v2850
        %v2852 = vpop.xlane.xlu0 %2851
        %v2853 = vrcp.pop %v2852
        %v2854 = vmul.f32 %v2849, %v2853
        %2855 = vst.msk [vmem:[%s825] sm:$0xff] %vm1136, %v2854
        %v2857 = vsel %vm1136, %v2854, 0
        %2859 = vmatprep.subr.mxu0 0.0
        %2860 = vmatpush1.msra.mxu0 %v2694
        %2861 = vmatprep.subr.mxu0 0.0
        %2862 = vmatpush1.msra.mxu0 0.0
        %2863 = vmatprep.subr.mxu0 0.0
        %2864 = vmatpush1.msra.mxu0 0.0
        %2865 = vmatprep.subr.mxu0 0.0
        %2866 = vmatpush1.msra.mxu0 0.0
        %2867 = vmatprep.subr.mxu0 0.0
        %2868 = vmatpush1.msra.mxu0 0.0
        %2869 = vmatprep.subr.mxu0 0.0
        %2870 = vmatpush1.msra.mxu0 0.0
        %2871 = vmatprep.subr.mxu0 0.0
        %2872 = vmatpush1.msra.mxu0 0.0
        %2873 = vmatprep.subr.mxu0 0.0
        %2874 = vmatpush1.msra.mxu0 0.0
        %2875 = vmatprep.subr.mxu0 0.0
        %2876 = vmatpush1.msra.mxu0 0.0
        %2877 = vmatprep.subr.mxu0 0.0
        %2878 = vmatpush1.msra.mxu0 0.0
        %2879 = vmatprep.subr.mxu0 0.0
        %2880 = vmatpush1.msra.mxu0 0.0
        %2881 = vmatprep.subr.mxu0 0.0
        %2882 = vmatpush1.msra.mxu0 0.0
        %2883 = vmatprep.subr.mxu0 0.0
        %2884 = vmatpush1.msra.mxu0 0.0
        %2885 = vmatprep.subr.mxu0 0.0
        %2886 = vmatpush1.msra.mxu0 0.0
        %2887 = vmatprep.subr.mxu0 0.0
        %2888 = vmatpush1.msra.mxu0 0.0
        %2889 = vmatprep.subr.mxu0 0.0
        %2890 = vmatpush1.msra.mxu0 0.0
        %2891 = vmatprep.subr.mxu0 0.0
        %2892 = vmatpush1.msra.mxu0 0.0
        %2893 = vmatprep.subr.mxu0 0.0
        %2894 = vmatpush1.msra.mxu0 0.0
        %2895 = vmatprep.subr.mxu0 0.0
        %2896 = vmatpush1.msra.mxu0 0.0
        %2897 = vmatprep.subr.mxu0 0.0
        %2898 = vmatpush1.msra.mxu0 0.0
        %2899 = vmatprep.subr.mxu0 0.0
        %2900 = vmatpush1.msra.mxu0 0.0
        %2901 = vmatprep.subr.mxu0 0.0
        %2902 = vmatpush1.msra.mxu0 0.0
        %2903 = vmatprep.subr.mxu0 0.0
        %2904 = vmatpush1.msra.mxu0 0.0
        %2905 = vmatprep.subr.mxu0 0.0
        %2906 = vmatpush1.msra.mxu0 0.0
        %2907 = vmatprep.subr.mxu0 0.0
        %2908 = vmatpush1.msra.mxu0 0.0
        %2909 = vmatprep.subr.mxu0 0.0
        %2910 = vmatpush1.msra.mxu0 0.0
        %2911 = vmatprep.subr.mxu0 0.0
        %2912 = vmatpush1.msra.mxu0 0.0
        %2913 = vmatprep.subr.mxu0 0.0
        %2914 = vmatpush1.msra.mxu0 0.0
        %2915 = vmatprep.subr.mxu0 0.0
        %2916 = vmatpush1.msra.mxu0 0.0
        %2917 = vmatprep.subr.mxu0 0.0
        %2918 = vmatpush1.msra.mxu0 0.0
        %2919 = vmatprep.subr.mxu0 0.0
        %2920 = vmatpush1.msra.mxu0 0.0
        %2921 = vmatprep.subr.mxu0 0.0
        %2922 = vmatpush1.msra.mxu0 0.0
        %2923 = vmatprep.mubr.f32.mxu0 0.0
        %2924 = vmatmul.mubr.f32.gmra.mrb[0].mxu0 %v2857
        %v2925 = vpop.f32.mrb[0].mxu0
        %v2926 = vadd.f32 0.0, %v2925
        %v2927 = vpop.f32.mrb[0].mxu0
        %2928 = vdwg.mxu0
        %2929 = vmatprep.subr.mxu0 0.0
        %2930 = vmatpush1.msra.mxu0 %v2764
        %2931 = vmatprep.subr.mxu0 0.0
        %2932 = vmatpush1.msra.mxu0 0.0
        %2933 = vmatprep.subr.mxu0 0.0
        %2934 = vmatpush1.msra.mxu0 0.0
        %2935 = vmatprep.subr.mxu0 0.0
        %2936 = vmatpush1.msra.mxu0 0.0
        %2937 = vmatprep.subr.mxu0 0.0
        %2938 = vmatpush1.msra.mxu0 0.0
        %2939 = vmatprep.subr.mxu0 0.0
        %2940 = vmatpush1.msra.mxu0 0.0
        %2941 = vmatprep.subr.mxu0 0.0
        %2942 = vmatpush1.msra.mxu0 0.0
        %2943 = vmatprep.subr.mxu0 0.0
        %2944 = vmatpush1.msra.mxu0 0.0
        %2945 = vmatprep.subr.mxu0 0.0
        %2946 = vmatpush1.msra.mxu0 0.0
        %2947 = vmatprep.subr.mxu0 0.0
        %2948 = vmatpush1.msra.mxu0 0.0
        %2949 = vmatprep.subr.mxu0 0.0
        %2950 = vmatpush1.msra.mxu0 0.0
        %2951 = vmatprep.subr.mxu0 0.0
        %2952 = vmatpush1.msra.mxu0 0.0
        %2953 = vmatprep.subr.mxu0 0.0
        %2954 = vmatpush1.msra.mxu0 0.0
        %2955 = vmatprep.subr.mxu0 0.0
        %2956 = vmatpush1.msra.mxu0 0.0
        %2957 = vmatprep.subr.mxu0 0.0
        %2958 = vmatpush1.msra.mxu0 0.0
        %2959 = vmatprep.subr.mxu0 0.0
        %2960 = vmatpush1.msra.mxu0 0.0
        %2961 = vmatprep.subr.mxu0 0.0
        %2962 = vmatpush1.msra.mxu0 0.0
        %2963 = vmatprep.subr.mxu0 0.0
        %2964 = vmatpush1.msra.mxu0 0.0
        %2965 = vmatprep.subr.mxu0 0.0
        %2966 = vmatpush1.msra.mxu0 0.0
        %2967 = vmatprep.subr.mxu0 0.0
        %2968 = vmatpush1.msra.mxu0 0.0
        %2969 = vmatprep.subr.mxu0 0.0
        %2970 = vmatpush1.msra.mxu0 0.0
        %2971 = vmatprep.subr.mxu0 0.0
        %2972 = vmatpush1.msra.mxu0 0.0
        %2973 = vmatprep.subr.mxu0 0.0
        %2974 = vmatpush1.msra.mxu0 0.0
        %2975 = vmatprep.subr.mxu0 0.0
        %2976 = vmatpush1.msra.mxu0 0.0
        %2977 = vmatprep.subr.mxu0 0.0
        %2978 = vmatpush1.msra.mxu0 0.0
        %2979 = vmatprep.subr.mxu0 0.0
        %2980 = vmatpush1.msra.mxu0 0.0
        %2981 = vmatprep.subr.mxu0 0.0
        %2982 = vmatpush1.msra.mxu0 0.0
        %2983 = vmatprep.subr.mxu0 0.0
        %2984 = vmatpush1.msra.mxu0 0.0
        %2985 = vmatprep.subr.mxu0 0.0
        %2986 = vmatpush1.msra.mxu0 0.0
        %2987 = vmatprep.subr.mxu0 0.0
        %2988 = vmatpush1.msra.mxu0 0.0
        %2989 = vmatprep.subr.mxu0 0.0
        %2990 = vmatpush1.msra.mxu0 0.0
        %2991 = vmatprep.subr.mxu0 0.0
        %2992 = vmatpush1.msra.mxu0 0.0
        %2993 = vmatprep.mubr.f32.mxu0 0.0
        %2994 = vmatmul.mubr.f32.gmra.mrb[0].mxu0 %v2857
        %v2995 = vpop.f32.mrb[0].mxu0
        %v2996 = vadd.f32 0.0, %v2995
        %v2997 = vpop.f32.mrb[0].mxu0
        %2998 = vdwg.mxu0
        %2999 = vrot.lane.b32.xlu0 %v2551, 112
        %v3000 = vpop.permute.xlu0 %2999
        %3001 = vrot.lane.b32.xlu0 %v2624, 112
        %v3002 = vpop.permute.xlu0 %3001
        %v3003 = vsel %vm1058, %v3000, 0
        %v3005 = vsel %vm1058, %v3002, 0
        %3007 = vmatprep.subr.mxu0 0.0
        %3008 = vmatpush1.xpose.msra.mxu0 %v3005
        %3009 = vmatprep.subr.mxu0 0.0
        %3010 = vmatpush1.xpose.msra.mxu0 0.0
        %3011 = vmatprep.subr.mxu0 0.0
        %3012 = vmatpush1.xpose.msra.mxu0 0.0
        %3013 = vmatprep.subr.mxu0 0.0
        %3014 = vmatpush1.xpose.msra.mxu0 0.0
        %3015 = vmatprep.subr.mxu0 0.0
        %3016 = vmatpush1.xpose.msra.mxu0 0.0
        %3017 = vmatprep.subr.mxu0 0.0
        %3018 = vmatpush1.xpose.msra.mxu0 0.0
        %3019 = vmatprep.subr.mxu0 0.0
        %3020 = vmatpush1.xpose.msra.mxu0 0.0
        %3021 = vmatprep.subr.mxu0 0.0
        %3022 = vmatpush1.xpose.msra.mxu0 0.0
        %3023 = vmatprep.subr.mxu0 0.0
        %3024 = vmatpush1.xpose.msra.mxu0 0.0
        %3025 = vmatprep.subr.mxu0 0.0
        %3026 = vmatpush1.xpose.msra.mxu0 0.0
        %3027 = vmatprep.subr.mxu0 0.0
        %3028 = vmatpush1.xpose.msra.mxu0 0.0
        %3029 = vmatprep.subr.mxu0 0.0
        %3030 = vmatpush1.xpose.msra.mxu0 0.0
        %3031 = vmatprep.subr.mxu0 0.0
        %3032 = vmatpush1.xpose.msra.mxu0 0.0
        %3033 = vmatprep.subr.mxu0 0.0
        %3034 = vmatpush1.xpose.msra.mxu0 0.0
        %3035 = vmatprep.subr.mxu0 0.0
        %3036 = vmatpush1.xpose.msra.mxu0 0.0
        %3037 = vmatprep.subr.mxu0 0.0
        %3038 = vmatpush1.xpose.msra.mxu0 0.0
        %3039 = vmatprep.subr.mxu0 0.0
        %3040 = vmatpush1.xpose.msra.mxu0 0.0
        %3041 = vmatprep.subr.mxu0 0.0
        %3042 = vmatpush1.xpose.msra.mxu0 0.0
        %3043 = vmatprep.subr.mxu0 0.0
        %3044 = vmatpush1.xpose.msra.mxu0 0.0
        %3045 = vmatprep.subr.mxu0 0.0
        %3046 = vmatpush1.xpose.msra.mxu0 0.0
        %3047 = vmatprep.subr.mxu0 0.0
        %3048 = vmatpush1.xpose.msra.mxu0 0.0
        %3049 = vmatprep.subr.mxu0 0.0
        %3050 = vmatpush1.xpose.msra.mxu0 0.0
        %3051 = vmatprep.subr.mxu0 0.0
        %3052 = vmatpush1.xpose.msra.mxu0 0.0
        %3053 = vmatprep.subr.mxu0 0.0
        %3054 = vmatpush1.xpose.msra.mxu0 0.0
        %3055 = vmatprep.subr.mxu0 0.0
        %3056 = vmatpush1.xpose.msra.mxu0 0.0
        %3057 = vmatprep.subr.mxu0 0.0
        %3058 = vmatpush1.xpose.msra.mxu0 0.0
        %3059 = vmatprep.subr.mxu0 0.0
        %3060 = vmatpush1.xpose.msra.mxu0 0.0
        %3061 = vmatprep.subr.mxu0 0.0
        %3062 = vmatpush1.xpose.msra.mxu0 0.0
        %3063 = vmatprep.subr.mxu0 0.0
        %3064 = vmatpush1.xpose.msra.mxu0 0.0
        %3065 = vmatprep.subr.mxu0 0.0
        %3066 = vmatpush1.xpose.msra.mxu0 0.0
        %3067 = vmatprep.subr.mxu0 0.0
        %3068 = vmatpush1.xpose.msra.mxu0 0.0
        %3069 = vmatprep.subr.mxu0 0.0
        %3070 = vmatpush1.xpose.msra.mxu0 0.0
        %3071 = vmatprep.mubr.f32.mxu0 0.0
        %3072 = vmatmul.mubr.f32.gmra.mrb[0].mxu0 %v3003
        %v3073 = vpop.f32.mrb[0].mxu0
        %v3074 = vadd.f32 0.0, %v3073
        %v3075 = vpop.f32.mrb[0].mxu0
        %3076 = vdwg.mxu0
        %v3077 = vmul.f32 %v3074, 0.25
        %v3078 = vsel %vm1136, %v3077, -inf
        %3079 = vmax.xlane.f32.xlu0 %v3078
        %v3080 = vpop.xlane.xlu0 %3079
        %v3081 = vsub.f32 %v3077, %v3080
        %v3082 = vmul.f32 %v3081, 1.442695
        %v3083 = vpow.pop %v3082
        %v3084 = vsel %vm1136, %v3083, 0.0
        %3085 = vadd.xlane.f32.xlu0 %v3084
        %v3086 = vpop.xlane.xlu0 %3085
        %v3087 = vrcp.pop %v3086
        %v3088 = vmul.f32 %v3083, %v3087
        %s3089 = scalar_lea.vmem %s825, 8 [#allocation17]
        %3090 = vst.msk [vmem:[%s3089] sm:$0xff] %vm1136, %v3088
        %3092 = vrot.lane.b32.xlu0 %v2694, 112
        %v3093 = vpop.permute.xlu0 %3092
        %v3096 = vsel %vm1136, %v3088, 0
        %3098 = vmatprep.subr.mxu0 0.0
        %3099 = vmatpush1.msra.mxu0 %v3093
        %3100 = vmatprep.subr.mxu0 0.0
        %3101 = vmatpush1.msra.mxu0 0.0
        %3102 = vmatprep.subr.mxu0 0.0
        %3103 = vmatpush1.msra.mxu0 0.0
        %3104 = vmatprep.subr.mxu0 0.0
        %3105 = vmatpush1.msra.mxu0 0.0
        %3106 = vmatprep.subr.mxu0 0.0
        %3107 = vmatpush1.msra.mxu0 0.0
        %3108 = vmatprep.subr.mxu0 0.0
        %3109 = vmatpush1.msra.mxu0 0.0
        %3110 = vmatprep.subr.mxu0 0.0
        %3111 = vmatpush1.msra.mxu0 0.0
        %3112 = vmatprep.subr.mxu0 0.0
        %3113 = vmatpush1.msra.mxu0 0.0
        %3114 = vmatprep.subr.mxu0 0.0
        %3115 = vmatpush1.msra.mxu0 0.0
        %3116 = vmatprep.subr.mxu0 0.0
        %3117 = vmatpush1.msra.mxu0 0.0
        %3118 = vmatprep.subr.mxu0 0.0
        %3119 = vmatpush1.msra.mxu0 0.0
        %3120 = vmatprep.subr.mxu0 0.0
        %3121 = vmatpush1.msra.mxu0 0.0
        %3122 = vmatprep.subr.mxu0 0.0
        %3123 = vmatpush1.msra.mxu0 0.0
        %3124 = vmatprep.subr.mxu0 0.0
        %3125 = vmatpush1.msra.mxu0 0.0
        %3126 = vmatprep.subr.mxu0 0.0
        %3127 = vmatpush1.msra.mxu0 0.0
        %3128 = vmatprep.subr.mxu0 0.0
        %3129 = vmatpush1.msra.mxu0 0.0
        %3130 = vmatprep.subr.mxu0 0.0
        %3131 = vmatpush1.msra.mxu0 0.0
        %3132 = vmatprep.subr.mxu0 0.0
        %3133 = vmatpush1.msra.mxu0 0.0
        %3134 = vmatprep.subr.mxu0 0.0
        %3135 = vmatpush1.msra.mxu0 0.0
        %3136 = vmatprep.subr.mxu0 0.0
        %3137 = vmatpush1.msra.mxu0 0.0
        %3138 = vmatprep.subr.mxu0 0.0
        %3139 = vmatpush1.msra.mxu0 0.0
        %3140 = vmatprep.subr.mxu0 0.0
        %3141 = vmatpush1.msra.mxu0 0.0
        %3142 = vmatprep.subr.mxu0 0.0
        %3143 = vmatpush1.msra.mxu0 0.0
        %3144 = vmatprep.subr.mxu0 0.0
        %3145 = vmatpush1.msra.mxu0 0.0
        %3146 = vmatprep.subr.mxu0 0.0
        %3147 = vmatpush1.msra.mxu0 0.0
        %3148 = vmatprep.subr.mxu0 0.0
        %3149 = vmatpush1.msra.mxu0 0.0
        %3150 = vmatprep.subr.mxu0 0.0
        %3151 = vmatpush1.msra.mxu0 0.0
        %3152 = vmatprep.subr.mxu0 0.0
        %3153 = vmatpush1.msra.mxu0 0.0
        %3154 = vmatprep.subr.mxu0 0.0
        %3155 = vmatpush1.msra.mxu0 0.0
        %3156 = vmatprep.subr.mxu0 0.0
        %3157 = vmatpush1.msra.mxu0 0.0
        %3158 = vmatprep.subr.mxu0 0.0
        %3159 = vmatpush1.msra.mxu0 0.0
        %3160 = vmatprep.subr.mxu0 0.0
        %3161 = vmatpush1.msra.mxu0 0.0
        %3162 = vmatprep.mubr.f32.mxu0 0.0
        %3163 = vmatmul.mubr.f32.gmra.mrb[0].mxu0 %v3096
        %v3164 = vpop.f32.mrb[0].mxu0
        %v3165 = vadd.f32 0.0, %v3164
        %v3166 = vpop.f32.mrb[0].mxu0
        %3167 = vdwg.mxu0
        %3169 = vrot.lane.b32.xlu0 %v2764, 112
        %v3170 = vpop.permute.xlu0 %3169
        %3172 = vmatprep.subr.mxu0 0.0
        %3173 = vmatpush1.msra.mxu0 %v3170
        %3174 = vmatprep.subr.mxu0 0.0
        %3175 = vmatpush1.msra.mxu0 0.0
        %3176 = vmatprep.subr.mxu0 0.0
        %3177 = vmatpush1.msra.mxu0 0.0
        %3178 = vmatprep.subr.mxu0 0.0
        %3179 = vmatpush1.msra.mxu0 0.0
        %3180 = vmatprep.subr.mxu0 0.0
        %3181 = vmatpush1.msra.mxu0 0.0
        %3182 = vmatprep.subr.mxu0 0.0
        %3183 = vmatpush1.msra.mxu0 0.0
        %3184 = vmatprep.subr.mxu0 0.0
        %3185 = vmatpush1.msra.mxu0 0.0
        %3186 = vmatprep.subr.mxu0 0.0
        %3187 = vmatpush1.msra.mxu0 0.0
        %3188 = vmatprep.subr.mxu0 0.0
        %3189 = vmatpush1.msra.mxu0 0.0
        %3190 = vmatprep.subr.mxu0 0.0
        %3191 = vmatpush1.msra.mxu0 0.0
        %3192 = vmatprep.subr.mxu0 0.0
        %3193 = vmatpush1.msra.mxu0 0.0
        %3194 = vmatprep.subr.mxu0 0.0
        %3195 = vmatpush1.msra.mxu0 0.0
        %3196 = vmatprep.subr.mxu0 0.0
        %3197 = vmatpush1.msra.mxu0 0.0
        %3198 = vmatprep.subr.mxu0 0.0
        %3199 = vmatpush1.msra.mxu0 0.0
        %3200 = vmatprep.subr.mxu0 0.0
        %3201 = vmatpush1.msra.mxu0 0.0
        %3202 = vmatprep.subr.mxu0 0.0
        %3203 = vmatpush1.msra.mxu0 0.0
        %3204 = vmatprep.subr.mxu0 0.0
        %3205 = vmatpush1.msra.mxu0 0.0
        %3206 = vmatprep.subr.mxu0 0.0
        %3207 = vmatpush1.msra.mxu0 0.0
        %3208 = vmatprep.subr.mxu0 0.0
        %3209 = vmatpush1.msra.mxu0 0.0
        %3210 = vmatprep.subr.mxu0 0.0
        %3211 = vmatpush1.msra.mxu0 0.0
        %3212 = vmatprep.subr.mxu0 0.0
        %3213 = vmatpush1.msra.mxu0 0.0
        %3214 = vmatprep.subr.mxu0 0.0
        %3215 = vmatpush1.msra.mxu0 0.0
        %3216 = vmatprep.subr.mxu0 0.0
        %3217 = vmatpush1.msra.mxu0 0.0
        %3218 = vmatprep.subr.mxu0 0.0
        %3219 = vmatpush1.msra.mxu0 0.0
        %3220 = vmatprep.subr.mxu0 0.0
        %3221 = vmatpush1.msra.mxu0 0.0
        %3222 = vmatprep.subr.mxu0 0.0
        %3223 = vmatpush1.msra.mxu0 0.0
        %3224 = vmatprep.subr.mxu0 0.0
        %3225 = vmatpush1.msra.mxu0 0.0
        %3226 = vmatprep.subr.mxu0 0.0
        %3227 = vmatpush1.msra.mxu0 0.0
        %3228 = vmatprep.subr.mxu0 0.0
        %3229 = vmatpush1.msra.mxu0 0.0
        %3230 = vmatprep.subr.mxu0 0.0
        %3231 = vmatpush1.msra.mxu0 0.0
        %3232 = vmatprep.subr.mxu0 0.0
        %3233 = vmatpush1.msra.mxu0 0.0
        %3234 = vmatprep.subr.mxu0 0.0
        %3235 = vmatpush1.msra.mxu0 0.0
        %3236 = vmatprep.mubr.f32.mxu0 0.0
        %3237 = vmatmul.mubr.f32.gmra.mrb[0].mxu0 %v3096
        %v3238 = vpop.f32.mrb[0].mxu0
        %v3239 = vadd.f32 0.0, %v3238
        %v3240 = vpop.f32.mrb[0].mxu0
        %3241 = vdwg.mxu0
        %3243 = vrot.lane.b32.xlu0 %v3165, 16
        %v3244 = vpop.permute.xlu0 %3243
        %v3246 = vsel %vm1058, %v2926, %v3244
        %3248 = vrot.lane.b32.xlu0 %v3239, 16
        %v3249 = vpop.permute.xlu0 %3248
        %v3251 = vsel %vm1058, %v2996, %v3249
        %v3253 = vsel %vm844, %v3246, 0
        %3255 = vmatprep.subr.mxu0 0.0
        %3256 = vmatpush1.msra.mxu0 %v2473
        %3257 = vmatprep.subr.mxu0 0.0
        %3258 = vmatpush1.msra.mxu0 %v2474
        %3259 = vmatprep.subr.mxu0 0.0
        %3260 = vmatpush1.msra.mxu0 %v2475
        %3261 = vmatprep.subr.mxu0 0.0
        %3262 = vmatpush1.msra.mxu0 %v2476
        %3263 = vmatprep.subr.mxu0 0.0
        %3264 = vmatpush1.msra.mxu0 0.0
        %3265 = vmatprep.subr.mxu0 0.0
        %3266 = vmatpush1.msra.mxu0 0.0
        %3267 = vmatprep.subr.mxu0 0.0
        %3268 = vmatpush1.msra.mxu0 0.0
        %3269 = vmatprep.subr.mxu0 0.0
        %3270 = vmatpush1.msra.mxu0 0.0
        %3271 = vmatprep.subr.mxu0 0.0
        %3272 = vmatpush1.msra.mxu0 0.0
        %3273 = vmatprep.subr.mxu0 0.0
        %3274 = vmatpush1.msra.mxu0 0.0
        %3275 = vmatprep.subr.mxu0 0.0
        %3276 = vmatpush1.msra.mxu0 0.0
        %3277 = vmatprep.subr.mxu0 0.0
        %3278 = vmatpush1.msra.mxu0 0.0
        %3279 = vmatprep.subr.mxu0 0.0
        %3280 = vmatpush1.msra.mxu0 0.0
        %3281 = vmatprep.subr.mxu0 0.0
        %3282 = vmatpush1.msra.mxu0 0.0
        %3283 = vmatprep.subr.mxu0 0.0
        %3284 = vmatpush1.msra.mxu0 0.0
        %3285 = vmatprep.subr.mxu0 0.0
        %3286 = vmatpush1.msra.mxu0 0.0
        %3287 = vmatprep.subr.mxu0 0.0
        %3288 = vmatpush1.msra.mxu0 0.0
        %3289 = vmatprep.subr.mxu0 0.0
        %3290 = vmatpush1.msra.mxu0 0.0
        %3291 = vmatprep.subr.mxu0 0.0
        %3292 = vmatpush1.msra.mxu0 0.0
        %3293 = vmatprep.subr.mxu0 0.0
        %3294 = vmatpush1.msra.mxu0 0.0
        %3295 = vmatprep.subr.mxu0 0.0
        %3296 = vmatpush1.msra.mxu0 0.0
        %3297 = vmatprep.subr.mxu0 0.0
        %3298 = vmatpush1.msra.mxu0 0.0
        %3299 = vmatprep.subr.mxu0 0.0
        %3300 = vmatpush1.msra.mxu0 0.0
        %3301 = vmatprep.subr.mxu0 0.0
        %3302 = vmatpush1.msra.mxu0 0.0
        %3303 = vmatprep.subr.mxu0 0.0
        %3304 = vmatpush1.msra.mxu0 0.0
        %3305 = vmatprep.subr.mxu0 0.0
        %3306 = vmatpush1.msra.mxu0 0.0
        %3307 = vmatprep.subr.mxu0 0.0
        %3308 = vmatpush1.msra.mxu0 0.0
        %3309 = vmatprep.subr.mxu0 0.0
        %3310 = vmatpush1.msra.mxu0 0.0
        %3311 = vmatprep.subr.mxu0 0.0
        %3312 = vmatpush1.msra.mxu0 0.0
        %3313 = vmatprep.subr.mxu0 0.0
        %3314 = vmatpush1.msra.mxu0 0.0
        %3315 = vmatprep.subr.mxu0 0.0
        %3316 = vmatpush1.msra.mxu0 0.0
        %3317 = vmatprep.subr.mxu0 0.0
        %3318 = vmatpush1.msra.mxu0 0.0
        %3319 = vmatprep.mubr.f32.mxu0 0.0
        %3320 = vmatmul.mubr.f32.gmra.mrb[0].mxu0 %v3253
        %v3321 = vpop.f32.mrb[0].mxu0
        %v3322 = vadd.f32 %v2284, %v3321
        %v3323 = vpop.f32.mrb[0].mxu0
        %3324 = vdwg.mxu0
        %v3325 = vsel %vm844, %v3322, 0.0
        %3326 = vadd.xlane.f32.xlu0 %v3325
        %v3327 = vpop.xlane.xlu0 %3326
        %v3328 = vmul.f32 %v3327, %v1469
        %v3329 = vsub.f32 %v3322, %v3328
        %v3330 = vmul.f32 %v3329, %v3329
        %v3331 = vsel %vm844, %v3330, 0.0
        %3332 = vadd.xlane.f32.xlu0 %v3331
        %v3333 = vpop.xlane.xlu0 %3332
        %v3334 = vmul.f32 %v3333, %v1469
        %v3335 = vadd.f32 %v3334, 1e-05
        %v3336 = vrsqrt.pop %v3335
        %v3337 = vmul.f32 %v3329, %v3336
        %v3339 = vsel %vm844, %v3251, 0
        %3341 = vmatprep.subr.mxu0 0.0
        %3342 = vmatpush1.msra.mxu0 %v2477
        %3343 = vmatprep.subr.mxu0 0.0
        %3344 = vmatpush1.msra.mxu0 %v2478
        %3345 = vmatprep.subr.mxu0 0.0
        %3346 = vmatpush1.msra.mxu0 %v2479
        %3347 = vmatprep.subr.mxu0 0.0
        %3348 = vmatpush1.msra.mxu0 %v2480
        %3349 = vmatprep.subr.mxu0 0.0
        %3350 = vmatpush1.msra.mxu0 0.0
        %3351 = vmatprep.subr.mxu0 0.0
        %3352 = vmatpush1.msra.mxu0 0.0
        %3353 = vmatprep.subr.mxu0 0.0
        %3354 = vmatpush1.msra.mxu0 0.0
        %3355 = vmatprep.subr.mxu0 0.0
        %3356 = vmatpush1.msra.mxu0 0.0
        %3357 = vmatprep.subr.mxu0 0.0
        %3358 = vmatpush1.msra.mxu0 0.0
        %3359 = vmatprep.subr.mxu0 0.0
        %3360 = vmatpush1.msra.mxu0 0.0
        %3361 = vmatprep.subr.mxu0 0.0
        %3362 = vmatpush1.msra.mxu0 0.0
        %3363 = vmatprep.subr.mxu0 0.0
        %3364 = vmatpush1.msra.mxu0 0.0
        %3365 = vmatprep.subr.mxu0 0.0
        %3366 = vmatpush1.msra.mxu0 0.0
        %3367 = vmatprep.subr.mxu0 0.0
        %3368 = vmatpush1.msra.mxu0 0.0
        %3369 = vmatprep.subr.mxu0 0.0
        %3370 = vmatpush1.msra.mxu0 0.0
        %3371 = vmatprep.subr.mxu0 0.0
        %3372 = vmatpush1.msra.mxu0 0.0
        %3373 = vmatprep.subr.mxu0 0.0
        %3374 = vmatpush1.msra.mxu0 0.0
        %3375 = vmatprep.subr.mxu0 0.0
        %3376 = vmatpush1.msra.mxu0 0.0
        %3377 = vmatprep.subr.mxu0 0.0
        %3378 = vmatpush1.msra.mxu0 0.0
        %3379 = vmatprep.subr.mxu0 0.0
        %3380 = vmatpush1.msra.mxu0 0.0
        %3381 = vmatprep.subr.mxu0 0.0
        %3382 = vmatpush1.msra.mxu0 0.0
        %3383 = vmatprep.subr.mxu0 0.0
        %3384 = vmatpush1.msra.mxu0 0.0
        %3385 = vmatprep.subr.mxu0 0.0
        %3386 = vmatpush1.msra.mxu0 0.0
        %3387 = vmatprep.subr.mxu0 0.0
        %3388 = vmatpush1.msra.mxu0 0.0
        %3389 = vmatprep.subr.mxu0 0.0
        %3390 = vmatpush1.msra.mxu0 0.0
        %3391 = vmatprep.subr.mxu0 0.0
        %3392 = vmatpush1.msra.mxu0 0.0
        %3393 = vmatprep.subr.mxu0 0.0
        %3394 = vmatpush1.msra.mxu0 0.0
        %3395 = vmatprep.subr.mxu0 0.0
        %3396 = vmatpush1.msra.mxu0 0.0
        %3397 = vmatprep.subr.mxu0 0.0
        %3398 = vmatpush1.msra.mxu0 0.0
        %3399 = vmatprep.subr.mxu0 0.0
        %3400 = vmatpush1.msra.mxu0 0.0
        %3401 = vmatprep.subr.mxu0 0.0
        %3402 = vmatpush1.msra.mxu0 0.0
        %3403 = vmatprep.subr.mxu0 0.0
        %3404 = vmatpush1.msra.mxu0 0.0
        %3405 = vmatprep.mubr.f32.mxu0 0.0
        %3406 = vmatmul.mubr.f32.gmra.mrb[0].mxu0 %v3339
        %v3407 = vpop.f32.mrb[0].mxu0
        %v3408 = vadd.f32 %v2456, %v3407
        %v3409 = vpop.f32.mrb[0].mxu0
        %3410 = vdwg.mxu0
        %v3411 = vsel %vm844, %v3408, 0.0
        %3412 = vadd.xlane.f32.xlu0 %v3411
        %v3413 = vpop.xlane.xlu0 %3412
        %v3414 = vmul.f32 %v3413, %v1469
        %v3415 = vsub.f32 %v3408, %v3414
        %v3416 = vmul.f32 %v3415, %v3415
        %v3417 = vsel %vm844, %v3416, 0.0
        %3418 = vadd.xlane.f32.xlu0 %v3417
        %v3419 = vpop.xlane.xlu0 %3418
        %v3420 = vmul.f32 %v3419, %v1469
        %v3421 = vadd.f32 %v3420, 1e-05
        %v3422 = vrsqrt.pop %v3421
        %v3423 = vmul.f32 %v3415, %v3422
        %v3424 = vld [vmem:[#allocation11] sm:$0xff]
        %v3425 = vld [vmem:[#allocation11 + $0x8] sm:$0xff]
        %v3426 = vld [vmem:[#allocation11 + $0x10] sm:$0xff]
        %v3427 = vld [vmem:[#allocation11 + $0x18] sm:$0xff]
        %v3428 = vld [vmem:[%s17] sm:$0xff]
        %v3429 = vld [vmem:[%s17 + $0x8] sm:$0xff]
        %v3430 = vld [vmem:[%s17 + $0x10] sm:$0xff]
        %v3431 = vld [vmem:[%s17 + $0x18] sm:$0xff]
        %v3432 = vld [vmem:[%s17 + $0x20] sm:$0xff]
        %v3433 = vld [vmem:[%s17 + $0x28] sm:$0xff]
        %v3434 = vld [vmem:[%s17 + $0x30] sm:$0xff]
        %v3435 = vld [vmem:[%s17 + $0x38] sm:$0xff]
        %v3437 = vsel %vm844, %v3337, 0
        %3439 = vmatprep.subr.mxu0 0.0
        %3440 = vmatpush1.msra.mxu0 %v3424
        %3441 = vmatprep.subr.mxu0 0.0
        %3442 = vmatpush1.msra.mxu0 %v3425
        %3443 = vmatprep.subr.mxu0 0.0
        %3444 = vmatpush1.msra.mxu0 %v3426
        %3445 = vmatprep.subr.mxu0 0.0
        %3446 = vmatpush1.msra.mxu0 %v3427
        %3447 = vmatprep.subr.mxu0 0.0
        %3448 = vmatpush1.msra.mxu0 0.0
        %3449 = vmatprep.subr.mxu0 0.0
        %3450 = vmatpush1.msra.mxu0 0.0
        %3451 = vmatprep.subr.mxu0 0.0
        %3452 = vmatpush1.msra.mxu0 0.0
        %3453 = vmatprep.subr.mxu0 0.0
        %3454 = vmatpush1.msra.mxu0 0.0
        %3455 = vmatprep.subr.mxu0 0.0
        %3456 = vmatpush1.msra.mxu0 0.0
        %3457 = vmatprep.subr.mxu0 0.0
        %3458 = vmatpush1.msra.mxu0 0.0
        %3459 = vmatprep.subr.mxu0 0.0
        %3460 = vmatpush1.msra.mxu0 0.0
        %3461 = vmatprep.subr.mxu0 0.0
        %3462 = vmatpush1.msra.mxu0 0.0
        %3463 = vmatprep.subr.mxu0 0.0
        %3464 = vmatpush1.msra.mxu0 0.0
        %3465 = vmatprep.subr.mxu0 0.0
        %3466 = vmatpush1.msra.mxu0 0.0
        %3467 = vmatprep.subr.mxu0 0.0
        %3468 = vmatpush1.msra.mxu0 0.0
        %3469 = vmatprep.subr.mxu0 0.0
        %3470 = vmatpush1.msra.mxu0 0.0
        %3471 = vmatprep.subr.mxu0 0.0
        %3472 = vmatpush1.msra.mxu0 0.0
        %3473 = vmatprep.subr.mxu0 0.0
        %3474 = vmatpush1.msra.mxu0 0.0
        %3475 = vmatprep.subr.mxu0 0.0
        %3476 = vmatpush1.msra.mxu0 0.0
        %3477 = vmatprep.subr.mxu0 0.0
        %3478 = vmatpush1.msra.mxu0 0.0
        %3479 = vmatprep.subr.mxu0 0.0
        %3480 = vmatpush1.msra.mxu0 0.0
        %3481 = vmatprep.subr.mxu0 0.0
        %3482 = vmatpush1.msra.mxu0 0.0
        %3483 = vmatprep.subr.mxu0 0.0
        %3484 = vmatpush1.msra.mxu0 0.0
        %3485 = vmatprep.subr.mxu0 0.0
        %3486 = vmatpush1.msra.mxu0 0.0
        %3487 = vmatprep.subr.mxu0 0.0
        %3488 = vmatpush1.msra.mxu0 0.0
        %3489 = vmatprep.subr.mxu0 0.0
        %3490 = vmatpush1.msra.mxu0 0.0
        %3491 = vmatprep.subr.mxu0 0.0
        %3492 = vmatpush1.msra.mxu0 0.0
        %3493 = vmatprep.subr.mxu0 0.0
        %3494 = vmatpush1.msra.mxu0 0.0
        %3495 = vmatprep.subr.mxu0 0.0
        %3496 = vmatpush1.msra.mxu0 0.0
        %3497 = vmatprep.subr.mxu0 0.0
        %3498 = vmatpush1.msra.mxu0 0.0
        %3499 = vmatprep.subr.mxu0 0.0
        %3500 = vmatpush1.msra.mxu0 0.0
        %3501 = vmatprep.subr.mxu0 0.0
        %3502 = vmatpush1.msra.mxu0 0.0
        %3503 = vmatprep.mubr.f32.mxu0 0.0
        %3504 = vmatmul.mubr.f32.gmra.mrb[0].mxu0 %v3437
        %v3505 = vpop.f32.mrb[0].mxu0
        %v3506 = vadd.f32 0.0, %v3505
        %v3507 = vpop.f32.mrb[0].mxu0
        %3508 = vdwg.mxu0
        %v3509 = vmax.f32 %v3506, 0.0
        %v3511 = vsel %vm2198, %v3509, 0
        %3513 = vmatprep.subr.mxu0 0.0
        %3514 = vmatpush1.msra.mxu0 %v3428
        %3515 = vmatprep.subr.mxu0 0.0
        %3516 = vmatpush1.msra.mxu0 %v3429
        %3517 = vmatprep.subr.mxu0 0.0
        %3518 = vmatpush1.msra.mxu0 %v3430
        %3519 = vmatprep.subr.mxu0 0.0
        %3520 = vmatpush1.msra.mxu0 %v3431
        %3521 = vmatprep.subr.mxu0 0.0
        %3522 = vmatpush1.msra.mxu0 %v3432
        %3523 = vmatprep.subr.mxu0 0.0
        %3524 = vmatpush1.msra.mxu0 %v3433
        %3525 = vmatprep.subr.mxu0 0.0
        %3526 = vmatpush1.msra.mxu0 %v3434
        %3527 = vmatprep.subr.mxu0 0.0
        %3528 = vmatpush1.msra.mxu0 %v3435
        %3529 = vmatprep.subr.mxu0 0.0
        %3530 = vmatpush1.msra.mxu0 0.0
        %3531 = vmatprep.subr.mxu0 0.0
        %3532 = vmatpush1.msra.mxu0 0.0
        %3533 = vmatprep.subr.mxu0 0.0
        %3534 = vmatpush1.msra.mxu0 0.0
        %3535 = vmatprep.subr.mxu0 0.0
        %3536 = vmatpush1.msra.mxu0 0.0
        %3537 = vmatprep.subr.mxu0 0.0
        %3538 = vmatpush1.msra.mxu0 0.0
        %3539 = vmatprep.subr.mxu0 0.0
        %3540 = vmatpush1.msra.mxu0 0.0
        %3541 = vmatprep.subr.mxu0 0.0
        %3542 = vmatpush1.msra.mxu0 0.0
        %3543 = vmatprep.subr.mxu0 0.0
        %3544 = vmatpush1.msra.mxu0 0.0
        %3545 = vmatprep.subr.mxu0 0.0
        %3546 = vmatpush1.msra.mxu0 0.0
        %3547 = vmatprep.subr.mxu0 0.0
        %3548 = vmatpush1.msra.mxu0 0.0
        %3549 = vmatprep.subr.mxu0 0.0
        %3550 = vmatpush1.msra.mxu0 0.0
        %3551 = vmatprep.subr.mxu0 0.0
        %3552 = vmatpush1.msra.mxu0 0.0
        %3553 = vmatprep.subr.mxu0 0.0
        %3554 = vmatpush1.msra.mxu0 0.0
        %3555 = vmatprep.subr.mxu0 0.0
        %3556 = vmatpush1.msra.mxu0 0.0
        %3557 = vmatprep.subr.mxu0 0.0
        %3558 = vmatpush1.msra.mxu0 0.0
        %3559 = vmatprep.subr.mxu0 0.0
        %3560 = vmatpush1.msra.mxu0 0.0
        %3561 = vmatprep.subr.mxu0 0.0
        %3562 = vmatpush1.msra.mxu0 0.0
        %3563 = vmatprep.subr.mxu0 0.0
        %3564 = vmatpush1.msra.mxu0 0.0
        %3565 = vmatprep.subr.mxu0 0.0
        %3566 = vmatpush1.msra.mxu0 0.0
        %3567 = vmatprep.subr.mxu0 0.0
        %3568 = vmatpush1.msra.mxu0 0.0
        %3569 = vmatprep.subr.mxu0 0.0
        %3570 = vmatpush1.msra.mxu0 0.0
        %3571 = vmatprep.subr.mxu0 0.0
        %3572 = vmatpush1.msra.mxu0 0.0
        %3573 = vmatprep.subr.mxu0 0.0
        %3574 = vmatpush1.msra.mxu0 0.0
        %3575 = vmatprep.subr.mxu0 0.0
        %3576 = vmatpush1.msra.mxu0 0.0
        %3577 = vmatprep.mubr.f32.mxu0 0.0
        %3578 = vmatmul.mubr.f32.gmra.mrb[0].mxu0 %v3511
        %v3579 = vpop.f32.mrb[0].mxu0
        %v3580 = vadd.f32 %v3337, %v3579
        %v3581 = vpop.f32.mrb[0].mxu0
        %3582 = vdwg.mxu0
        %v3583 = vsel %vm844, %v3580, 0.0
        %3584 = vadd.xlane.f32.xlu0 %v3583
        %v3585 = vpop.xlane.xlu0 %3584
        %v3586 = vmul.f32 %v3585, %v1469
        %v3587 = vsub.f32 %v3580, %v3586
        %v3588 = vmul.f32 %v3587, %v3587
        %v3589 = vsel %vm844, %v3588, 0.0
        %3590 = vadd.xlane.f32.xlu0 %v3589
        %v3591 = vpop.xlane.xlu0 %3590
        %v3592 = vmul.f32 %v3591, %v1469
        %v3593 = vadd.f32 %v3592, 1e-05
        %v3594 = vrsqrt.pop %v3593
        %v3595 = vmul.f32 %v3587, %v3594
        %3596 = vst.msk [vmem:[%s811] sm:$0xff] %vm844, %v3595
        %v3597 = vld [vmem:[#allocation13] sm:$0xff]
        %v3598 = vld [vmem:[#allocation13 + $0x8] sm:$0xff]
        %v3599 = vld [vmem:[#allocation13 + $0x10] sm:$0xff]
        %v3600 = vld [vmem:[#allocation13 + $0x18] sm:$0xff]
        %v3601 = vld [vmem:[%s19] sm:$0xff]
        %v3602 = vld [vmem:[%s19 + $0x8] sm:$0xff]
        %v3603 = vld [vmem:[%s19 + $0x10] sm:$0xff]
        %v3604 = vld [vmem:[%s19 + $0x18] sm:$0xff]
        %v3605 = vld [vmem:[%s19 + $0x20] sm:$0xff]
        %v3606 = vld [vmem:[%s19 + $0x28] sm:$0xff]
        %v3607 = vld [vmem:[%s19 + $0x30] sm:$0xff]
        %v3608 = vld [vmem:[%s19 + $0x38] sm:$0xff]
        %v3610 = vsel %vm844, %v3423, 0
        %3612 = vmatprep.subr.mxu0 0.0
        %3613 = vmatpush1.msra.mxu0 %v3597
        %3614 = vmatprep.subr.mxu0 0.0
        %3615 = vmatpush1.msra.mxu0 %v3598
        %3616 = vmatprep.subr.mxu0 0.0
        %3617 = vmatpush1.msra.mxu0 %v3599
        %3618 = vmatprep.subr.mxu0 0.0
        %3619 = vmatpush1.msra.mxu0 %v3600
        %3620 = vmatprep.subr.mxu0 0.0
        %3621 = vmatpush1.msra.mxu0 0.0
        %3622 = vmatprep.subr.mxu0 0.0
        %3623 = vmatpush1.msra.mxu0 0.0
        %3624 = vmatprep.subr.mxu0 0.0
        %3625 = vmatpush1.msra.mxu0 0.0
        %3626 = vmatprep.subr.mxu0 0.0
        %3627 = vmatpush1.msra.mxu0 0.0
        %3628 = vmatprep.subr.mxu0 0.0
        %3629 = vmatpush1.msra.mxu0 0.0
        %3630 = vmatprep.subr.mxu0 0.0
        %3631 = vmatpush1.msra.mxu0 0.0
        %3632 = vmatprep.subr.mxu0 0.0
        %3633 = vmatpush1.msra.mxu0 0.0
        %3634 = vmatprep.subr.mxu0 0.0
        %3635 = vmatpush1.msra.mxu0 0.0
        %3636 = vmatprep.subr.mxu0 0.0
        %3637 = vmatpush1.msra.mxu0 0.0
        %3638 = vmatprep.subr.mxu0 0.0
        %3639 = vmatpush1.msra.mxu0 0.0
        %3640 = vmatprep.subr.mxu0 0.0
        %3641 = vmatpush1.msra.mxu0 0.0
        %3642 = vmatprep.subr.mxu0 0.0
        %3643 = vmatpush1.msra.mxu0 0.0
        %3644 = vmatprep.subr.mxu0 0.0
        %3645 = vmatpush1.msra.mxu0 0.0
        %3646 = vmatprep.subr.mxu0 0.0
        %3647 = vmatpush1.msra.mxu0 0.0
        %3648 = vmatprep.subr.mxu0 0.0
        %3649 = vmatpush1.msra.mxu0 0.0
        %3650 = vmatprep.subr.mxu0 0.0
        %3651 = vmatpush1.msra.mxu0 0.0
        %3652 = vmatprep.subr.mxu0 0.0
        %3653 = vmatpush1.msra.mxu0 0.0
        %3654 = vmatprep.subr.mxu0 0.0
        %3655 = vmatpush1.msra.mxu0 0.0
        %3656 = vmatprep.subr.mxu0 0.0
        %3657 = vmatpush1.msra.mxu0 0.0
        %3658 = vmatprep.subr.mxu0 0.0
        %3659 = vmatpush1.msra.mxu0 0.0
        %3660 = vmatprep.subr.mxu0 0.0
        %3661 = vmatpush1.msra.mxu0 0.0
        %3662 = vmatprep.subr.mxu0 0.0
        %3663 = vmatpush1.msra.mxu0 0.0
        %3664 = vmatprep.subr.mxu0 0.0
        %3665 = vmatpush1.msra.mxu0 0.0
        %3666 = vmatprep.subr.mxu0 0.0
        %3667 = vmatpush1.msra.mxu0 0.0
        %3668 = vmatprep.subr.mxu0 0.0
        %3669 = vmatpush1.msra.mxu0 0.0
        %3670 = vmatprep.subr.mxu0 0.0
        %3671 = vmatpush1.msra.mxu0 0.0
        %3672 = vmatprep.subr.mxu0 0.0
        %3673 = vmatpush1.msra.mxu0 0.0
        %3674 = vmatprep.subr.mxu0 0.0
        %3675 = vmatpush1.msra.mxu0 0.0
        %3676 = vmatprep.mubr.f32.mxu0 0.0
        %3677 = vmatmul.mubr.f32.gmra.mrb[0].mxu0 %v3610
        %v3678 = vpop.f32.mrb[0].mxu0
        %v3679 = vadd.f32 0.0, %v3678
        %v3680 = vpop.f32.mrb[0].mxu0
        %3681 = vdwg.mxu0
        %v3682 = vmax.f32 %v3679, 0.0
        %v3684 = vsel %vm2198, %v3682, 0
        %3686 = vmatprep.subr.mxu0 0.0
        %3687 = vmatpush1.msra.mxu0 %v3601
        %3688 = vmatprep.subr.mxu0 0.0
        %3689 = vmatpush1.msra.mxu0 %v3602
        %3690 = vmatprep.subr.mxu0 0.0
        %3691 = vmatpush1.msra.mxu0 %v3603
        %3692 = vmatprep.subr.mxu0 0.0
        %3693 = vmatpush1.msra.mxu0 %v3604
        %3694 = vmatprep.subr.mxu0 0.0
        %3695 = vmatpush1.msra.mxu0 %v3605
        %3696 = vmatprep.subr.mxu0 0.0
        %3697 = vmatpush1.msra.mxu0 %v3606
        %3698 = vmatprep.subr.mxu0 0.0
        %3699 = vmatpush1.msra.mxu0 %v3607
        %3700 = vmatprep.subr.mxu0 0.0
        %3701 = vmatpush1.msra.mxu0 %v3608
        %3702 = vmatprep.subr.mxu0 0.0
        %3703 = vmatpush1.msra.mxu0 0.0
        %3704 = vmatprep.subr.mxu0 0.0
        %3705 = vmatpush1.msra.mxu0 0.0
        %3706 = vmatprep.subr.mxu0 0.0
        %3707 = vmatpush1.msra.mxu0 0.0
        %3708 = vmatprep.subr.mxu0 0.0
        %3709 = vmatpush1.msra.mxu0 0.0
        %3710 = vmatprep.subr.mxu0 0.0
        %3711 = vmatpush1.msra.mxu0 0.0
        %3712 = vmatprep.subr.mxu0 0.0
        %3713 = vmatpush1.msra.mxu0 0.0
        %3714 = vmatprep.subr.mxu0 0.0
        %3715 = vmatpush1.msra.mxu0 0.0
        %3716 = vmatprep.subr.mxu0 0.0
        %3717 = vmatpush1.msra.mxu0 0.0
        %3718 = vmatprep.subr.mxu0 0.0
        %3719 = vmatpush1.msra.mxu0 0.0
        %3720 = vmatprep.subr.mxu0 0.0
        %3721 = vmatpush1.msra.mxu0 0.0
        %3722 = vmatprep.subr.mxu0 0.0
        %3723 = vmatpush1.msra.mxu0 0.0
        %3724 = vmatprep.subr.mxu0 0.0
        %3725 = vmatpush1.msra.mxu0 0.0
        %3726 = vmatprep.subr.mxu0 0.0
        %3727 = vmatpush1.msra.mxu0 0.0
        %3728 = vmatprep.subr.mxu0 0.0
        %3729 = vmatpush1.msra.mxu0 0.0
        %3730 = vmatprep.subr.mxu0 0.0
        %3731 = vmatpush1.msra.mxu0 0.0
        %3732 = vmatprep.subr.mxu0 0.0
        %3733 = vmatpush1.msra.mxu0 0.0
        %3734 = vmatprep.subr.mxu0 0.0
        %3735 = vmatpush1.msra.mxu0 0.0
        %3736 = vmatprep.subr.mxu0 0.0
        %3737 = vmatpush1.msra.mxu0 0.0
        %3738 = vmatprep.subr.mxu0 0.0
        %3739 = vmatpush1.msra.mxu0 0.0
        %3740 = vmatprep.subr.mxu0 0.0
        %3741 = vmatpush1.msra.mxu0 0.0
        %3742 = vmatprep.subr.mxu0 0.0
        %3743 = vmatpush1.msra.mxu0 0.0
        %3744 = vmatprep.subr.mxu0 0.0
        %3745 = vmatpush1.msra.mxu0 0.0
        %3746 = vmatprep.subr.mxu0 0.0
        %3747 = vmatpush1.msra.mxu0 0.0
        %3748 = vmatprep.subr.mxu0 0.0
        %3749 = vmatpush1.msra.mxu0 0.0
        %3750 = vmatprep.mubr.f32.mxu0 0.0
        %3751 = vmatmul.mubr.f32.gmra.mrb[0].mxu0 %v3684
        %v3752 = vpop.f32.mrb[0].mxu0
        %v3753 = vadd.f32 %v3423, %v3752
        %v3754 = vpop.f32.mrb[0].mxu0
        %3755 = vdwg.mxu0
        %v3756 = vsel %vm844, %v3753, 0.0
        %3757 = vadd.xlane.f32.xlu0 %v3756
        %v3758 = vpop.xlane.xlu0 %3757
        %v3759 = vmul.f32 %v3758, %v1469
        %v3760 = vsub.f32 %v3753, %v3759
        %v3761 = vmul.f32 %v3760, %v3760
        %v3762 = vsel %vm844, %v3761, 0.0
        %3763 = vadd.xlane.f32.xlu0 %v3762
        %v3764 = vpop.xlane.xlu0 %3763
        %v3765 = vmul.f32 %v3764, %v1469
        %v3766 = vadd.f32 %v3765, 1e-05
        %v3767 = vrsqrt.pop %v3766
        %v3768 = vmul.f32 %v3760, %v3767
        %3769 = vst.msk [vmem:[%s818] sm:$0xff] %vm844, %v3768
        %s3770 = sand.u32 %s486, 1
        %s3771 = scalar_lea.sflag [#allocation4], %s3770
        %s3772 = sand.u32 %s486, 1
        %s3773 = smul.addr %s3772, 8
        %s3774 = scalar_lea.vmem [#allocation14], %s3773
        %s3775 = sand.u32 %s48, 1
        %s3776 = scalar_lea.sflag [#allocation16], %s3775
        %s3777 = sand.u32 %s512, 1
        %s3778 = smul.addr %s3777, 8
        %s3779 = scalar_lea.vmem [#allocation15], %s3778
        %s3780 = sand.u32 %s48, 1
        %s3781 = scalar_lea.sflag [#allocation16], %s3780
        %s3782 = sand.u32 %s538, 1
        %s3783 = smul.addr %s3782, 16
        %s3784 = scalar_lea.vmem [#allocation17], %s3783
        // Predicated region
        $region129: #{encoder_layer.1} parent=99 // pred_check
          %p3785 = pneg %p496
        $region130: #{encoder_layer.1} parent=99 // pred_check_branch
          %3787 = sbr.rel (%p3785) target = $region132
        $region131: #{encoder_layer.1} parent=99 // pred_region
          %s3789 = ssub.s32 128, 128
          %3790 = vsyncadd %s3771, %s3789
          %s3791 = smul.addr %s48, 128
          %s3792 = scalar_lea.hbm %s20, %s3791
          %s3794 = sshll.u32 %s3774, 4
          %s3795 = int_to_ptr.vmem [resolvable:$true] %s3794
          %3797 = dma.vmem_to_hbm [thread:$0]  %s3795, 128, %s3792, %s3771
        $region132: #{encoder_layer.1} parent=99 // pred_fallthru
          _
        // Predicated region
        $region133: #{encoder_layer.1} parent=99 // pred_check
          %p3798 = pneg %p522
        $region134: #{encoder_layer.1} parent=99 // pred_check_branch
          %3800 = sbr.rel (%p3798) target = $region136
        $region135: #{encoder_layer.1} parent=99 // pred_region
          %s3802 = ssub.s32 128, 128
          %3803 = vsyncadd %s3776, %s3802
          %s3804 = smul.addr %s48, 128
          %s3805 = scalar_lea.hbm %s21, %s3804
          %s3807 = sshll.u32 %s3779, 4
          %s3808 = int_to_ptr.vmem [resolvable:$true] %s3807
          %3810 = dma.vmem_to_hbm [thread:$0]  %s3808, 128, %s3805, %s3776
        $region136: #{encoder_layer.1} parent=99 // pred_fallthru
          _
        // Predicated region
        $region137: #{encoder_layer.1} parent=99 // pred_check
          %p3811 = pneg %p548
        $region138: #{encoder_layer.1} parent=99 // pred_check_branch
          %3813 = sbr.rel (%p3811) target = $region140
        $region139: #{encoder_layer.1} parent=99 // pred_region
          %s3815 = ssub.s32 256, 256
          %3816 = vsyncadd %s3781, %s3815
          %s3817 = smul.addr %s48, 2
          %s3818 = smul.addr %s3817, 128
          %s3819 = scalar_lea.hbm %s22, %s3818
          %s3820 = sshll.u32 %s3784, 4
          %s3821 = int_to_ptr.vmem [resolvable:$true] %s3820
          %3826 = dma.vmem_to_hbm [thread:$0]  %s3821, 256, %s3819, %s3781, 128, 128, 8
        $region140: #{encoder_layer.1} parent=99 // pred_fallthru
          _
      $region100: #{encoder_layer.1} parent=5 // pred_fallthru
        _
      %p3827 = scmp.le.s32.totalorder 2, %s43
      // Predicated region
      $region141: #{encoder_layer.1} parent=5 // pred_check
        %p3828 = pneg %p3827
      $region142: #{encoder_layer.1} parent=5 // pred_check_branch
        %3830 = sbr.rel (%p3828) target = $region144
      $region143: #{encoder_layer.1} parent=5 // pred_region
        %s3831 = ssub.s32 %s43, 2
        // Predicated region
        $region145: #{encoder_layer.1} parent=143 // pred_check
          %p3832 = pneg %p502
        $region146: #{encoder_layer.1} parent=143 // pred_check_branch
          %3834 = sbr.rel (%p3832) target = $region148
        $region147: #{encoder_layer.1} parent=143 // pred_region
          %s3835 = sand.u32 %s487, 1
          %s3836 = scalar_lea.sflag [#allocation4], %s3835
          %s3837 = sand.u32 %s487, 1
          %s3838 = smul.addr %s3837, 8
          %s3839 = scalar_lea.vmem [#allocation14], %s3838
          %3840 = dma.done %s3836, 128
        $region148: #{encoder_layer.1} parent=143 // pred_fallthru
          _
        // Predicated region
        $region149: #{encoder_layer.1} parent=143 // pred_check
          %p3841 = pneg %p528
        $region150: #{encoder_layer.1} parent=143 // pred_check_branch
          %3843 = sbr.rel (%p3841) target = $region152
        $region151: #{encoder_layer.1} parent=143 // pred_region
          %s3844 = sand.u32 %s49, 1
          %s3845 = scalar_lea.sflag [#allocation16], %s3844
          %s3846 = sand.u32 %s513, 1
          %s3847 = smul.addr %s3846, 8
          %s3848 = scalar_lea.vmem [#allocation15], %s3847
          %3849 = dma.done %s3845, 128
        $region152: #{encoder_layer.1} parent=143 // pred_fallthru
          _
        // Predicated region
        $region153: #{encoder_layer.1} parent=143 // pred_check
          %p3850 = pneg %p554
        $region154: #{encoder_layer.1} parent=143 // pred_check_branch
          %3852 = sbr.rel (%p3850) target = $region156
        $region155: #{encoder_layer.1} parent=143 // pred_region
          %s3853 = sand.u32 %s49, 1
          %s3854 = scalar_lea.sflag [#allocation16], %s3853
          %s3855 = sand.u32 %s539, 1
          %s3856 = smul.addr %s3855, 16
          %s3857 = scalar_lea.vmem [#allocation17], %s3856
          %3858 = dma.done %s3854, 256
        $region156: #{encoder_layer.1} parent=143 // pred_fallthru
          _
      $region144: #{encoder_layer.1} parent=5 // pred_fallthru
        _
    $region6: #{encoder_layer.1} parent=1 // loop_footer
      %s47 = sadd.s32 1, %s43
    $region7: #{encoder_layer.1} parent=1 // loop_footer_branch
      %42 = sbr.rel target = $region3
    $region8: #{encoder_layer.1} parent=1 // loop_exit
      _
    %3859 = vsyncpa [#allocation3], 1
    %s3860 = scalar_lea.sflag [#allocation3], 1
    %3861 = vsyncpa %s3860, 1
    %3862 = vsyncpa [#allocation6], 1
    %s3863 = scalar_lea.sflag [#allocation6], 1
    %3864 = vsyncpa %s3863, 1
    %3865 = vsyncpa [#allocation9], 1
    %3866 = vsyncpa [#allocation12], 1
    %3867 = vsyncpa [#allocation4], 1
    %s3868 = scalar_lea.sflag [#allocation4], 1
    %3869 = vsyncpa %s3868, 1
    %3870 = vsyncpa [#allocation16], 1
    %s3871 = scalar_lea.sflag [#allocation16], 1
    %3872 = vsyncpa %s3871, 1

</llo_original>
